<compile_context>
chip_gen: v5e
topology: v5e:2x2
jax: 0.10.0
libtpu: 0.0.40
codegen_flags: <defaults>
</compile_context>

<pallas_src>
import functools

import jax
import jax.numpy as jnp
from jax.experimental import pallas as pl
from jax.experimental.pallas import tpu as pltpu

C1, C2, K = 4, 2, 3            # conv channels / kernel size
L0, L1, L2 = 200, 198, 196     # sequence lengths after each conv
NUM_CLASSES = 2
FLAT = C2 * L2                 # 392


def anet_kernel(x_ref, w1_ref, b1_ref, w2_ref, b2_ref,
                wfc_a_ref, wfc_b_ref, bfc_ref, out_ref, *, conv_dtype):
    # x_ref:     [TB, L0]  VMEM, natural batch-major layout (per-grid-step tile)
    # w1_ref:    [4, 3]    SMEM conv1 weight (out_ch, k), in_ch == 1
    # b1_ref:    [4]       SMEM conv1 bias
    # w2_ref:    [8, 3]    SMEM conv2 weight flattened (out_ch*4 + in_ch, k)
    # b2_ref:    [2]       SMEM conv2 bias
    # wfc_a_ref: [2, 196]  VMEM classifier weight, columns for y2 channel 0
    # wfc_b_ref: [2, 196]  VMEM classifier weight, columns for y2 channel 1
    # bfc_ref:   [2, 1]    VMEM classifier bias
    # out_ref:   [2, TB]   VMEM lane-dense output tile

    # Transpose to batch-on-lanes in-kernel (XLU vxpose, hidden under VALU work),
    # then cast to the conv compute dtype (bf16 on v6e/v7x, f32 on v5e).
    x = jnp.transpose(x_ref[...]).astype(conv_dtype)            # [L0, TB]

    # Hoist the k-shifted views once; slices are not views in Pallas, reuse them.
    xs = [x[k:k + L1, :] for k in range(K)]                     # 3 x [L1, TB]

    # ---- Conv1d(1 -> 4, k=3) + ReLU --------------------------------------
    y1 = []
    for c in range(C1):
        acc = w1_ref[c, 0].astype(conv_dtype) * xs[0]
        for k in range(1, K):
            acc = acc + w1_ref[c, k].astype(conv_dtype) * xs[k]
        y1.append(jnp.maximum(acc + b1_ref[c].astype(conv_dtype), 0))   # [L1, TB]

    # Hoist conv2's shifted views once as well.
    y1s = [[y1[ci][k:k + L2, :] for k in range(K)] for ci in range(C1)]

    # ---- Conv1d(4 -> 2, k=3) + ReLU --------------------------------------
    # Accumulator is initialized with the first tap product: no zero-fill and
    # one fewer add per element in the hottest VALU loop.
    y2 = []
    for co in range(C2):
        acc = w2_ref[co * C1, 0].astype(conv_dtype) * y1s[0][0]
        for ci in range(C1):
            for k in range(K):
                if ci == 0 and k == 0:
                    continue
                acc = acc + w2_ref[co * C1 + ci, k].astype(conv_dtype) * y1s[ci][k]
        y2.append(jnp.maximum(acc + b2_ref[co].astype(conv_dtype), 0))  # [L2, TB]

    # ---- Linear(392 -> 2) -------------------------------------------------
    # PyTorch channel-major flatten (idx = co*196 + t) == wfc[:, :196] acting on
    # y2[0] plus wfc[:, 196:] acting on y2[1].  Two small MXU dots summed avoid
    # the 196-sublane-misaligned concatenate and its [392, TB] buffer / stores.
    out = jnp.dot(wfc_a_ref[...], y2[0], preferred_element_type=jnp.float32)
    out = out + jnp.dot(wfc_b_ref[...], y2[1], preferred_element_type=jnp.float32)
    out_ref[...] = out + bfc_ref[...]                           # [2, TB] lane-dense


def _tpu_generation():
    try:
        kind = jax.devices()[0].device_kind.lower()
    except Exception:
        return 0
    for g in (7, 6, 5, 4):
        if f"v{g}" in kind:
            return g
    return 0


def _round_up(x, m):
    return -(-x // m) * m


def anet_forward(x, params, *, tb=None, conv_dtype=None):
    """x: [B, 1, 200] float32 (NCW, like PyTorch). Returns [B, 2] float32."""
    w1, b1, w2, b2, wfc, bfc = (params[k] for k in
                                ("w1", "b1", "w2", "b2", "wfc", "bfc"))
    B = x.shape[0]
    gen = _tpu_generation()

    # bf16 conv math where the VPU has native bf16 (v6e / v7x); v5e stays f32.
    if conv_dtype is None:
        conv_dtype = jnp.bfloat16 if gen >= 6 else jnp.float32

    # Batch tile: as large as VMEM comfortably allows (amortizes the ~0.35us
    # per-step overhead), capped at the 128-padded batch.
    if tb is None:
        tb = 2048 if (conv_dtype == jnp.bfloat16 or gen == 5) else 1024
    b128 = _round_up(max(B, 1), 128)
    tb = min(tb, b128)
    n_tiles = -(-B // tb)
    # v7x: ("parallel",) only pays off if both TensorCores get grid steps.
    if gen >= 7 and n_tiles == 1 and tb >= 256:
        tb = _round_up(tb // 2, 128)
        n_tiles = -(-B // tb)
    Bp = n_tiles * tb

    x_2d = x.reshape(B, L0).astype(jnp.float32)     # layout-preserving reshape
    if Bp != B:
        x_2d = jnp.pad(x_2d, ((0, Bp - B), (0, 0)))

    w1_s = w1.reshape(C1, K).astype(jnp.float32)    # in_ch == 1
    b1_s = b1.astype(jnp.float32)
    w2_s = w2.reshape(C2 * C1, K).astype(jnp.float32)
    b2_s = b2.astype(jnp.float32)
    wfc_a = wfc[:, :L2].astype(conv_dtype)          # split once in the wrapper
    wfc_b = wfc[:, L2:].astype(conv_dtype)
    bfc_2d = bfc.reshape(NUM_CLASSES, 1).astype(jnp.float32)

    smem = pl.BlockSpec(memory_space=pltpu.MemorySpace.SMEM)

    flops_per_row = (C1 * K * 2 * L1            # conv1
                     + C2 * C1 * K * 2 * L2     # conv2
                     + 2 * FLAT * NUM_CLASSES)  # fc
    weight_bytes = 4 * (C1 * K + C1 + C2 * C1 * K + C2
                        + NUM_CLASSES * FLAT + NUM_CLASSES)
    cost = pl.CostEstimate(
        flops=Bp * flops_per_row,
        transcendentals=0,
        bytes_accessed=Bp * 4 * (L0 + NUM_CLASSES) + weight_bytes,
    )

    # ~20 KB/lane of f32 intermediates (~10 KB bf16) + double-buffered input
    # block; keep headroom but stay under v7x's 64 MiB per-TC VMEM.
    vmem_limit = (48 if gen >= 7 else 64) * 1024 * 1024

    kernel = functools.partial(anet_kernel, conv_dtype=conv_dtype)

    out_t = pl.pallas_call(
        kernel,
        out_shape=jax.ShapeDtypeStruct((NUM_CLASSES, Bp), jnp.float32),
        grid=(n_tiles,),
        in_specs=[
            pl.BlockSpec((tb, L0), lambda i: (i, 0)),               # x (batch-tiled, natural layout)
            smem,                                                   # w1
            smem,                                                   # b1
            smem,                                                   # w2
            smem,                                                   # b2
            pl.BlockSpec((NUM_CLASSES, L2), lambda i: (0, 0)),      # wfc[:, :196] (resident)
            pl.BlockSpec((NUM_CLASSES, L2), lambda i: (0, 0)),      # wfc[:, 196:] (resident)
            pl.BlockSpec((NUM_CLASSES, 1), lambda i: (0, 0)),       # bfc (resident)
        ],
        out_specs=pl.BlockSpec((NUM_CLASSES, tb), lambda i: (0, i)),
        compiler_params=pltpu.CompilerParams(
            dimension_semantics=("parallel",),
            vmem_limit_bytes=vmem_limit,
        ),
        cost_estimate=cost,
    )(x_2d, w1_s, b1_s, w2_s, b2_s, wfc_a, wfc_b, bfc_2d)

    return out_t[:, :B].T                            # [B, 2]


def init_params(key):
    ks = jax.random.split(key, 6)

    def u(k, shape, fan_in):
        bound = 1.0 / (fan_in ** 0.5)
        return jax.random.uniform(k, shape, jnp.float32, -bound, bound)

    return {
        "w1":  u(ks[0], (C1, 1, K), 1 * K),
        "b1":  u(ks[1], (C1,),      1 * K),
        "w2":  u(ks[2], (C2, C1, K), C1 * K),
        "b2":  u(ks[3], (C2,),       C1 * K),
        "wfc": u(ks[4], (NUM_CLASSES, FLAT), FLAT),
        "bfc": u(ks[5], (NUM_CLASSES,),      FLAT),
    }


def anet_reference(x, p):
    """Pure-JAX reference using lax conv (NCW) for validation."""
    dn = jax.lax.conv_dimension_numbers(x.shape, p["w1"].shape,
                                        ("NCH", "OIH", "NCH"))
    y = jax.lax.conv_general_dilated(x, p["w1"], (1,), "VALID",
                                     dimension_numbers=dn)
    y = jax.nn.relu(y + p["b1"][None, :, None])
    y = jax.lax.conv_general_dilated(y, p["w2"], (1,), "VALID",
                                     dimension_numbers=dn)
    y = jax.nn.relu(y + p["b2"][None, :, None])
    y = y.reshape(y.shape[0], -1)
    return y @ p["wfc"].T + p["bfc"]


if __name__ == "__main__":
    key = jax.random.PRNGKey(0)
    k_x, k_p = jax.random.split(key)
    B = 2
    x = jax.random.normal(k_x, (B, 1, L0), jnp.float32)
    params = init_params(k_p)
    ref = anet_reference(x, params)

    # Portable f32 path: exact match against the reference.
    out = jax.block_until_ready(anet_forward(x, params, conv_dtype=jnp.float32))
    assert out.shape == (B, NUM_CLASSES)
    assert jnp.allclose(out, ref, atol=1e-4, rtol=1e-4), (out, ref)

    # Generation-tuned path (bf16 conv math) on v6e / v7x: looser tolerance.
    if _tpu_generation() >= 6:
        out_fast = jax.block_until_ready(anet_forward(x, params))
        assert out_fast.shape == (B, NUM_CLASSES)
        assert jnp.allclose(out_fast, ref, atol=5e-2, rtol=5e-2), (out_fast, ref)

    print("KERNEL_OK")
</pallas_src>

<mosaic_0001>
module attributes {stable_mosaic.version = 11 : i64} {
  func.func @anet_kernel(%arg0: i32, %arg1: memref<128x200xf32, #tpu.memory_space<vmem>>, %arg2: memref<4x3xf32, #tpu.memory_space<smem>>, %arg3: memref<4xf32, #tpu.memory_space<smem>>, %arg4: memref<8x3xf32, #tpu.memory_space<smem>>, %arg5: memref<2xf32, #tpu.memory_space<smem>>, %arg6: memref<2x196xf32, #tpu.memory_space<vmem>>, %arg7: memref<2x196xf32, #tpu.memory_space<vmem>>, %arg8: memref<2x1xf32, #tpu.memory_space<vmem>>, %arg9: memref<2x128xf32, #tpu.memory_space<vmem>>) attributes {dimension_semantics = [#tpu.dimension_semantics<parallel>], iteration_bounds = array<i64: 1>, scalar_prefetch = 0 : i64, scratch_operands = 0 : i64, tpu.core_type = #tpu.core_type<tc>, window_params = [{transform_indices = @transform_0, window_bounds = array<i64: 128, 200>}, {transform_indices = @transform_1, window_bounds = array<i64: 4, 3>}, {transform_indices = @transform_2, window_bounds = array<i64: 4>}, {transform_indices = @transform_3, window_bounds = array<i64: 8, 3>}, {transform_indices = @transform_4, window_bounds = array<i64: 2>}, {pipeline_mode = #tpu.pipeline_mode<synchronous>, transform_indices = @transform_5, window_bounds = array<i64: 2, 196>}, {pipeline_mode = #tpu.pipeline_mode<synchronous>, transform_indices = @transform_6, window_bounds = array<i64: 2, 196>}, {pipeline_mode = #tpu.pipeline_mode<synchronous>, transform_indices = @transform_7, window_bounds = array<i64: 2, 1>}, {transform_indices = @transform_8, window_bounds = array<i64: 2, 128>}]} {
    %c0 = arith.constant 0 : index
    %c0_0 = arith.constant 0 : index
    %0 = vector.load %arg1[%c0, %c0_0] : memref<128x200xf32, #tpu.memory_space<vmem>>, vector<128x200xf32>
    %1 = tpu.transpose %0, [1, 0] : vector<128x200xf32> -> vector<200x128xf32>
    %2 = vector.extract_strided_slice %1 {offsets = [0, 0], sizes = [198, 128], strides = [1, 1]} : vector<200x128xf32> to vector<198x128xf32>
    %3 = vector.extract_strided_slice %1 {offsets = [1, 0], sizes = [198, 128], strides = [1, 1]} : vector<200x128xf32> to vector<198x128xf32>
    %4 = vector.extract_strided_slice %1 {offsets = [2, 0], sizes = [198, 128], strides = [1, 1]} : vector<200x128xf32> to vector<198x128xf32>
    %c0_1 = arith.constant 0 : index
    %c0_2 = arith.constant 0 : index
    %5 = memref.load %arg2[%c0_1, %c0_2] : memref<4x3xf32, #tpu.memory_space<smem>>
    %6 = vector.broadcast %5 : f32 to vector<198x128xf32>
    %7 = arith.mulf %6, %2 : vector<198x128xf32>
    %c0_3 = arith.constant 0 : index
    %c1 = arith.constant 1 : index
    %8 = memref.load %arg2[%c0_3, %c1] : memref<4x3xf32, #tpu.memory_space<smem>>
    %9 = vector.broadcast %8 : f32 to vector<198x128xf32>
    %10 = arith.mulf %9, %3 : vector<198x128xf32>
    %11 = arith.addf %7, %10 : vector<198x128xf32>
    %c0_4 = arith.constant 0 : index
    %c2 = arith.constant 2 : index
    %12 = memref.load %arg2[%c0_4, %c2] : memref<4x3xf32, #tpu.memory_space<smem>>
    %13 = vector.broadcast %12 : f32 to vector<198x128xf32>
    %14 = arith.mulf %13, %4 : vector<198x128xf32>
    %15 = arith.addf %11, %14 : vector<198x128xf32>
    %c0_5 = arith.constant 0 : index
    %16 = memref.load %arg3[%c0_5] : memref<4xf32, #tpu.memory_space<smem>>
    %17 = vector.broadcast %16 : f32 to vector<198x128xf32>
    %18 = arith.addf %15, %17 : vector<198x128xf32>
    %cst = arith.constant 0.000000e+00 : f32
    %19 = vector.broadcast %cst : f32 to vector<198x128xf32>
    %20 = arith.maximumf %18, %19 : vector<198x128xf32>
    %c1_6 = arith.constant 1 : index
    %c0_7 = arith.constant 0 : index
    %21 = memref.load %arg2[%c1_6, %c0_7] : memref<4x3xf32, #tpu.memory_space<smem>>
    %22 = vector.broadcast %21 : f32 to vector<198x128xf32>
    %23 = arith.mulf %22, %2 : vector<198x128xf32>
    %c1_8 = arith.constant 1 : index
    %c1_9 = arith.constant 1 : index
    %24 = memref.load %arg2[%c1_8, %c1_9] : memref<4x3xf32, #tpu.memory_space<smem>>
    %25 = vector.broadcast %24 : f32 to vector<198x128xf32>
    %26 = arith.mulf %25, %3 : vector<198x128xf32>
    %27 = arith.addf %23, %26 : vector<198x128xf32>
    %c1_10 = arith.constant 1 : index
    %c2_11 = arith.constant 2 : index
    %28 = memref.load %arg2[%c1_10, %c2_11] : memref<4x3xf32, #tpu.memory_space<smem>>
    %29 = vector.broadcast %28 : f32 to vector<198x128xf32>
    %30 = arith.mulf %29, %4 : vector<198x128xf32>
    %31 = arith.addf %27, %30 : vector<198x128xf32>
    %c1_12 = arith.constant 1 : index
    %32 = memref.load %arg3[%c1_12] : memref<4xf32, #tpu.memory_space<smem>>
    %33 = vector.broadcast %32 : f32 to vector<198x128xf32>
    %34 = arith.addf %31, %33 : vector<198x128xf32>
    %cst_13 = arith.constant 0.000000e+00 : f32
    %35 = vector.broadcast %cst_13 : f32 to vector<198x128xf32>
    %36 = arith.maximumf %34, %35 : vector<198x128xf32>
    %c2_14 = arith.constant 2 : index
    %c0_15 = arith.constant 0 : index
    %37 = memref.load %arg2[%c2_14, %c0_15] : memref<4x3xf32, #tpu.memory_space<smem>>
    %38 = vector.broadcast %37 : f32 to vector<198x128xf32>
    %39 = arith.mulf %38, %2 : vector<198x128xf32>
    %c2_16 = arith.constant 2 : index
    %c1_17 = arith.constant 1 : index
    %40 = memref.load %arg2[%c2_16, %c1_17] : memref<4x3xf32, #tpu.memory_space<smem>>
    %41 = vector.broadcast %40 : f32 to vector<198x128xf32>
    %42 = arith.mulf %41, %3 : vector<198x128xf32>
    %43 = arith.addf %39, %42 : vector<198x128xf32>
    %c2_18 = arith.constant 2 : index
    %c2_19 = arith.constant 2 : index
    %44 = memref.load %arg2[%c2_18, %c2_19] : memref<4x3xf32, #tpu.memory_space<smem>>
    %45 = vector.broadcast %44 : f32 to vector<198x128xf32>
    %46 = arith.mulf %45, %4 : vector<198x128xf32>
    %47 = arith.addf %43, %46 : vector<198x128xf32>
    %c2_20 = arith.constant 2 : index
    %48 = memref.load %arg3[%c2_20] : memref<4xf32, #tpu.memory_space<smem>>
    %49 = vector.broadcast %48 : f32 to vector<198x128xf32>
    %50 = arith.addf %47, %49 : vector<198x128xf32>
    %cst_21 = arith.constant 0.000000e+00 : f32
    %51 = vector.broadcast %cst_21 : f32 to vector<198x128xf32>
    %52 = arith.maximumf %50, %51 : vector<198x128xf32>
    %c3 = arith.constant 3 : index
    %c0_22 = arith.constant 0 : index
    %53 = memref.load %arg2[%c3, %c0_22] : memref<4x3xf32, #tpu.memory_space<smem>>
    %54 = vector.broadcast %53 : f32 to vector<198x128xf32>
    %55 = arith.mulf %54, %2 : vector<198x128xf32>
    %c3_23 = arith.constant 3 : index
    %c1_24 = arith.constant 1 : index
    %56 = memref.load %arg2[%c3_23, %c1_24] : memref<4x3xf32, #tpu.memory_space<smem>>
    %57 = vector.broadcast %56 : f32 to vector<198x128xf32>
    %58 = arith.mulf %57, %3 : vector<198x128xf32>
    %59 = arith.addf %55, %58 : vector<198x128xf32>
    %c3_25 = arith.constant 3 : index
    %c2_26 = arith.constant 2 : index
    %60 = memref.load %arg2[%c3_25, %c2_26] : memref<4x3xf32, #tpu.memory_space<smem>>
    %61 = vector.broadcast %60 : f32 to vector<198x128xf32>
    %62 = arith.mulf %61, %4 : vector<198x128xf32>
    %63 = arith.addf %59, %62 : vector<198x128xf32>
    %c3_27 = arith.constant 3 : index
    %64 = memref.load %arg3[%c3_27] : memref<4xf32, #tpu.memory_space<smem>>
    %65 = vector.broadcast %64 : f32 to vector<198x128xf32>
    %66 = arith.addf %63, %65 : vector<198x128xf32>
    %cst_28 = arith.constant 0.000000e+00 : f32
    %67 = vector.broadcast %cst_28 : f32 to vector<198x128xf32>
    %68 = arith.maximumf %66, %67 : vector<198x128xf32>
    %69 = vector.extract_strided_slice %20 {offsets = [0, 0], sizes = [196, 128], strides = [1, 1]} : vector<198x128xf32> to vector<196x128xf32>
    %70 = vector.extract_strided_slice %20 {offsets = [1, 0], sizes = [196, 128], strides = [1, 1]} : vector<198x128xf32> to vector<196x128xf32>
    %71 = vector.extract_strided_slice %20 {offsets = [2, 0], sizes = [196, 128], strides = [1, 1]} : vector<198x128xf32> to vector<196x128xf32>
    %72 = vector.extract_strided_slice %36 {offsets = [0, 0], sizes = [196, 128], strides = [1, 1]} : vector<198x128xf32> to vector<196x128xf32>
    %73 = vector.extract_strided_slice %36 {offsets = [1, 0], sizes = [196, 128], strides = [1, 1]} : vector<198x128xf32> to vector<196x128xf32>
    %74 = vector.extract_strided_slice %36 {offsets = [2, 0], sizes = [196, 128], strides = [1, 1]} : vector<198x128xf32> to vector<196x128xf32>
    %75 = vector.extract_strided_slice %52 {offsets = [0, 0], sizes = [196, 128], strides = [1, 1]} : vector<198x128xf32> to vector<196x128xf32>
    %76 = vector.extract_strided_slice %52 {offsets = [1, 0], sizes = [196, 128], strides = [1, 1]} : vector<198x128xf32> to vector<196x128xf32>
    %77 = vector.extract_strided_slice %52 {offsets = [2, 0], sizes = [196, 128], strides = [1, 1]} : vector<198x128xf32> to vector<196x128xf32>
    %78 = vector.extract_strided_slice %68 {offsets = [0, 0], sizes = [196, 128], strides = [1, 1]} : vector<198x128xf32> to vector<196x128xf32>
    %79 = vector.extract_strided_slice %68 {offsets = [1, 0], sizes = [196, 128], strides = [1, 1]} : vector<198x128xf32> to vector<196x128xf32>
    %80 = vector.extract_strided_slice %68 {offsets = [2, 0], sizes = [196, 128], strides = [1, 1]} : vector<198x128xf32> to vector<196x128xf32>
    %c0_29 = arith.constant 0 : index
    %c0_30 = arith.constant 0 : index
    %81 = memref.load %arg4[%c0_29, %c0_30] : memref<8x3xf32, #tpu.memory_space<smem>>
    %82 = vector.broadcast %81 : f32 to vector<196x128xf32>
    %83 = arith.mulf %82, %69 : vector<196x128xf32>
    %c0_31 = arith.constant 0 : index
    %c1_32 = arith.constant 1 : index
    %84 = memref.load %arg4[%c0_31, %c1_32] : memref<8x3xf32, #tpu.memory_space<smem>>
    %85 = vector.broadcast %84 : f32 to vector<196x128xf32>
    %86 = arith.mulf %85, %70 : vector<196x128xf32>
    %87 = arith.addf %83, %86 : vector<196x128xf32>
    %c0_33 = arith.constant 0 : index
    %c2_34 = arith.constant 2 : index
    %88 = memref.load %arg4[%c0_33, %c2_34] : memref<8x3xf32, #tpu.memory_space<smem>>
    %89 = vector.broadcast %88 : f32 to vector<196x128xf32>
    %90 = arith.mulf %89, %71 : vector<196x128xf32>
    %91 = arith.addf %87, %90 : vector<196x128xf32>
    %c1_35 = arith.constant 1 : index
    %c0_36 = arith.constant 0 : index
    %92 = memref.load %arg4[%c1_35, %c0_36] : memref<8x3xf32, #tpu.memory_space<smem>>
    %93 = vector.broadcast %92 : f32 to vector<196x128xf32>
    %94 = arith.mulf %93, %72 : vector<196x128xf32>
    %95 = arith.addf %91, %94 : vector<196x128xf32>
    %c1_37 = arith.constant 1 : index
    %c1_38 = arith.constant 1 : index
    %96 = memref.load %arg4[%c1_37, %c1_38] : memref<8x3xf32, #tpu.memory_space<smem>>
    %97 = vector.broadcast %96 : f32 to vector<196x128xf32>
    %98 = arith.mulf %97, %73 : vector<196x128xf32>
    %99 = arith.addf %95, %98 : vector<196x128xf32>
    %c1_39 = arith.constant 1 : index
    %c2_40 = arith.constant 2 : index
    %100 = memref.load %arg4[%c1_39, %c2_40] : memref<8x3xf32, #tpu.memory_space<smem>>
    %101 = vector.broadcast %100 : f32 to vector<196x128xf32>
    %102 = arith.mulf %101, %74 : vector<196x128xf32>
    %103 = arith.addf %99, %102 : vector<196x128xf32>
    %c2_41 = arith.constant 2 : index
    %c0_42 = arith.constant 0 : index
    %104 = memref.load %arg4[%c2_41, %c0_42] : memref<8x3xf32, #tpu.memory_space<smem>>
    %105 = vector.broadcast %104 : f32 to vector<196x128xf32>
    %106 = arith.mulf %105, %75 : vector<196x128xf32>
    %107 = arith.addf %103, %106 : vector<196x128xf32>
    %c2_43 = arith.constant 2 : index
    %c1_44 = arith.constant 1 : index
    %108 = memref.load %arg4[%c2_43, %c1_44] : memref<8x3xf32, #tpu.memory_space<smem>>
    %109 = vector.broadcast %108 : f32 to vector<196x128xf32>
    %110 = arith.mulf %109, %76 : vector<196x128xf32>
    %111 = arith.addf %107, %110 : vector<196x128xf32>
    %c2_45 = arith.constant 2 : index
    %c2_46 = arith.constant 2 : index
    %112 = memref.load %arg4[%c2_45, %c2_46] : memref<8x3xf32, #tpu.memory_space<smem>>
    %113 = vector.broadcast %112 : f32 to vector<196x128xf32>
    %114 = arith.mulf %113, %77 : vector<196x128xf32>
    %115 = arith.addf %111, %114 : vector<196x128xf32>
    %c3_47 = arith.constant 3 : index
    %c0_48 = arith.constant 0 : index
    %116 = memref.load %arg4[%c3_47, %c0_48] : memref<8x3xf32, #tpu.memory_space<smem>>
    %117 = vector.broadcast %116 : f32 to vector<196x128xf32>
    %118 = arith.mulf %117, %78 : vector<196x128xf32>
    %119 = arith.addf %115, %118 : vector<196x128xf32>
    %c3_49 = arith.constant 3 : index
    %c1_50 = arith.constant 1 : index
    %120 = memref.load %arg4[%c3_49, %c1_50] : memref<8x3xf32, #tpu.memory_space<smem>>
    %121 = vector.broadcast %120 : f32 to vector<196x128xf32>
    %122 = arith.mulf %121, %79 : vector<196x128xf32>
    %123 = arith.addf %119, %122 : vector<196x128xf32>
    %c3_51 = arith.constant 3 : index
    %c2_52 = arith.constant 2 : index
    %124 = memref.load %arg4[%c3_51, %c2_52] : memref<8x3xf32, #tpu.memory_space<smem>>
    %125 = vector.broadcast %124 : f32 to vector<196x128xf32>
    %126 = arith.mulf %125, %80 : vector<196x128xf32>
    %127 = arith.addf %123, %126 : vector<196x128xf32>
    %c0_53 = arith.constant 0 : index
    %128 = memref.load %arg5[%c0_53] : memref<2xf32, #tpu.memory_space<smem>>
    %129 = vector.broadcast %128 : f32 to vector<196x128xf32>
    %130 = arith.addf %127, %129 : vector<196x128xf32>
    %cst_54 = arith.constant 0.000000e+00 : f32
    %131 = vector.broadcast %cst_54 : f32 to vector<196x128xf32>
    %132 = arith.maximumf %130, %131 : vector<196x128xf32>
    %c4 = arith.constant 4 : index
    %c0_55 = arith.constant 0 : index
    %133 = memref.load %arg4[%c4, %c0_55] : memref<8x3xf32, #tpu.memory_space<smem>>
    %134 = vector.broadcast %133 : f32 to vector<196x128xf32>
    %135 = arith.mulf %134, %69 : vector<196x128xf32>
    %c4_56 = arith.constant 4 : index
    %c1_57 = arith.constant 1 : index
    %136 = memref.load %arg4[%c4_56, %c1_57] : memref<8x3xf32, #tpu.memory_space<smem>>
    %137 = vector.broadcast %136 : f32 to vector<196x128xf32>
    %138 = arith.mulf %137, %70 : vector<196x128xf32>
    %139 = arith.addf %135, %138 : vector<196x128xf32>
    %c4_58 = arith.constant 4 : index
    %c2_59 = arith.constant 2 : index
    %140 = memref.load %arg4[%c4_58, %c2_59] : memref<8x3xf32, #tpu.memory_space<smem>>
    %141 = vector.broadcast %140 : f32 to vector<196x128xf32>
    %142 = arith.mulf %141, %71 : vector<196x128xf32>
    %143 = arith.addf %139, %142 : vector<196x128xf32>
    %c5 = arith.constant 5 : index
    %c0_60 = arith.constant 0 : index
    %144 = memref.load %arg4[%c5, %c0_60] : memref<8x3xf32, #tpu.memory_space<smem>>
    %145 = vector.broadcast %144 : f32 to vector<196x128xf32>
    %146 = arith.mulf %145, %72 : vector<196x128xf32>
    %147 = arith.addf %143, %146 : vector<196x128xf32>
    %c5_61 = arith.constant 5 : index
    %c1_62 = arith.constant 1 : index
    %148 = memref.load %arg4[%c5_61, %c1_62] : memref<8x3xf32, #tpu.memory_space<smem>>
    %149 = vector.broadcast %148 : f32 to vector<196x128xf32>
    %150 = arith.mulf %149, %73 : vector<196x128xf32>
    %151 = arith.addf %147, %150 : vector<196x128xf32>
    %c5_63 = arith.constant 5 : index
    %c2_64 = arith.constant 2 : index
    %152 = memref.load %arg4[%c5_63, %c2_64] : memref<8x3xf32, #tpu.memory_space<smem>>
    %153 = vector.broadcast %152 : f32 to vector<196x128xf32>
    %154 = arith.mulf %153, %74 : vector<196x128xf32>
    %155 = arith.addf %151, %154 : vector<196x128xf32>
    %c6 = arith.constant 6 : index
    %c0_65 = arith.constant 0 : index
    %156 = memref.load %arg4[%c6, %c0_65] : memref<8x3xf32, #tpu.memory_space<smem>>
    %157 = vector.broadcast %156 : f32 to vector<196x128xf32>
    %158 = arith.mulf %157, %75 : vector<196x128xf32>
    %159 = arith.addf %155, %158 : vector<196x128xf32>
    %c6_66 = arith.constant 6 : index
    %c1_67 = arith.constant 1 : index
    %160 = memref.load %arg4[%c6_66, %c1_67] : memref<8x3xf32, #tpu.memory_space<smem>>
    %161 = vector.broadcast %160 : f32 to vector<196x128xf32>
    %162 = arith.mulf %161, %76 : vector<196x128xf32>
    %163 = arith.addf %159, %162 : vector<196x128xf32>
    %c6_68 = arith.constant 6 : index
    %c2_69 = arith.constant 2 : index
    %164 = memref.load %arg4[%c6_68, %c2_69] : memref<8x3xf32, #tpu.memory_space<smem>>
    %165 = vector.broadcast %164 : f32 to vector<196x128xf32>
    %166 = arith.mulf %165, %77 : vector<196x128xf32>
    %167 = arith.addf %163, %166 : vector<196x128xf32>
    %c7 = arith.constant 7 : index
    %c0_70 = arith.constant 0 : index
    %168 = memref.load %arg4[%c7, %c0_70] : memref<8x3xf32, #tpu.memory_space<smem>>
    %169 = vector.broadcast %168 : f32 to vector<196x128xf32>
    %170 = arith.mulf %169, %78 : vector<196x128xf32>
    %171 = arith.addf %167, %170 : vector<196x128xf32>
    %c7_71 = arith.constant 7 : index
    %c1_72 = arith.constant 1 : index
    %172 = memref.load %arg4[%c7_71, %c1_72] : memref<8x3xf32, #tpu.memory_space<smem>>
    %173 = vector.broadcast %172 : f32 to vector<196x128xf32>
    %174 = arith.mulf %173, %79 : vector<196x128xf32>
    %175 = arith.addf %171, %174 : vector<196x128xf32>
    %c7_73 = arith.constant 7 : index
    %c2_74 = arith.constant 2 : index
    %176 = memref.load %arg4[%c7_73, %c2_74] : memref<8x3xf32, #tpu.memory_space<smem>>
    %177 = vector.broadcast %176 : f32 to vector<196x128xf32>
    %178 = arith.mulf %177, %80 : vector<196x128xf32>
    %179 = arith.addf %175, %178 : vector<196x128xf32>
    %c1_75 = arith.constant 1 : index
    %180 = memref.load %arg5[%c1_75] : memref<2xf32, #tpu.memory_space<smem>>
    %181 = vector.broadcast %180 : f32 to vector<196x128xf32>
    %182 = arith.addf %179, %181 : vector<196x128xf32>
    %cst_76 = arith.constant 0.000000e+00 : f32
    %183 = vector.broadcast %cst_76 : f32 to vector<196x128xf32>
    %184 = arith.maximumf %182, %183 : vector<196x128xf32>
    %c0_77 = arith.constant 0 : index
    %c0_78 = arith.constant 0 : index
    %185 = vector.load %arg6[%c0_77, %c0_78] : memref<2x196xf32, #tpu.memory_space<vmem>>, vector<2x196xf32>
    %cst_79 = arith.constant dense<0.000000e+00> : vector<2x128xf32>
    %186 = tpu.matmul %185, %132, %cst_79 {dimension_numbers = #tpu.dot_dimension_numbers<[1], [0], [0], [1], [0, 0, 1, 1], [], []>} : vector<2x196xf32>, vector<196x128xf32>, vector<2x128xf32> -> vector<2x128xf32>
    %c0_80 = arith.constant 0 : index
    %c0_81 = arith.constant 0 : index
    %187 = vector.load %arg7[%c0_80, %c0_81] : memref<2x196xf32, #tpu.memory_space<vmem>>, vector<2x196xf32>
    %cst_82 = arith.constant dense<0.000000e+00> : vector<2x128xf32>
    %188 = tpu.matmul %187, %184, %cst_82 {dimension_numbers = #tpu.dot_dimension_numbers<[1], [0], [0], [1], [0, 0, 1, 1], [], []>} : vector<2x196xf32>, vector<196x128xf32>, vector<2x128xf32> -> vector<2x128xf32>
    %189 = arith.addf %186, %188 : vector<2x128xf32>
    %c0_83 = arith.constant 0 : index
    %c0_84 = arith.constant 0 : index
    %190 = vector.load %arg8[%c0_83, %c0_84] : memref<2x1xf32, #tpu.memory_space<vmem>>, vector<2x1xf32>
    %191 = vector.broadcast %190 : vector<2x1xf32> to vector<2x128xf32>
    %192 = arith.addf %189, %191 : vector<2x128xf32>
    %c0_85 = arith.constant 0 : index
    %c0_86 = arith.constant 0 : index
    %193 = vector.load %arg9[%c0_85, %c0_86] : memref<2x128xf32, #tpu.memory_space<vmem>>, vector<2x128xf32>
    tpu.vector_store %arg9[%c0_85, %c0_86], %192 {strides = array<i32>} : memref<2x128xf32, #tpu.memory_space<vmem>>, vector<2x128xf32>,
    return
  }
  func.func @transform_0(%arg0: i32) -> (i32, i32) {
    %c0_i32 = arith.constant 0 : i32
    %c0_i32_0 = arith.constant 0 : i32
    return %arg0, %c0_i32 : i32, i32
  }
  func.func @transform_1(%arg0: i32) -> (i32, i32) {
    %c0_i32 = arith.constant 0 : i32
    %c0_i32_0 = arith.constant 0 : i32
    %c0_i32_1 = arith.constant 0 : i32
    return %c0_i32, %c0_i32_0 : i32, i32
  }
  func.func @transform_2(%arg0: i32) -> i32 {
    %c0_i32 = arith.constant 0 : i32
    %c0_i32_0 = arith.constant 0 : i32
    return %c0_i32 : i32
  }
  func.func @transform_3(%arg0: i32) -> (i32, i32) {
    %c0_i32 = arith.constant 0 : i32
    %c0_i32_0 = arith.constant 0 : i32
    %c0_i32_1 = arith.constant 0 : i32
    return %c0_i32, %c0_i32_0 : i32, i32
  }
  func.func @transform_4(%arg0: i32) -> i32 {
    %c0_i32 = arith.constant 0 : i32
    %c0_i32_0 = arith.constant 0 : i32
    return %c0_i32 : i32
  }
  func.func @transform_5(%arg0: i32) -> (i32, i32) {
    %c0_i32 = arith.constant 0 : i32
    %c0_i32_0 = arith.constant 0 : i32
    %c0_i32_1 = arith.constant 0 : i32
    return %c0_i32, %c0_i32_0 : i32, i32
  }
  func.func @transform_6(%arg0: i32) -> (i32, i32) {
    %c0_i32 = arith.constant 0 : i32
    %c0_i32_0 = arith.constant 0 : i32
    %c0_i32_1 = arith.constant 0 : i32
    return %c0_i32, %c0_i32_0 : i32, i32
  }
  func.func @transform_7(%arg0: i32) -> (i32, i32) {
    %c0_i32 = arith.constant 0 : i32
    %c0_i32_0 = arith.constant 0 : i32
    %c0_i32_1 = arith.constant 0 : i32
    return %c0_i32, %c0_i32_0 : i32, i32
  }
  func.func @transform_8(%arg0: i32) -> (i32, i32) {
    %c0_i32 = arith.constant 0 : i32
    %c0_i32_0 = arith.constant 0 : i32
    return %c0_i32, %arg0 : i32, i32
  }
}

</mosaic_0001>

<llo_original>
// kernel: tpu_custom_call.1
$region0: #{tpu_custom_call.1}
  #allocation0 [shape = 'u32[]', space=smem, size = 0x4, offset = 0x4, fixed_abs, tag = 'smem constant byte address 0x4 - core index']
  #allocation1 [shape = 'u32[72,128]{1,0:T(1,128)}', space=vmem, size = 0x9000, scoped, tag = 'internal scratch']
  %s0 = inlined_call_operand.vmem [shape: f32[128,200], index: 0, kind: input, shape index: {}]
  %s1 = inlined_call_operand.vmem [shape: f32[4,3], index: 1, kind: input, shape index: {}]
  %s2 = inlined_call_operand.vmem [shape: f32[4], index: 2, kind: input, shape index: {}]
  %s3 = inlined_call_operand.vmem [shape: f32[8,3], index: 3, kind: input, shape index: {}]
  %s4 = inlined_call_operand.vmem [shape: f32[2], index: 4, kind: input, shape index: {}]
  %s5 = inlined_call_operand.vmem [shape: f32[2,196], index: 5, kind: input, shape index: {}]
  %s6 = inlined_call_operand.vmem [shape: f32[2,196], index: 6, kind: input, shape index: {}]
  %s7 = inlined_call_operand.vmem [shape: f32[2,1], index: 7, kind: input, shape index: {}]
  %s8 = inlined_call_operand.hbm [shape: f32[2,128], index: 8, kind: output, shape index: {}]
  %s9 = sld [smem:[#allocation0]]
  $region58: #{tpu_custom_call.1} parent=0
    _
  %s11 = ssub.s32 1, %s9
  %s12 = scalar_select 0, %s11, %s9
  $region1: #{tpu_custom_call.1} parent=0
    #allocation2 [shape = 'u8[2048]{0}', space=smem, size = 0x800, scoped, tag = 'input window, operand 1, single buffered']
    #allocation3 [shape = 's32[1]{0}', space=sflag, size = 0x4, scoped, tag = 'scoped memory for tpu_custom_call.1']
    #allocation4 [shape = 's32[1]{0}', space=sflag, size = 0x4, scoped, tag = 'scoped memory for tpu_custom_call.1']
    #allocation5 [shape = 'u8[512]{0}', space=smem, size = 0x200, scoped, tag = 'input window, operand 2, single buffered']
    #allocation6 [shape = 's32[1]{0}', space=sflag, size = 0x4, scoped, tag = 'scoped memory for tpu_custom_call.1']
    #allocation7 [shape = 'u8[4096]{0}', space=smem, size = 0x1000, scoped, tag = 'input window, operand 3, single buffered']
    #allocation8 [shape = 'u8[512]{0}', space=smem, size = 0x200, scoped, tag = 'input window, operand 4, single buffered']
    #allocation9 [shape = 's32[1]{0}', space=sflag, size = 0x4, scoped, tag = 'scoped memory for tpu_custom_call.1']
    #allocation10 [shape = 'u8[1024]{0}', space=vmem, size = 0x400, scoped, tag = 'output window, operand 0, single buffered']
    %13 = vsyncpa [#allocation4], 0
    %14 = vsyncpa [#allocation6], 0
    %15 = vsyncpa [#allocation9], 0
    %16 = vsyncpa [#allocation3], 0
    // Predicated region
    $region2: #{tpu_custom_call.1} parent=1 // pred_check
      _
    $region3: #{tpu_custom_call.1} parent=1 // pred_check_branch
      %18 = sbr.rel (0) target = $region5
    $region4: #{tpu_custom_call.1} parent=1 // pred_region
      _
    $region5: #{tpu_custom_call.1} parent=1 // pred_fallthru
      _
    // Predicated region
    $region6: #{tpu_custom_call.1} parent=1 // pred_check
      _
    $region7: #{tpu_custom_call.1} parent=1 // pred_check_branch
      %20 = sbr.rel (0) target = $region9
    $region8: #{tpu_custom_call.1} parent=1 // pred_region
      %22 = vsyncadd [#allocation4], 0
      %s24 = sshll.u32 %s1, 4
      %s25 = int_to_ptr.vmem [resolvable:$true] %s24
      %27 = dma.vmem_to_smem %s25, 64, [#allocation2], [#allocation4]
    $region9: #{tpu_custom_call.1} parent=1 // pred_fallthru
      _
    // Predicated region
    $region10: #{tpu_custom_call.1} parent=1 // pred_check
      _
    $region11: #{tpu_custom_call.1} parent=1 // pred_check_branch
      %29 = sbr.rel (0) target = $region13
    $region12: #{tpu_custom_call.1} parent=1 // pred_region
      %31 = vsyncadd [#allocation6], 0
      %s33 = sshll.u32 %s2, 4
      %s34 = int_to_ptr.vmem [resolvable:$true] %s33
      %36 = dma.vmem_to_smem %s34, 16, [#allocation5], [#allocation6]
    $region13: #{tpu_custom_call.1} parent=1 // pred_fallthru
      _
    // Predicated region
    $region14: #{tpu_custom_call.1} parent=1 // pred_check
      _
    $region15: #{tpu_custom_call.1} parent=1 // pred_check_branch
      %38 = sbr.rel (0) target = $region17
    $region16: #{tpu_custom_call.1} parent=1 // pred_region
      %40 = vsyncadd [#allocation6], 0
      %s42 = sshll.u32 %s3, 4
      %s43 = int_to_ptr.vmem [resolvable:$true] %s42
      %45 = dma.vmem_to_smem %s43, 128, [#allocation7], [#allocation6]
    $region17: #{tpu_custom_call.1} parent=1 // pred_fallthru
      _
    // Predicated region
    $region18: #{tpu_custom_call.1} parent=1 // pred_check
      _
    $region19: #{tpu_custom_call.1} parent=1 // pred_check_branch
      %47 = sbr.rel (0) target = $region21
    $region20: #{tpu_custom_call.1} parent=1 // pred_region
      %49 = vsyncadd [#allocation9], 0
      %s51 = sshll.u32 %s4, 4
      %s52 = int_to_ptr.vmem [resolvable:$true] %s51
      %54 = dma.vmem_to_smem %s52, 16, [#allocation8], [#allocation9]
    $region21: #{tpu_custom_call.1} parent=1 // pred_fallthru
      _
    // Predicated region
    $region22: #{tpu_custom_call.1} parent=1 // pred_check
      _
    $region23: #{tpu_custom_call.1} parent=1 // pred_check_branch
      %56 = sbr.rel (0) target = $region25
    $region24: #{tpu_custom_call.1} parent=1 // pred_region
      _
    $region25: #{tpu_custom_call.1} parent=1 // pred_fallthru
      _
    // Predicated region
    $region26: #{tpu_custom_call.1} parent=1 // pred_check
      _
    $region27: #{tpu_custom_call.1} parent=1 // pred_check_branch
      %58 = sbr.rel (0) target = $region29
    $region28: #{tpu_custom_call.1} parent=1 // pred_region
      _
    $region29: #{tpu_custom_call.1} parent=1 // pred_fallthru
      _
    // Predicated region
    $region30: #{tpu_custom_call.1} parent=1 // pred_check
      _
    $region31: #{tpu_custom_call.1} parent=1 // pred_check_branch
      %60 = sbr.rel (0) target = $region33
    $region32: #{tpu_custom_call.1} parent=1 // pred_region
      _
    $region33: #{tpu_custom_call.1} parent=1 // pred_fallthru
      _
    // Predicated region
    $region34: #{tpu_custom_call.1} parent=1 // pred_check
      _
    $region35: #{tpu_custom_call.1} parent=1 // pred_check_branch
      %62 = sbr.rel (0) target = $region37
    $region36: #{tpu_custom_call.1} parent=1 // pred_region
      %64 = dma.done [#allocation4], 64
    $region37: #{tpu_custom_call.1} parent=1 // pred_fallthru
      _
    // Predicated region
    $region38: #{tpu_custom_call.1} parent=1 // pred_check
      _
    $region39: #{tpu_custom_call.1} parent=1 // pred_check_branch
      %66 = sbr.rel (0) target = $region41
    $region40: #{tpu_custom_call.1} parent=1 // pred_region
      %68 = dma.done [#allocation6], 16
    $region41: #{tpu_custom_call.1} parent=1 // pred_fallthru
      _
    // Predicated region
    $region42: #{tpu_custom_call.1} parent=1 // pred_check
      _
    $region43: #{tpu_custom_call.1} parent=1 // pred_check_branch
      %70 = sbr.rel (0) target = $region45
    $region44: #{tpu_custom_call.1} parent=1 // pred_region
      %72 = dma.done [#allocation6], 128
    $region45: #{tpu_custom_call.1} parent=1 // pred_fallthru
      _
    // Predicated region
    $region46: #{tpu_custom_call.1} parent=1 // pred_check
      _
    $region47: #{tpu_custom_call.1} parent=1 // pred_check_branch
      %74 = sbr.rel (0) target = $region49
    $region48: #{tpu_custom_call.1} parent=1 // pred_region
      %76 = dma.done [#allocation9], 16
    $region49: #{tpu_custom_call.1} parent=1 // pred_fallthru
      _
    %77 = sfence
    %v78 = vld [vmem:[%s0] sm:$0xff]
    %v79 = vld [vmem:[%s0 + $0x8] sm:$0xff]
    %v80 = vld [vmem:[%s0 + $0x10] sm:$0xff]
    %v81 = vld [vmem:[%s0 + $0x18] sm:$0xff]
    %v82 = vld [vmem:[%s0 + $0x20] sm:$0xff]
    %v83 = vld [vmem:[%s0 + $0x28] sm:$0xff]
    %v84 = vld [vmem:[%s0 + $0x30] sm:$0xff]
    %v85 = vld [vmem:[%s0 + $0x38] sm:$0xff]
    %v86 = vld [vmem:[%s0 + $0x40] sm:$0xff]
    %v87 = vld [vmem:[%s0 + $0x48] sm:$0xff]
    %v88 = vld [vmem:[%s0 + $0x50] sm:$0xff]
    %v89 = vld [vmem:[%s0 + $0x58] sm:$0xff]
    %v90 = vld [vmem:[%s0 + $0x60] sm:$0xff]
    %v91 = vld [vmem:[%s0 + $0x68] sm:$0xff]
    %v92 = vld [vmem:[%s0 + $0x70] sm:$0xff]
    %v93 = vld [vmem:[%s0 + $0x78] sm:$0xff]
    %v94 = vld [vmem:[%s0 + $0x80] sm:$0xff]
    %v95 = vld [vmem:[%s0 + $0x88] sm:$0xff]
    %v96 = vld [vmem:[%s0 + $0x90] sm:$0xff]
    %v97 = vld [vmem:[%s0 + $0x98] sm:$0xff]
    %v98 = vld [vmem:[%s0 + $0xa0] sm:$0xff]
    %v99 = vld [vmem:[%s0 + $0xa8] sm:$0xff]
    %v100 = vld [vmem:[%s0 + $0xb0] sm:$0xff]
    %v101 = vld [vmem:[%s0 + $0xb8] sm:$0xff]
    %v102 = vld [vmem:[%s0 + $0xc0] sm:$0xff]
    %v103 = vld [vmem:[%s0 + $0xc8] sm:$0xff]
    %v104 = vld [vmem:[%s0 + $0xd0] sm:$0xff]
    %v105 = vld [vmem:[%s0 + $0xd8] sm:$0xff]
    %v106 = vld [vmem:[%s0 + $0xe0] sm:$0xff]
    %v107 = vld [vmem:[%s0 + $0xe8] sm:$0xff]
    %v108 = vld [vmem:[%s0 + $0xf0] sm:$0xff]
    %v109 = vld [vmem:[%s0 + $0xf8] sm:$0xff]
    %110 = vxpose.xlu0.b32.start [1/16] %v78, 128
    %111 = vxpose.xlu0.b32.cont [2/16] %v80, 128
    %112 = vxpose.xlu0.b32.cont [3/16] %v82, 128
    %113 = vxpose.xlu0.b32.cont [4/16] %v84, 128
    %114 = vxpose.xlu0.b32.cont [5/16] %v86, 128
    %115 = vxpose.xlu0.b32.cont [6/16] %v88, 128
    %116 = vxpose.xlu0.b32.cont [7/16] %v90, 128
    %117 = vxpose.xlu0.b32.cont [8/16] %v92, 128
    %118 = vxpose.xlu0.b32.cont [9/16] %v94, 128
    %119 = vxpose.xlu0.b32.cont [10/16] %v96, 128
    %120 = vxpose.xlu0.b32.cont [11/16] %v98, 128
    %121 = vxpose.xlu0.b32.cont [12/16] %v100, 128
    %122 = vxpose.xlu0.b32.cont [13/16] %v102, 128
    %123 = vxpose.xlu0.b32.cont [14/16] %v104, 128
    %124 = vxpose.xlu0.b32.cont [15/16] %v106, 128
    %125 = vxpose.xlu0.b32.end [16/16] %v108, 128
    %v126 = vpop.trf.xlu0
    %v127 = vpop.trf.xlu0
    %v128 = vpop.trf.xlu0
    %v129 = vpop.trf.xlu0
    %v130 = vpop.trf.xlu0
    %v131 = vpop.trf.xlu0
    %v132 = vpop.trf.xlu0
    %v133 = vpop.trf.xlu0
    %v134 = vpop.trf.xlu0
    %v135 = vpop.trf.xlu0
    %v136 = vpop.trf.xlu0
    %v137 = vpop.trf.xlu0
    %v138 = vpop.trf.xlu0
    %v139 = vpop.trf.xlu0
    %v140 = vpop.trf.xlu0
    %v141 = vpop.trf.xlu0
    %142 = vxpose.xlu0.b32.start [1/16] %v79, 128
    %143 = vxpose.xlu0.b32.cont [2/16] %v81, 128
    %144 = vxpose.xlu0.b32.cont [3/16] %v83, 128
    %145 = vxpose.xlu0.b32.cont [4/16] %v85, 128
    %146 = vxpose.xlu0.b32.cont [5/16] %v87, 128
    %147 = vxpose.xlu0.b32.cont [6/16] %v89, 128
    %148 = vxpose.xlu0.b32.cont [7/16] %v91, 128
    %149 = vxpose.xlu0.b32.cont [8/16] %v93, 128
    %150 = vxpose.xlu0.b32.cont [9/16] %v95, 128
    %151 = vxpose.xlu0.b32.cont [10/16] %v97, 128
    %152 = vxpose.xlu0.b32.cont [11/16] %v99, 128
    %153 = vxpose.xlu0.b32.cont [12/16] %v101, 128
    %154 = vxpose.xlu0.b32.cont [13/16] %v103, 128
    %155 = vxpose.xlu0.b32.cont [14/16] %v105, 128
    %156 = vxpose.xlu0.b32.cont [15/16] %v107, 128
    %157 = vxpose.xlu0.b32.end [16/16] %v109, 128
    %v158 = vpop.trf.xlu0
    %v159 = vpop.trf.xlu0
    %v160 = vpop.trf.xlu0
    %v161 = vpop.trf.xlu0
    %v162 = vpop.trf.xlu0
    %v163 = vpop.trf.xlu0
    %v164 = vpop.trf.xlu0
    %v165 = vpop.trf.xlu0
    %v166 = vpop.trf.xlu0
    %v167 = vpop.trf.xlu0
    %v168 = vpop.trf.xlu0
    %v169 = vpop.trf.xlu0
    %v170 = vpop.trf.xlu0
    %v171 = vpop.trf.xlu0
    %v172 = vpop.trf.xlu0
    %v173 = vpop.trf.xlu0
    %s174 = sld [smem:[#allocation2]]
    %v175 = vstv %s174
    %v176 = vmul.f32 %v175, %v126
    %v177 = vmul.f32 %v175, %v127
    %v178 = vmul.f32 %v175, %v128
    %v179 = vmul.f32 %v175, %v129
    %v180 = vmul.f32 %v175, %v130
    %v181 = vmul.f32 %v175, %v131
    %v182 = vmul.f32 %v175, %v132
    %v183 = vmul.f32 %v175, %v133
    %v184 = vmul.f32 %v175, %v134
    %v185 = vmul.f32 %v175, %v135
    %v186 = vmul.f32 %v175, %v136
    %v187 = vmul.f32 %v175, %v137
    %v188 = vmul.f32 %v175, %v138
    %v189 = vmul.f32 %v175, %v139
    %v190 = vmul.f32 %v175, %v140
    %v191 = vmul.f32 %v175, %v141
    %v192 = vmul.f32 %v175, %v158
    %v193 = vmul.f32 %v175, %v159
    %v194 = vmul.f32 %v175, %v160
    %v195 = vmul.f32 %v175, %v161
    %v196 = vmul.f32 %v175, %v162
    %v197 = vmul.f32 %v175, %v163
    %v198 = vmul.f32 %v175, %v164
    %v199 = vmul.f32 %v175, %v165
    %v200 = vmul.f32 %v175, %v166
    %s201 = sld [smem:[#allocation2 + $0x1]]
    %v202 = vstv %s201
    %v203 = vmul.f32 %v202, %v126
    %v204 = vmul.f32 %v202, %v127
    %v205 = vmul.f32 %v202, %v128
    %v206 = vmul.f32 %v202, %v129
    %v207 = vmul.f32 %v202, %v130
    %v208 = vmul.f32 %v202, %v131
    %v209 = vmul.f32 %v202, %v132
    %v210 = vmul.f32 %v202, %v133
    %v211 = vmul.f32 %v202, %v134
    %v212 = vmul.f32 %v202, %v135
    %v213 = vmul.f32 %v202, %v136
    %v214 = vmul.f32 %v202, %v137
    %v215 = vmul.f32 %v202, %v138
    %v216 = vmul.f32 %v202, %v139
    %v217 = vmul.f32 %v202, %v140
    %v218 = vmul.f32 %v202, %v141
    %v219 = vmul.f32 %v202, %v158
    %v220 = vmul.f32 %v202, %v159
    %v221 = vmul.f32 %v202, %v160
    %v222 = vmul.f32 %v202, %v161
    %v223 = vmul.f32 %v202, %v162
    %v224 = vmul.f32 %v202, %v163
    %v225 = vmul.f32 %v202, %v164
    %v226 = vmul.f32 %v202, %v165
    %v227 = vmul.f32 %v202, %v166
    %vm253 = vcmask 1046528
    %v254 = vrot.slane %v203, 1
    %v255 = vrot.slane %v204, 1
    %v256 = vsel %vm253, %v254, %v255
    %v257 = vrot.slane %v205, 1
    %v258 = vsel %vm253, %v255, %v257
    %v259 = vrot.slane %v206, 1
    %v260 = vsel %vm253, %v257, %v259
    %v261 = vrot.slane %v207, 1
    %v262 = vsel %vm253, %v259, %v261
    %v263 = vrot.slane %v208, 1
    %v264 = vsel %vm253, %v261, %v263
    %v265 = vrot.slane %v209, 1
    %v266 = vsel %vm253, %v263, %v265
    %v267 = vrot.slane %v210, 1
    %v268 = vsel %vm253, %v265, %v267
    %v269 = vrot.slane %v211, 1
    %v270 = vsel %vm253, %v267, %v269
    %v271 = vrot.slane %v212, 1
    %v272 = vsel %vm253, %v269, %v271
    %v273 = vrot.slane %v213, 1
    %v274 = vsel %vm253, %v271, %v273
    %v275 = vrot.slane %v214, 1
    %v276 = vsel %vm253, %v273, %v275
    %v277 = vrot.slane %v215, 1
    %v278 = vsel %vm253, %v275, %v277
    %v279 = vrot.slane %v216, 1
    %v280 = vsel %vm253, %v277, %v279
    %v281 = vrot.slane %v217, 1
    %v282 = vsel %vm253, %v279, %v281
    %v283 = vrot.slane %v218, 1
    %v284 = vsel %vm253, %v281, %v283
    %v285 = vrot.slane %v219, 1
    %v286 = vsel %vm253, %v283, %v285
    %v287 = vrot.slane %v220, 1
    %v288 = vsel %vm253, %v285, %v287
    %v289 = vrot.slane %v221, 1
    %v290 = vsel %vm253, %v287, %v289
    %v291 = vrot.slane %v222, 1
    %v292 = vsel %vm253, %v289, %v291
    %v293 = vrot.slane %v223, 1
    %v294 = vsel %vm253, %v291, %v293
    %v295 = vrot.slane %v224, 1
    %v296 = vsel %vm253, %v293, %v295
    %v297 = vrot.slane %v225, 1
    %v298 = vsel %vm253, %v295, %v297
    %v299 = vrot.slane %v226, 1
    %v300 = vsel %vm253, %v297, %v299
    %v301 = vrot.slane %v227, 1
    %v302 = vsel %vm253, %v299, %v301
    %v328 = vadd.f32 %v176, %v256
    %v329 = vadd.f32 %v177, %v258
    %v330 = vadd.f32 %v178, %v260
    %v331 = vadd.f32 %v179, %v262
    %v332 = vadd.f32 %v180, %v264
    %v333 = vadd.f32 %v181, %v266
    %v334 = vadd.f32 %v182, %v268
    %v335 = vadd.f32 %v183, %v270
    %v336 = vadd.f32 %v184, %v272
    %v337 = vadd.f32 %v185, %v274
    %v338 = vadd.f32 %v186, %v276
    %v339 = vadd.f32 %v187, %v278
    %v340 = vadd.f32 %v188, %v280
    %v341 = vadd.f32 %v189, %v282
    %v342 = vadd.f32 %v190, %v284
    %v343 = vadd.f32 %v191, %v286
    %v344 = vadd.f32 %v192, %v288
    %v345 = vadd.f32 %v193, %v290
    %v346 = vadd.f32 %v194, %v292
    %v347 = vadd.f32 %v195, %v294
    %v348 = vadd.f32 %v196, %v296
    %v349 = vadd.f32 %v197, %v298
    %v350 = vadd.f32 %v198, %v300
    %v351 = vadd.f32 %v199, %v302
    %v352 = vadd.f32 %v200, %v301
    %s353 = sld [smem:[#allocation2 + $0x2]]
    %v354 = vstv %s353
    %v355 = vmul.f32 %v354, %v126
    %v356 = vmul.f32 %v354, %v127
    %v357 = vmul.f32 %v354, %v128
    %v358 = vmul.f32 %v354, %v129
    %v359 = vmul.f32 %v354, %v130
    %v360 = vmul.f32 %v354, %v131
    %v361 = vmul.f32 %v354, %v132
    %v362 = vmul.f32 %v354, %v133
    %v363 = vmul.f32 %v354, %v134
    %v364 = vmul.f32 %v354, %v135
    %v365 = vmul.f32 %v354, %v136
    %v366 = vmul.f32 %v354, %v137
    %v367 = vmul.f32 %v354, %v138
    %v368 = vmul.f32 %v354, %v139
    %v369 = vmul.f32 %v354, %v140
    %v370 = vmul.f32 %v354, %v141
    %v371 = vmul.f32 %v354, %v158
    %v372 = vmul.f32 %v354, %v159
    %v373 = vmul.f32 %v354, %v160
    %v374 = vmul.f32 %v354, %v161
    %v375 = vmul.f32 %v354, %v162
    %v376 = vmul.f32 %v354, %v163
    %v377 = vmul.f32 %v354, %v164
    %v378 = vmul.f32 %v354, %v165
    %v379 = vmul.f32 %v354, %v166
    %vm405 = vcmask 1045504
    %v406 = vrot.slane %v355, 2
    %v407 = vrot.slane %v356, 2
    %v408 = vsel %vm405, %v406, %v407
    %v409 = vrot.slane %v357, 2
    %v410 = vsel %vm405, %v407, %v409
    %v411 = vrot.slane %v358, 2
    %v412 = vsel %vm405, %v409, %v411
    %v413 = vrot.slane %v359, 2
    %v414 = vsel %vm405, %v411, %v413
    %v415 = vrot.slane %v360, 2
    %v416 = vsel %vm405, %v413, %v415
    %v417 = vrot.slane %v361, 2
    %v418 = vsel %vm405, %v415, %v417
    %v419 = vrot.slane %v362, 2
    %v420 = vsel %vm405, %v417, %v419
    %v421 = vrot.slane %v363, 2
    %v422 = vsel %vm405, %v419, %v421
    %v423 = vrot.slane %v364, 2
    %v424 = vsel %vm405, %v421, %v423
    %v425 = vrot.slane %v365, 2
    %v426 = vsel %vm405, %v423, %v425
    %v427 = vrot.slane %v366, 2
    %v428 = vsel %vm405, %v425, %v427
    %v429 = vrot.slane %v367, 2
    %v430 = vsel %vm405, %v427, %v429
    %v431 = vrot.slane %v368, 2
    %v432 = vsel %vm405, %v429, %v431
    %v433 = vrot.slane %v369, 2
    %v434 = vsel %vm405, %v431, %v433
    %v435 = vrot.slane %v370, 2
    %v436 = vsel %vm405, %v433, %v435
    %v437 = vrot.slane %v371, 2
    %v438 = vsel %vm405, %v435, %v437
    %v439 = vrot.slane %v372, 2
    %v440 = vsel %vm405, %v437, %v439
    %v441 = vrot.slane %v373, 2
    %v442 = vsel %vm405, %v439, %v441
    %v443 = vrot.slane %v374, 2
    %v444 = vsel %vm405, %v441, %v443
    %v445 = vrot.slane %v375, 2
    %v446 = vsel %vm405, %v443, %v445
    %v447 = vrot.slane %v376, 2
    %v448 = vsel %vm405, %v445, %v447
    %v449 = vrot.slane %v377, 2
    %v450 = vsel %vm405, %v447, %v449
    %v451 = vrot.slane %v378, 2
    %v452 = vsel %vm405, %v449, %v451
    %v453 = vrot.slane %v379, 2
    %v454 = vsel %vm405, %v451, %v453
    %v480 = vadd.f32 %v328, %v408
    %v481 = vadd.f32 %v329, %v410
    %v482 = vadd.f32 %v330, %v412
    %v483 = vadd.f32 %v331, %v414
    %v484 = vadd.f32 %v332, %v416
    %v485 = vadd.f32 %v333, %v418
    %v486 = vadd.f32 %v334, %v420
    %v487 = vadd.f32 %v335, %v422
    %v488 = vadd.f32 %v336, %v424
    %v489 = vadd.f32 %v337, %v426
    %v490 = vadd.f32 %v338, %v428
    %v491 = vadd.f32 %v339, %v430
    %v492 = vadd.f32 %v340, %v432
    %v493 = vadd.f32 %v341, %v434
    %v494 = vadd.f32 %v342, %v436
    %v495 = vadd.f32 %v343, %v438
    %v496 = vadd.f32 %v344, %v440
    %v497 = vadd.f32 %v345, %v442
    %v498 = vadd.f32 %v346, %v444
    %v499 = vadd.f32 %v347, %v446
    %v500 = vadd.f32 %v348, %v448
    %v501 = vadd.f32 %v349, %v450
    %v502 = vadd.f32 %v350, %v452
    %v503 = vadd.f32 %v351, %v454
    %v504 = vadd.f32 %v352, %v453
    %s505 = sld [smem:[#allocation5]]
    %v506 = vstv %s505
    %v507 = vadd.f32 %v480, %v506
    %v508 = vadd.f32 %v481, %v506
    %v509 = vadd.f32 %v482, %v506
    %v510 = vadd.f32 %v483, %v506
    %v511 = vadd.f32 %v484, %v506
    %v512 = vadd.f32 %v485, %v506
    %v513 = vadd.f32 %v486, %v506
    %v514 = vadd.f32 %v487, %v506
    %v515 = vadd.f32 %v488, %v506
    %v516 = vadd.f32 %v489, %v506
    %v517 = vadd.f32 %v490, %v506
    %v518 = vadd.f32 %v491, %v506
    %v519 = vadd.f32 %v492, %v506
    %v520 = vadd.f32 %v493, %v506
    %v521 = vadd.f32 %v494, %v506
    %v522 = vadd.f32 %v495, %v506
    %v523 = vadd.f32 %v496, %v506
    %v524 = vadd.f32 %v497, %v506
    %v525 = vadd.f32 %v498, %v506
    %v526 = vadd.f32 %v499, %v506
    %v527 = vadd.f32 %v500, %v506
    %v528 = vadd.f32 %v501, %v506
    %v529 = vadd.f32 %v502, %v506
    %v530 = vadd.f32 %v503, %v506
    %v531 = vadd.f32 %v504, %v506
    %v532 = vmax.f32 %v507, 0.0
    %v533 = vmax.f32 %v508, 0.0
    %v534 = vmax.f32 %v509, 0.0
    %v535 = vmax.f32 %v510, 0.0
    %v536 = vmax.f32 %v511, 0.0
    %v537 = vmax.f32 %v512, 0.0
    %v538 = vmax.f32 %v513, 0.0
    %v539 = vmax.f32 %v514, 0.0
    %v540 = vmax.f32 %v515, 0.0
    %v541 = vmax.f32 %v516, 0.0
    %v542 = vmax.f32 %v517, 0.0
    %v543 = vmax.f32 %v518, 0.0
    %v544 = vmax.f32 %v519, 0.0
    %v545 = vmax.f32 %v520, 0.0
    %v546 = vmax.f32 %v521, 0.0
    %v547 = vmax.f32 %v522, 0.0
    %v548 = vmax.f32 %v523, 0.0
    %v549 = vmax.f32 %v524, 0.0
    %v550 = vmax.f32 %v525, 0.0
    %v551 = vmax.f32 %v526, 0.0
    %v552 = vmax.f32 %v527, 0.0
    %v553 = vmax.f32 %v528, 0.0
    %v554 = vmax.f32 %v529, 0.0
    %v555 = vmax.f32 %v530, 0.0
    %v556 = vmax.f32 %v531, 0.0
    %s557 = sld [smem:[#allocation2 + $0x80]]
    %v558 = vstv %s557
    %v559 = vmul.f32 %v558, %v126
    %v560 = vmul.f32 %v558, %v127
    %v561 = vmul.f32 %v558, %v128
    %v562 = vmul.f32 %v558, %v129
    %v563 = vmul.f32 %v558, %v130
    %v564 = vmul.f32 %v558, %v131
    %v565 = vmul.f32 %v558, %v132
    %v566 = vmul.f32 %v558, %v133
    %v567 = vmul.f32 %v558, %v134
    %v568 = vmul.f32 %v558, %v135
    %v569 = vmul.f32 %v558, %v136
    %v570 = vmul.f32 %v558, %v137
    %v571 = vmul.f32 %v558, %v138
    %v572 = vmul.f32 %v558, %v139
    %v573 = vmul.f32 %v558, %v140
    %v574 = vmul.f32 %v558, %v141
    %v575 = vmul.f32 %v558, %v158
    %v576 = vmul.f32 %v558, %v159
    %v577 = vmul.f32 %v558, %v160
    %v578 = vmul.f32 %v558, %v161
    %v579 = vmul.f32 %v558, %v162
    %v580 = vmul.f32 %v558, %v163
    %v581 = vmul.f32 %v558, %v164
    %v582 = vmul.f32 %v558, %v165
    %v583 = vmul.f32 %v558, %v166
    %s584 = sld [smem:[#allocation2 + $0x81]]
    %v585 = vstv %s584
    %v586 = vmul.f32 %v585, %v126
    %v587 = vmul.f32 %v585, %v127
    %v588 = vmul.f32 %v585, %v128
    %v589 = vmul.f32 %v585, %v129
    %v590 = vmul.f32 %v585, %v130
    %v591 = vmul.f32 %v585, %v131
    %v592 = vmul.f32 %v585, %v132
    %v593 = vmul.f32 %v585, %v133
    %v594 = vmul.f32 %v585, %v134
    %v595 = vmul.f32 %v585, %v135
    %v596 = vmul.f32 %v585, %v136
    %v597 = vmul.f32 %v585, %v137
    %v598 = vmul.f32 %v585, %v138
    %v599 = vmul.f32 %v585, %v139
    %v600 = vmul.f32 %v585, %v140
    %v601 = vmul.f32 %v585, %v141
    %v602 = vmul.f32 %v585, %v158
    %v603 = vmul.f32 %v585, %v159
    %v604 = vmul.f32 %v585, %v160
    %v605 = vmul.f32 %v585, %v161
    %v606 = vmul.f32 %v585, %v162
    %v607 = vmul.f32 %v585, %v163
    %v608 = vmul.f32 %v585, %v164
    %v609 = vmul.f32 %v585, %v165
    %v610 = vmul.f32 %v585, %v166
    %v636 = vrot.slane %v586, 1
    %v637 = vrot.slane %v587, 1
    %v638 = vsel %vm253, %v636, %v637
    %v639 = vrot.slane %v588, 1
    %v640 = vsel %vm253, %v637, %v639
    %v641 = vrot.slane %v589, 1
    %v642 = vsel %vm253, %v639, %v641
    %v643 = vrot.slane %v590, 1
    %v644 = vsel %vm253, %v641, %v643
    %v645 = vrot.slane %v591, 1
    %v646 = vsel %vm253, %v643, %v645
    %v647 = vrot.slane %v592, 1
    %v648 = vsel %vm253, %v645, %v647
    %v649 = vrot.slane %v593, 1
    %v650 = vsel %vm253, %v647, %v649
    %v651 = vrot.slane %v594, 1
    %v652 = vsel %vm253, %v649, %v651
    %v653 = vrot.slane %v595, 1
    %v654 = vsel %vm253, %v651, %v653
    %v655 = vrot.slane %v596, 1
    %v656 = vsel %vm253, %v653, %v655
    %v657 = vrot.slane %v597, 1
    %v658 = vsel %vm253, %v655, %v657
    %v659 = vrot.slane %v598, 1
    %v660 = vsel %vm253, %v657, %v659
    %v661 = vrot.slane %v599, 1
    %v662 = vsel %vm253, %v659, %v661
    %v663 = vrot.slane %v600, 1
    %v664 = vsel %vm253, %v661, %v663
    %v665 = vrot.slane %v601, 1
    %v666 = vsel %vm253, %v663, %v665
    %v667 = vrot.slane %v602, 1
    %v668 = vsel %vm253, %v665, %v667
    %v669 = vrot.slane %v603, 1
    %v670 = vsel %vm253, %v667, %v669
    %v671 = vrot.slane %v604, 1
    %v672 = vsel %vm253, %v669, %v671
    %v673 = vrot.slane %v605, 1
    %v674 = vsel %vm253, %v671, %v673
    %v675 = vrot.slane %v606, 1
    %v676 = vsel %vm253, %v673, %v675
    %v677 = vrot.slane %v607, 1
    %v678 = vsel %vm253, %v675, %v677
    %v679 = vrot.slane %v608, 1
    %v680 = vsel %vm253, %v677, %v679
    %v681 = vrot.slane %v609, 1
    %v682 = vsel %vm253, %v679, %v681
    %v683 = vrot.slane %v610, 1
    %v684 = vsel %vm253, %v681, %v683
    %v710 = vadd.f32 %v559, %v638
    %v711 = vadd.f32 %v560, %v640
    %v712 = vadd.f32 %v561, %v642
    %v713 = vadd.f32 %v562, %v644
    %v714 = vadd.f32 %v563, %v646
    %v715 = vadd.f32 %v564, %v648
    %v716 = vadd.f32 %v565, %v650
    %v717 = vadd.f32 %v566, %v652
    %v718 = vadd.f32 %v567, %v654
    %v719 = vadd.f32 %v568, %v656
    %v720 = vadd.f32 %v569, %v658
    %v721 = vadd.f32 %v570, %v660
    %v722 = vadd.f32 %v571, %v662
    %v723 = vadd.f32 %v572, %v664
    %v724 = vadd.f32 %v573, %v666
    %v725 = vadd.f32 %v574, %v668
    %v726 = vadd.f32 %v575, %v670
    %v727 = vadd.f32 %v576, %v672
    %v728 = vadd.f32 %v577, %v674
    %v729 = vadd.f32 %v578, %v676
    %v730 = vadd.f32 %v579, %v678
    %v731 = vadd.f32 %v580, %v680
    %v732 = vadd.f32 %v581, %v682
    %v733 = vadd.f32 %v582, %v684
    %v734 = vadd.f32 %v583, %v683
    %s735 = sld [smem:[#allocation2 + $0x82]]
    %v736 = vstv %s735
    %v737 = vmul.f32 %v736, %v126
    %v738 = vmul.f32 %v736, %v127
    %v739 = vmul.f32 %v736, %v128
    %v740 = vmul.f32 %v736, %v129
    %v741 = vmul.f32 %v736, %v130
    %v742 = vmul.f32 %v736, %v131
    %v743 = vmul.f32 %v736, %v132
    %v744 = vmul.f32 %v736, %v133
    %v745 = vmul.f32 %v736, %v134
    %v746 = vmul.f32 %v736, %v135
    %v747 = vmul.f32 %v736, %v136
    %v748 = vmul.f32 %v736, %v137
    %v749 = vmul.f32 %v736, %v138
    %v750 = vmul.f32 %v736, %v139
    %v751 = vmul.f32 %v736, %v140
    %v752 = vmul.f32 %v736, %v141
    %v753 = vmul.f32 %v736, %v158
    %v754 = vmul.f32 %v736, %v159
    %v755 = vmul.f32 %v736, %v160
    %v756 = vmul.f32 %v736, %v161
    %v757 = vmul.f32 %v736, %v162
    %v758 = vmul.f32 %v736, %v163
    %v759 = vmul.f32 %v736, %v164
    %v760 = vmul.f32 %v736, %v165
    %v761 = vmul.f32 %v736, %v166
    %v787 = vrot.slane %v737, 2
    %v788 = vrot.slane %v738, 2
    %v789 = vsel %vm405, %v787, %v788
    %v790 = vrot.slane %v739, 2
    %v791 = vsel %vm405, %v788, %v790
    %v792 = vrot.slane %v740, 2
    %v793 = vsel %vm405, %v790, %v792
    %v794 = vrot.slane %v741, 2
    %v795 = vsel %vm405, %v792, %v794
    %v796 = vrot.slane %v742, 2
    %v797 = vsel %vm405, %v794, %v796
    %v798 = vrot.slane %v743, 2
    %v799 = vsel %vm405, %v796, %v798
    %v800 = vrot.slane %v744, 2
    %v801 = vsel %vm405, %v798, %v800
    %v802 = vrot.slane %v745, 2
    %v803 = vsel %vm405, %v800, %v802
    %v804 = vrot.slane %v746, 2
    %v805 = vsel %vm405, %v802, %v804
    %v806 = vrot.slane %v747, 2
    %v807 = vsel %vm405, %v804, %v806
    %v808 = vrot.slane %v748, 2
    %v809 = vsel %vm405, %v806, %v808
    %v810 = vrot.slane %v749, 2
    %v811 = vsel %vm405, %v808, %v810
    %v812 = vrot.slane %v750, 2
    %v813 = vsel %vm405, %v810, %v812
    %v814 = vrot.slane %v751, 2
    %v815 = vsel %vm405, %v812, %v814
    %v816 = vrot.slane %v752, 2
    %v817 = vsel %vm405, %v814, %v816
    %v818 = vrot.slane %v753, 2
    %v819 = vsel %vm405, %v816, %v818
    %v820 = vrot.slane %v754, 2
    %v821 = vsel %vm405, %v818, %v820
    %v822 = vrot.slane %v755, 2
    %v823 = vsel %vm405, %v820, %v822
    %v824 = vrot.slane %v756, 2
    %v825 = vsel %vm405, %v822, %v824
    %v826 = vrot.slane %v757, 2
    %v827 = vsel %vm405, %v824, %v826
    %v828 = vrot.slane %v758, 2
    %v829 = vsel %vm405, %v826, %v828
    %v830 = vrot.slane %v759, 2
    %v831 = vsel %vm405, %v828, %v830
    %v832 = vrot.slane %v760, 2
    %v833 = vsel %vm405, %v830, %v832
    %v834 = vrot.slane %v761, 2
    %v835 = vsel %vm405, %v832, %v834
    %v861 = vadd.f32 %v710, %v789
    %v862 = vadd.f32 %v711, %v791
    %v863 = vadd.f32 %v712, %v793
    %v864 = vadd.f32 %v713, %v795
    %v865 = vadd.f32 %v714, %v797
    %v866 = vadd.f32 %v715, %v799
    %v867 = vadd.f32 %v716, %v801
    %v868 = vadd.f32 %v717, %v803
    %v869 = vadd.f32 %v718, %v805
    %v870 = vadd.f32 %v719, %v807
    %v871 = vadd.f32 %v720, %v809
    %v872 = vadd.f32 %v721, %v811
    %v873 = vadd.f32 %v722, %v813
    %v874 = vadd.f32 %v723, %v815
    %v875 = vadd.f32 %v724, %v817
    %v876 = vadd.f32 %v725, %v819
    %v877 = vadd.f32 %v726, %v821
    %v878 = vadd.f32 %v727, %v823
    %v879 = vadd.f32 %v728, %v825
    %v880 = vadd.f32 %v729, %v827
    %v881 = vadd.f32 %v730, %v829
    %v882 = vadd.f32 %v731, %v831
    %v883 = vadd.f32 %v732, %v833
    %v884 = vadd.f32 %v733, %v835
    %v885 = vadd.f32 %v734, %v834
    %s886 = sld [smem:[#allocation5 + $0x1]]
    %v887 = vstv %s886
    %v888 = vadd.f32 %v861, %v887
    %v889 = vadd.f32 %v862, %v887
    %v890 = vadd.f32 %v863, %v887
    %v891 = vadd.f32 %v864, %v887
    %v892 = vadd.f32 %v865, %v887
    %v893 = vadd.f32 %v866, %v887
    %v894 = vadd.f32 %v867, %v887
    %v895 = vadd.f32 %v868, %v887
    %v896 = vadd.f32 %v869, %v887
    %v897 = vadd.f32 %v870, %v887
    %v898 = vadd.f32 %v871, %v887
    %v899 = vadd.f32 %v872, %v887
    %v900 = vadd.f32 %v873, %v887
    %v901 = vadd.f32 %v874, %v887
    %v902 = vadd.f32 %v875, %v887
    %v903 = vadd.f32 %v876, %v887
    %v904 = vadd.f32 %v877, %v887
    %v905 = vadd.f32 %v878, %v887
    %v906 = vadd.f32 %v879, %v887
    %v907 = vadd.f32 %v880, %v887
    %v908 = vadd.f32 %v881, %v887
    %v909 = vadd.f32 %v882, %v887
    %v910 = vadd.f32 %v883, %v887
    %v911 = vadd.f32 %v884, %v887
    %v912 = vadd.f32 %v885, %v887
    %v913 = vmax.f32 %v888, 0.0
    %v914 = vmax.f32 %v889, 0.0
    %v915 = vmax.f32 %v890, 0.0
    %v916 = vmax.f32 %v891, 0.0
    %v917 = vmax.f32 %v892, 0.0
    %v918 = vmax.f32 %v893, 0.0
    %v919 = vmax.f32 %v894, 0.0
    %v920 = vmax.f32 %v895, 0.0
    %v921 = vmax.f32 %v896, 0.0
    %v922 = vmax.f32 %v897, 0.0
    %v923 = vmax.f32 %v898, 0.0
    %v924 = vmax.f32 %v899, 0.0
    %v925 = vmax.f32 %v900, 0.0
    %v926 = vmax.f32 %v901, 0.0
    %v927 = vmax.f32 %v902, 0.0
    %v928 = vmax.f32 %v903, 0.0
    %v929 = vmax.f32 %v904, 0.0
    %v930 = vmax.f32 %v905, 0.0
    %v931 = vmax.f32 %v906, 0.0
    %v932 = vmax.f32 %v907, 0.0
    %v933 = vmax.f32 %v908, 0.0
    %v934 = vmax.f32 %v909, 0.0
    %v935 = vmax.f32 %v910, 0.0
    %v936 = vmax.f32 %v911, 0.0
    %v937 = vmax.f32 %v912, 0.0
    %s938 = sld [smem:[#allocation2 + $0x100]]
    %v939 = vstv %s938
    %v940 = vmul.f32 %v939, %v126
    %v941 = vmul.f32 %v939, %v127
    %v942 = vmul.f32 %v939, %v128
    %v943 = vmul.f32 %v939, %v129
    %v944 = vmul.f32 %v939, %v130
    %v945 = vmul.f32 %v939, %v131
    %v946 = vmul.f32 %v939, %v132
    %v947 = vmul.f32 %v939, %v133
    %v948 = vmul.f32 %v939, %v134
    %v949 = vmul.f32 %v939, %v135
    %v950 = vmul.f32 %v939, %v136
    %v951 = vmul.f32 %v939, %v137
    %v952 = vmul.f32 %v939, %v138
    %v953 = vmul.f32 %v939, %v139
    %v954 = vmul.f32 %v939, %v140
    %v955 = vmul.f32 %v939, %v141
    %v956 = vmul.f32 %v939, %v158
    %v957 = vmul.f32 %v939, %v159
    %v958 = vmul.f32 %v939, %v160
    %v959 = vmul.f32 %v939, %v161
    %v960 = vmul.f32 %v939, %v162
    %v961 = vmul.f32 %v939, %v163
    %v962 = vmul.f32 %v939, %v164
    %v963 = vmul.f32 %v939, %v165
    %v964 = vmul.f32 %v939, %v166
    %s965 = sld [smem:[#allocation2 + $0x101]]
    %v966 = vstv %s965
    %v967 = vmul.f32 %v966, %v126
    %v968 = vmul.f32 %v966, %v127
    %v969 = vmul.f32 %v966, %v128
    %v970 = vmul.f32 %v966, %v129
    %v971 = vmul.f32 %v966, %v130
    %v972 = vmul.f32 %v966, %v131
    %v973 = vmul.f32 %v966, %v132
    %v974 = vmul.f32 %v966, %v133
    %v975 = vmul.f32 %v966, %v134
    %v976 = vmul.f32 %v966, %v135
    %v977 = vmul.f32 %v966, %v136
    %v978 = vmul.f32 %v966, %v137
    %v979 = vmul.f32 %v966, %v138
    %v980 = vmul.f32 %v966, %v139
    %v981 = vmul.f32 %v966, %v140
    %v982 = vmul.f32 %v966, %v141
    %v983 = vmul.f32 %v966, %v158
    %v984 = vmul.f32 %v966, %v159
    %v985 = vmul.f32 %v966, %v160
    %v986 = vmul.f32 %v966, %v161
    %v987 = vmul.f32 %v966, %v162
    %v988 = vmul.f32 %v966, %v163
    %v989 = vmul.f32 %v966, %v164
    %v990 = vmul.f32 %v966, %v165
    %v991 = vmul.f32 %v966, %v166
    %v1017 = vrot.slane %v967, 1
    %v1018 = vrot.slane %v968, 1
    %v1019 = vsel %vm253, %v1017, %v1018
    %v1020 = vrot.slane %v969, 1
    %v1021 = vsel %vm253, %v1018, %v1020
    %v1022 = vrot.slane %v970, 1
    %v1023 = vsel %vm253, %v1020, %v1022
    %v1024 = vrot.slane %v971, 1
    %v1025 = vsel %vm253, %v1022, %v1024
    %v1026 = vrot.slane %v972, 1
    %v1027 = vsel %vm253, %v1024, %v1026
    %v1028 = vrot.slane %v973, 1
    %v1029 = vsel %vm253, %v1026, %v1028
    %v1030 = vrot.slane %v974, 1
    %v1031 = vsel %vm253, %v1028, %v1030
    %v1032 = vrot.slane %v975, 1
    %v1033 = vsel %vm253, %v1030, %v1032
    %v1034 = vrot.slane %v976, 1
    %v1035 = vsel %vm253, %v1032, %v1034
    %v1036 = vrot.slane %v977, 1
    %v1037 = vsel %vm253, %v1034, %v1036
    %v1038 = vrot.slane %v978, 1
    %v1039 = vsel %vm253, %v1036, %v1038
    %v1040 = vrot.slane %v979, 1
    %v1041 = vsel %vm253, %v1038, %v1040
    %v1042 = vrot.slane %v980, 1
    %v1043 = vsel %vm253, %v1040, %v1042
    %v1044 = vrot.slane %v981, 1
    %v1045 = vsel %vm253, %v1042, %v1044
    %v1046 = vrot.slane %v982, 1
    %v1047 = vsel %vm253, %v1044, %v1046
    %v1048 = vrot.slane %v983, 1
    %v1049 = vsel %vm253, %v1046, %v1048
    %v1050 = vrot.slane %v984, 1
    %v1051 = vsel %vm253, %v1048, %v1050
    %v1052 = vrot.slane %v985, 1
    %v1053 = vsel %vm253, %v1050, %v1052
    %v1054 = vrot.slane %v986, 1
    %v1055 = vsel %vm253, %v1052, %v1054
    %v1056 = vrot.slane %v987, 1
    %v1057 = vsel %vm253, %v1054, %v1056
    %v1058 = vrot.slane %v988, 1
    %v1059 = vsel %vm253, %v1056, %v1058
    %v1060 = vrot.slane %v989, 1
    %v1061 = vsel %vm253, %v1058, %v1060
    %v1062 = vrot.slane %v990, 1
    %v1063 = vsel %vm253, %v1060, %v1062
    %v1064 = vrot.slane %v991, 1
    %v1065 = vsel %vm253, %v1062, %v1064
    %v1091 = vadd.f32 %v940, %v1019
    %v1092 = vadd.f32 %v941, %v1021
    %v1093 = vadd.f32 %v942, %v1023
    %v1094 = vadd.f32 %v943, %v1025
    %v1095 = vadd.f32 %v944, %v1027
    %v1096 = vadd.f32 %v945, %v1029
    %v1097 = vadd.f32 %v946, %v1031
    %v1098 = vadd.f32 %v947, %v1033
    %v1099 = vadd.f32 %v948, %v1035
    %v1100 = vadd.f32 %v949, %v1037
    %v1101 = vadd.f32 %v950, %v1039
    %v1102 = vadd.f32 %v951, %v1041
    %v1103 = vadd.f32 %v952, %v1043
    %v1104 = vadd.f32 %v953, %v1045
    %v1105 = vadd.f32 %v954, %v1047
    %v1106 = vadd.f32 %v955, %v1049
    %v1107 = vadd.f32 %v956, %v1051
    %v1108 = vadd.f32 %v957, %v1053
    %v1109 = vadd.f32 %v958, %v1055
    %v1110 = vadd.f32 %v959, %v1057
    %v1111 = vadd.f32 %v960, %v1059
    %v1112 = vadd.f32 %v961, %v1061
    %v1113 = vadd.f32 %v962, %v1063
    %v1114 = vadd.f32 %v963, %v1065
    %v1115 = vadd.f32 %v964, %v1064
    %s1116 = sld [smem:[#allocation2 + $0x102]]
    %v1117 = vstv %s1116
    %v1118 = vmul.f32 %v1117, %v126
    %v1119 = vmul.f32 %v1117, %v127
    %v1120 = vmul.f32 %v1117, %v128
    %v1121 = vmul.f32 %v1117, %v129
    %v1122 = vmul.f32 %v1117, %v130
    %v1123 = vmul.f32 %v1117, %v131
    %v1124 = vmul.f32 %v1117, %v132
    %v1125 = vmul.f32 %v1117, %v133
    %v1126 = vmul.f32 %v1117, %v134
    %v1127 = vmul.f32 %v1117, %v135
    %v1128 = vmul.f32 %v1117, %v136
    %v1129 = vmul.f32 %v1117, %v137
    %v1130 = vmul.f32 %v1117, %v138
    %v1131 = vmul.f32 %v1117, %v139
    %v1132 = vmul.f32 %v1117, %v140
    %v1133 = vmul.f32 %v1117, %v141
    %v1134 = vmul.f32 %v1117, %v158
    %v1135 = vmul.f32 %v1117, %v159
    %v1136 = vmul.f32 %v1117, %v160
    %v1137 = vmul.f32 %v1117, %v161
    %v1138 = vmul.f32 %v1117, %v162
    %v1139 = vmul.f32 %v1117, %v163
    %v1140 = vmul.f32 %v1117, %v164
    %v1141 = vmul.f32 %v1117, %v165
    %v1142 = vmul.f32 %v1117, %v166
    %v1168 = vrot.slane %v1118, 2
    %v1169 = vrot.slane %v1119, 2
    %v1170 = vsel %vm405, %v1168, %v1169
    %v1171 = vrot.slane %v1120, 2
    %v1172 = vsel %vm405, %v1169, %v1171
    %v1173 = vrot.slane %v1121, 2
    %v1174 = vsel %vm405, %v1171, %v1173
    %v1175 = vrot.slane %v1122, 2
    %v1176 = vsel %vm405, %v1173, %v1175
    %v1177 = vrot.slane %v1123, 2
    %v1178 = vsel %vm405, %v1175, %v1177
    %v1179 = vrot.slane %v1124, 2
    %v1180 = vsel %vm405, %v1177, %v1179
    %v1181 = vrot.slane %v1125, 2
    %v1182 = vsel %vm405, %v1179, %v1181
    %v1183 = vrot.slane %v1126, 2
    %v1184 = vsel %vm405, %v1181, %v1183
    %v1185 = vrot.slane %v1127, 2
    %v1186 = vsel %vm405, %v1183, %v1185
    %v1187 = vrot.slane %v1128, 2
    %v1188 = vsel %vm405, %v1185, %v1187
    %v1189 = vrot.slane %v1129, 2
    %v1190 = vsel %vm405, %v1187, %v1189
    %v1191 = vrot.slane %v1130, 2
    %v1192 = vsel %vm405, %v1189, %v1191
    %v1193 = vrot.slane %v1131, 2
    %v1194 = vsel %vm405, %v1191, %v1193
    %v1195 = vrot.slane %v1132, 2
    %v1196 = vsel %vm405, %v1193, %v1195
    %v1197 = vrot.slane %v1133, 2
    %v1198 = vsel %vm405, %v1195, %v1197
    %v1199 = vrot.slane %v1134, 2
    %v1200 = vsel %vm405, %v1197, %v1199
    %v1201 = vrot.slane %v1135, 2
    %v1202 = vsel %vm405, %v1199, %v1201
    %v1203 = vrot.slane %v1136, 2
    %v1204 = vsel %vm405, %v1201, %v1203
    %v1205 = vrot.slane %v1137, 2
    %v1206 = vsel %vm405, %v1203, %v1205
    %v1207 = vrot.slane %v1138, 2
    %v1208 = vsel %vm405, %v1205, %v1207
    %v1209 = vrot.slane %v1139, 2
    %v1210 = vsel %vm405, %v1207, %v1209
    %v1211 = vrot.slane %v1140, 2
    %v1212 = vsel %vm405, %v1209, %v1211
    %v1213 = vrot.slane %v1141, 2
    %v1214 = vsel %vm405, %v1211, %v1213
    %v1215 = vrot.slane %v1142, 2
    %v1216 = vsel %vm405, %v1213, %v1215
    %v1242 = vadd.f32 %v1091, %v1170
    %v1243 = vadd.f32 %v1092, %v1172
    %v1244 = vadd.f32 %v1093, %v1174
    %v1245 = vadd.f32 %v1094, %v1176
    %v1246 = vadd.f32 %v1095, %v1178
    %v1247 = vadd.f32 %v1096, %v1180
    %v1248 = vadd.f32 %v1097, %v1182
    %v1249 = vadd.f32 %v1098, %v1184
    %v1250 = vadd.f32 %v1099, %v1186
    %v1251 = vadd.f32 %v1100, %v1188
    %v1252 = vadd.f32 %v1101, %v1190
    %v1253 = vadd.f32 %v1102, %v1192
    %v1254 = vadd.f32 %v1103, %v1194
    %v1255 = vadd.f32 %v1104, %v1196
    %v1256 = vadd.f32 %v1105, %v1198
    %v1257 = vadd.f32 %v1106, %v1200
    %v1258 = vadd.f32 %v1107, %v1202
    %v1259 = vadd.f32 %v1108, %v1204
    %v1260 = vadd.f32 %v1109, %v1206
    %v1261 = vadd.f32 %v1110, %v1208
    %v1262 = vadd.f32 %v1111, %v1210
    %v1263 = vadd.f32 %v1112, %v1212
    %v1264 = vadd.f32 %v1113, %v1214
    %v1265 = vadd.f32 %v1114, %v1216
    %v1266 = vadd.f32 %v1115, %v1215
    %s1267 = sld [smem:[#allocation5 + $0x2]]
    %v1268 = vstv %s1267
    %v1269 = vadd.f32 %v1242, %v1268
    %v1270 = vadd.f32 %v1243, %v1268
    %v1271 = vadd.f32 %v1244, %v1268
    %v1272 = vadd.f32 %v1245, %v1268
    %v1273 = vadd.f32 %v1246, %v1268
    %v1274 = vadd.f32 %v1247, %v1268
    %v1275 = vadd.f32 %v1248, %v1268
    %v1276 = vadd.f32 %v1249, %v1268
    %v1277 = vadd.f32 %v1250, %v1268
    %v1278 = vadd.f32 %v1251, %v1268
    %v1279 = vadd.f32 %v1252, %v1268
    %v1280 = vadd.f32 %v1253, %v1268
    %v1281 = vadd.f32 %v1254, %v1268
    %v1282 = vadd.f32 %v1255, %v1268
    %v1283 = vadd.f32 %v1256, %v1268
    %v1284 = vadd.f32 %v1257, %v1268
    %v1285 = vadd.f32 %v1258, %v1268
    %v1286 = vadd.f32 %v1259, %v1268
    %v1287 = vadd.f32 %v1260, %v1268
    %v1288 = vadd.f32 %v1261, %v1268
    %v1289 = vadd.f32 %v1262, %v1268
    %v1290 = vadd.f32 %v1263, %v1268
    %v1291 = vadd.f32 %v1264, %v1268
    %v1292 = vadd.f32 %v1265, %v1268
    %v1293 = vadd.f32 %v1266, %v1268
    %v1294 = vmax.f32 %v1269, 0.0
    %v1295 = vmax.f32 %v1270, 0.0
    %v1296 = vmax.f32 %v1271, 0.0
    %v1297 = vmax.f32 %v1272, 0.0
    %v1298 = vmax.f32 %v1273, 0.0
    %v1299 = vmax.f32 %v1274, 0.0
    %v1300 = vmax.f32 %v1275, 0.0
    %v1301 = vmax.f32 %v1276, 0.0
    %v1302 = vmax.f32 %v1277, 0.0
    %v1303 = vmax.f32 %v1278, 0.0
    %v1304 = vmax.f32 %v1279, 0.0
    %v1305 = vmax.f32 %v1280, 0.0
    %v1306 = vmax.f32 %v1281, 0.0
    %v1307 = vmax.f32 %v1282, 0.0
    %v1308 = vmax.f32 %v1283, 0.0
    %v1309 = vmax.f32 %v1284, 0.0
    %v1310 = vmax.f32 %v1285, 0.0
    %v1311 = vmax.f32 %v1286, 0.0
    %v1312 = vmax.f32 %v1287, 0.0
    %v1313 = vmax.f32 %v1288, 0.0
    %v1314 = vmax.f32 %v1289, 0.0
    %v1315 = vmax.f32 %v1290, 0.0
    %v1316 = vmax.f32 %v1291, 0.0
    %v1317 = vmax.f32 %v1292, 0.0
    %v1318 = vmax.f32 %v1293, 0.0
    %s1319 = sld [smem:[#allocation2 + $0x180]]
    %v1320 = vstv %s1319
    %v1321 = vmul.f32 %v1320, %v126
    %v1322 = vmul.f32 %v1320, %v127
    %v1323 = vmul.f32 %v1320, %v128
    %v1324 = vmul.f32 %v1320, %v129
    %v1325 = vmul.f32 %v1320, %v130
    %v1326 = vmul.f32 %v1320, %v131
    %v1327 = vmul.f32 %v1320, %v132
    %v1328 = vmul.f32 %v1320, %v133
    %v1329 = vmul.f32 %v1320, %v134
    %v1330 = vmul.f32 %v1320, %v135
    %v1331 = vmul.f32 %v1320, %v136
    %v1332 = vmul.f32 %v1320, %v137
    %v1333 = vmul.f32 %v1320, %v138
    %v1334 = vmul.f32 %v1320, %v139
    %v1335 = vmul.f32 %v1320, %v140
    %v1336 = vmul.f32 %v1320, %v141
    %v1337 = vmul.f32 %v1320, %v158
    %v1338 = vmul.f32 %v1320, %v159
    %v1339 = vmul.f32 %v1320, %v160
    %v1340 = vmul.f32 %v1320, %v161
    %v1341 = vmul.f32 %v1320, %v162
    %v1342 = vmul.f32 %v1320, %v163
    %v1343 = vmul.f32 %v1320, %v164
    %v1344 = vmul.f32 %v1320, %v165
    %v1345 = vmul.f32 %v1320, %v166
    %s1346 = sld [smem:[#allocation2 + $0x181]]
    %v1347 = vstv %s1346
    %v1348 = vmul.f32 %v1347, %v126
    %v1349 = vmul.f32 %v1347, %v127
    %v1350 = vmul.f32 %v1347, %v128
    %v1351 = vmul.f32 %v1347, %v129
    %v1352 = vmul.f32 %v1347, %v130
    %v1353 = vmul.f32 %v1347, %v131
    %v1354 = vmul.f32 %v1347, %v132
    %v1355 = vmul.f32 %v1347, %v133
    %v1356 = vmul.f32 %v1347, %v134
    %v1357 = vmul.f32 %v1347, %v135
    %v1358 = vmul.f32 %v1347, %v136
    %v1359 = vmul.f32 %v1347, %v137
    %v1360 = vmul.f32 %v1347, %v138
    %v1361 = vmul.f32 %v1347, %v139
    %v1362 = vmul.f32 %v1347, %v140
    %v1363 = vmul.f32 %v1347, %v141
    %v1364 = vmul.f32 %v1347, %v158
    %v1365 = vmul.f32 %v1347, %v159
    %v1366 = vmul.f32 %v1347, %v160
    %v1367 = vmul.f32 %v1347, %v161
    %v1368 = vmul.f32 %v1347, %v162
    %v1369 = vmul.f32 %v1347, %v163
    %v1370 = vmul.f32 %v1347, %v164
    %v1371 = vmul.f32 %v1347, %v165
    %v1372 = vmul.f32 %v1347, %v166
    %v1398 = vrot.slane %v1348, 1
    %v1399 = vrot.slane %v1349, 1
    %v1400 = vsel %vm253, %v1398, %v1399
    %v1401 = vrot.slane %v1350, 1
    %v1402 = vsel %vm253, %v1399, %v1401
    %v1403 = vrot.slane %v1351, 1
    %v1404 = vsel %vm253, %v1401, %v1403
    %v1405 = vrot.slane %v1352, 1
    %v1406 = vsel %vm253, %v1403, %v1405
    %v1407 = vrot.slane %v1353, 1
    %v1408 = vsel %vm253, %v1405, %v1407
    %v1409 = vrot.slane %v1354, 1
    %v1410 = vsel %vm253, %v1407, %v1409
    %v1411 = vrot.slane %v1355, 1
    %v1412 = vsel %vm253, %v1409, %v1411
    %v1413 = vrot.slane %v1356, 1
    %v1414 = vsel %vm253, %v1411, %v1413
    %v1415 = vrot.slane %v1357, 1
    %v1416 = vsel %vm253, %v1413, %v1415
    %v1417 = vrot.slane %v1358, 1
    %v1418 = vsel %vm253, %v1415, %v1417
    %v1419 = vrot.slane %v1359, 1
    %v1420 = vsel %vm253, %v1417, %v1419
    %v1421 = vrot.slane %v1360, 1
    %v1422 = vsel %vm253, %v1419, %v1421
    %v1423 = vrot.slane %v1361, 1
    %v1424 = vsel %vm253, %v1421, %v1423
    %v1425 = vrot.slane %v1362, 1
    %v1426 = vsel %vm253, %v1423, %v1425
    %v1427 = vrot.slane %v1363, 1
    %v1428 = vsel %vm253, %v1425, %v1427
    %v1429 = vrot.slane %v1364, 1
    %v1430 = vsel %vm253, %v1427, %v1429
    %v1431 = vrot.slane %v1365, 1
    %v1432 = vsel %vm253, %v1429, %v1431
    %v1433 = vrot.slane %v1366, 1
    %v1434 = vsel %vm253, %v1431, %v1433
    %v1435 = vrot.slane %v1367, 1
    %v1436 = vsel %vm253, %v1433, %v1435
    %v1437 = vrot.slane %v1368, 1
    %v1438 = vsel %vm253, %v1435, %v1437
    %v1439 = vrot.slane %v1369, 1
    %v1440 = vsel %vm253, %v1437, %v1439
    %v1441 = vrot.slane %v1370, 1
    %v1442 = vsel %vm253, %v1439, %v1441
    %v1443 = vrot.slane %v1371, 1
    %v1444 = vsel %vm253, %v1441, %v1443
    %v1445 = vrot.slane %v1372, 1
    %v1446 = vsel %vm253, %v1443, %v1445
    %v1472 = vadd.f32 %v1321, %v1400
    %v1473 = vadd.f32 %v1322, %v1402
    %v1474 = vadd.f32 %v1323, %v1404
    %v1475 = vadd.f32 %v1324, %v1406
    %v1476 = vadd.f32 %v1325, %v1408
    %v1477 = vadd.f32 %v1326, %v1410
    %v1478 = vadd.f32 %v1327, %v1412
    %v1479 = vadd.f32 %v1328, %v1414
    %v1480 = vadd.f32 %v1329, %v1416
    %v1481 = vadd.f32 %v1330, %v1418
    %v1482 = vadd.f32 %v1331, %v1420
    %v1483 = vadd.f32 %v1332, %v1422
    %v1484 = vadd.f32 %v1333, %v1424
    %v1485 = vadd.f32 %v1334, %v1426
    %v1486 = vadd.f32 %v1335, %v1428
    %v1487 = vadd.f32 %v1336, %v1430
    %v1488 = vadd.f32 %v1337, %v1432
    %v1489 = vadd.f32 %v1338, %v1434
    %v1490 = vadd.f32 %v1339, %v1436
    %v1491 = vadd.f32 %v1340, %v1438
    %v1492 = vadd.f32 %v1341, %v1440
    %v1493 = vadd.f32 %v1342, %v1442
    %v1494 = vadd.f32 %v1343, %v1444
    %v1495 = vadd.f32 %v1344, %v1446
    %v1496 = vadd.f32 %v1345, %v1445
    %s1497 = sld [smem:[#allocation2 + $0x182]]
    %v1498 = vstv %s1497
    %v1499 = vmul.f32 %v1498, %v126
    %v1500 = vmul.f32 %v1498, %v127
    %v1501 = vmul.f32 %v1498, %v128
    %v1502 = vmul.f32 %v1498, %v129
    %v1503 = vmul.f32 %v1498, %v130
    %v1504 = vmul.f32 %v1498, %v131
    %v1505 = vmul.f32 %v1498, %v132
    %v1506 = vmul.f32 %v1498, %v133
    %v1507 = vmul.f32 %v1498, %v134
    %v1508 = vmul.f32 %v1498, %v135
    %v1509 = vmul.f32 %v1498, %v136
    %v1510 = vmul.f32 %v1498, %v137
    %v1511 = vmul.f32 %v1498, %v138
    %v1512 = vmul.f32 %v1498, %v139
    %v1513 = vmul.f32 %v1498, %v140
    %v1514 = vmul.f32 %v1498, %v141
    %v1515 = vmul.f32 %v1498, %v158
    %v1516 = vmul.f32 %v1498, %v159
    %v1517 = vmul.f32 %v1498, %v160
    %v1518 = vmul.f32 %v1498, %v161
    %v1519 = vmul.f32 %v1498, %v162
    %v1520 = vmul.f32 %v1498, %v163
    %v1521 = vmul.f32 %v1498, %v164
    %v1522 = vmul.f32 %v1498, %v165
    %v1523 = vmul.f32 %v1498, %v166
    %v1549 = vrot.slane %v1499, 2
    %v1550 = vrot.slane %v1500, 2
    %v1551 = vsel %vm405, %v1549, %v1550
    %v1552 = vrot.slane %v1501, 2
    %v1553 = vsel %vm405, %v1550, %v1552
    %v1554 = vrot.slane %v1502, 2
    %v1555 = vsel %vm405, %v1552, %v1554
    %v1556 = vrot.slane %v1503, 2
    %v1557 = vsel %vm405, %v1554, %v1556
    %v1558 = vrot.slane %v1504, 2
    %v1559 = vsel %vm405, %v1556, %v1558
    %v1560 = vrot.slane %v1505, 2
    %v1561 = vsel %vm405, %v1558, %v1560
    %v1562 = vrot.slane %v1506, 2
    %v1563 = vsel %vm405, %v1560, %v1562
    %v1564 = vrot.slane %v1507, 2
    %v1565 = vsel %vm405, %v1562, %v1564
    %v1566 = vrot.slane %v1508, 2
    %v1567 = vsel %vm405, %v1564, %v1566
    %v1568 = vrot.slane %v1509, 2
    %v1569 = vsel %vm405, %v1566, %v1568
    %v1570 = vrot.slane %v1510, 2
    %v1571 = vsel %vm405, %v1568, %v1570
    %v1572 = vrot.slane %v1511, 2
    %v1573 = vsel %vm405, %v1570, %v1572
    %v1574 = vrot.slane %v1512, 2
    %v1575 = vsel %vm405, %v1572, %v1574
    %v1576 = vrot.slane %v1513, 2
    %v1577 = vsel %vm405, %v1574, %v1576
    %v1578 = vrot.slane %v1514, 2
    %v1579 = vsel %vm405, %v1576, %v1578
    %v1580 = vrot.slane %v1515, 2
    %v1581 = vsel %vm405, %v1578, %v1580
    %v1582 = vrot.slane %v1516, 2
    %v1583 = vsel %vm405, %v1580, %v1582
    %v1584 = vrot.slane %v1517, 2
    %v1585 = vsel %vm405, %v1582, %v1584
    %v1586 = vrot.slane %v1518, 2
    %v1587 = vsel %vm405, %v1584, %v1586
    %v1588 = vrot.slane %v1519, 2
    %v1589 = vsel %vm405, %v1586, %v1588
    %v1590 = vrot.slane %v1520, 2
    %v1591 = vsel %vm405, %v1588, %v1590
    %v1592 = vrot.slane %v1521, 2
    %v1593 = vsel %vm405, %v1590, %v1592
    %v1594 = vrot.slane %v1522, 2
    %v1595 = vsel %vm405, %v1592, %v1594
    %v1596 = vrot.slane %v1523, 2
    %v1597 = vsel %vm405, %v1594, %v1596
    %v1623 = vadd.f32 %v1472, %v1551
    %v1624 = vadd.f32 %v1473, %v1553
    %v1625 = vadd.f32 %v1474, %v1555
    %v1626 = vadd.f32 %v1475, %v1557
    %v1627 = vadd.f32 %v1476, %v1559
    %v1628 = vadd.f32 %v1477, %v1561
    %v1629 = vadd.f32 %v1478, %v1563
    %v1630 = vadd.f32 %v1479, %v1565
    %v1631 = vadd.f32 %v1480, %v1567
    %v1632 = vadd.f32 %v1481, %v1569
    %v1633 = vadd.f32 %v1482, %v1571
    %v1634 = vadd.f32 %v1483, %v1573
    %v1635 = vadd.f32 %v1484, %v1575
    %v1636 = vadd.f32 %v1485, %v1577
    %v1637 = vadd.f32 %v1486, %v1579
    %v1638 = vadd.f32 %v1487, %v1581
    %v1639 = vadd.f32 %v1488, %v1583
    %v1640 = vadd.f32 %v1489, %v1585
    %v1641 = vadd.f32 %v1490, %v1587
    %v1642 = vadd.f32 %v1491, %v1589
    %v1643 = vadd.f32 %v1492, %v1591
    %v1644 = vadd.f32 %v1493, %v1593
    %v1645 = vadd.f32 %v1494, %v1595
    %v1646 = vadd.f32 %v1495, %v1597
    %v1647 = vadd.f32 %v1496, %v1596
    %s1648 = sld [smem:[#allocation5 + $0x3]]
    %v1649 = vstv %s1648
    %v1650 = vadd.f32 %v1623, %v1649
    %v1651 = vadd.f32 %v1624, %v1649
    %v1652 = vadd.f32 %v1625, %v1649
    %v1653 = vadd.f32 %v1626, %v1649
    %v1654 = vadd.f32 %v1627, %v1649
    %v1655 = vadd.f32 %v1628, %v1649
    %v1656 = vadd.f32 %v1629, %v1649
    %v1657 = vadd.f32 %v1630, %v1649
    %v1658 = vadd.f32 %v1631, %v1649
    %v1659 = vadd.f32 %v1632, %v1649
    %v1660 = vadd.f32 %v1633, %v1649
    %v1661 = vadd.f32 %v1634, %v1649
    %v1662 = vadd.f32 %v1635, %v1649
    %v1663 = vadd.f32 %v1636, %v1649
    %v1664 = vadd.f32 %v1637, %v1649
    %v1665 = vadd.f32 %v1638, %v1649
    %v1666 = vadd.f32 %v1639, %v1649
    %v1667 = vadd.f32 %v1640, %v1649
    %v1668 = vadd.f32 %v1641, %v1649
    %v1669 = vadd.f32 %v1642, %v1649
    %v1670 = vadd.f32 %v1643, %v1649
    %v1671 = vadd.f32 %v1644, %v1649
    %v1672 = vadd.f32 %v1645, %v1649
    %v1673 = vadd.f32 %v1646, %v1649
    %v1674 = vadd.f32 %v1647, %v1649
    %v1675 = vmax.f32 %v1650, 0.0
    %v1676 = vmax.f32 %v1651, 0.0
    %v1677 = vmax.f32 %v1652, 0.0
    %v1678 = vmax.f32 %v1653, 0.0
    %v1679 = vmax.f32 %v1654, 0.0
    %v1680 = vmax.f32 %v1655, 0.0
    %v1681 = vmax.f32 %v1656, 0.0
    %v1682 = vmax.f32 %v1657, 0.0
    %v1683 = vmax.f32 %v1658, 0.0
    %v1684 = vmax.f32 %v1659, 0.0
    %v1685 = vmax.f32 %v1660, 0.0
    %v1686 = vmax.f32 %v1661, 0.0
    %v1687 = vmax.f32 %v1662, 0.0
    %v1688 = vmax.f32 %v1663, 0.0
    %v1689 = vmax.f32 %v1664, 0.0
    %v1690 = vmax.f32 %v1665, 0.0
    %v1691 = vmax.f32 %v1666, 0.0
    %v1692 = vmax.f32 %v1667, 0.0
    %v1693 = vmax.f32 %v1668, 0.0
    %v1694 = vmax.f32 %v1669, 0.0
    %v1695 = vmax.f32 %v1670, 0.0
    %v1696 = vmax.f32 %v1671, 0.0
    %v1697 = vmax.f32 %v1672, 0.0
    %v1698 = vmax.f32 %v1673, 0.0
    %v1699 = vmax.f32 %v1674, 0.0
    %s1700 = sld [smem:[#allocation7]]
    %v1701 = vstv %s1700
    %v1702 = vmul.f32 %v1701, %v532
    %v1703 = vmul.f32 %v1701, %v533
    %v1704 = vmul.f32 %v1701, %v534
    %v1705 = vmul.f32 %v1701, %v535
    %v1706 = vmul.f32 %v1701, %v536
    %v1707 = vmul.f32 %v1701, %v537
    %v1708 = vmul.f32 %v1701, %v538
    %v1709 = vmul.f32 %v1701, %v539
    %v1710 = vmul.f32 %v1701, %v540
    %v1711 = vmul.f32 %v1701, %v541
    %v1712 = vmul.f32 %v1701, %v542
    %v1713 = vmul.f32 %v1701, %v543
    %v1714 = vmul.f32 %v1701, %v544
    %v1715 = vmul.f32 %v1701, %v545
    %v1716 = vmul.f32 %v1701, %v546
    %v1717 = vmul.f32 %v1701, %v547
    %v1718 = vmul.f32 %v1701, %v548
    %v1719 = vmul.f32 %v1701, %v549
    %v1720 = vmul.f32 %v1701, %v550
    %v1721 = vmul.f32 %v1701, %v551
    %v1722 = vmul.f32 %v1701, %v552
    %v1723 = vmul.f32 %v1701, %v553
    %v1724 = vmul.f32 %v1701, %v554
    %v1725 = vmul.f32 %v1701, %v555
    %v1726 = vmul.f32 %v1701, %v556
    %s1727 = sld [smem:[#allocation7 + $0x1]]
    %v1728 = vstv %s1727
    %v1729 = vmul.f32 %v1728, %v532
    %v1730 = vmul.f32 %v1728, %v533
    %v1731 = vmul.f32 %v1728, %v534
    %v1732 = vmul.f32 %v1728, %v535
    %v1733 = vmul.f32 %v1728, %v536
    %v1734 = vmul.f32 %v1728, %v537
    %v1735 = vmul.f32 %v1728, %v538
    %v1736 = vmul.f32 %v1728, %v539
    %v1737 = vmul.f32 %v1728, %v540
    %v1738 = vmul.f32 %v1728, %v541
    %v1739 = vmul.f32 %v1728, %v542
    %v1740 = vmul.f32 %v1728, %v543
    %v1741 = vmul.f32 %v1728, %v544
    %v1742 = vmul.f32 %v1728, %v545
    %v1743 = vmul.f32 %v1728, %v546
    %v1744 = vmul.f32 %v1728, %v547
    %v1745 = vmul.f32 %v1728, %v548
    %v1746 = vmul.f32 %v1728, %v549
    %v1747 = vmul.f32 %v1728, %v550
    %v1748 = vmul.f32 %v1728, %v551
    %v1749 = vmul.f32 %v1728, %v552
    %v1750 = vmul.f32 %v1728, %v553
    %v1751 = vmul.f32 %v1728, %v554
    %v1752 = vmul.f32 %v1728, %v555
    %v1753 = vmul.f32 %v1728, %v556
    %v1779 = vrot.slane %v1729, 1
    %v1780 = vrot.slane %v1730, 1
    %v1781 = vsel %vm253, %v1779, %v1780
    %v1782 = vrot.slane %v1731, 1
    %v1783 = vsel %vm253, %v1780, %v1782
    %v1784 = vrot.slane %v1732, 1
    %v1785 = vsel %vm253, %v1782, %v1784
    %v1786 = vrot.slane %v1733, 1
    %v1787 = vsel %vm253, %v1784, %v1786
    %v1788 = vrot.slane %v1734, 1
    %v1789 = vsel %vm253, %v1786, %v1788
    %v1790 = vrot.slane %v1735, 1
    %v1791 = vsel %vm253, %v1788, %v1790
    %v1792 = vrot.slane %v1736, 1
    %v1793 = vsel %vm253, %v1790, %v1792
    %v1794 = vrot.slane %v1737, 1
    %v1795 = vsel %vm253, %v1792, %v1794
    %v1796 = vrot.slane %v1738, 1
    %v1797 = vsel %vm253, %v1794, %v1796
    %v1798 = vrot.slane %v1739, 1
    %v1799 = vsel %vm253, %v1796, %v1798
    %v1800 = vrot.slane %v1740, 1
    %v1801 = vsel %vm253, %v1798, %v1800
    %v1802 = vrot.slane %v1741, 1
    %v1803 = vsel %vm253, %v1800, %v1802
    %v1804 = vrot.slane %v1742, 1
    %v1805 = vsel %vm253, %v1802, %v1804
    %v1806 = vrot.slane %v1743, 1
    %v1807 = vsel %vm253, %v1804, %v1806
    %v1808 = vrot.slane %v1744, 1
    %v1809 = vsel %vm253, %v1806, %v1808
    %v1810 = vrot.slane %v1745, 1
    %v1811 = vsel %vm253, %v1808, %v1810
    %v1812 = vrot.slane %v1746, 1
    %v1813 = vsel %vm253, %v1810, %v1812
    %v1814 = vrot.slane %v1747, 1
    %v1815 = vsel %vm253, %v1812, %v1814
    %v1816 = vrot.slane %v1748, 1
    %v1817 = vsel %vm253, %v1814, %v1816
    %v1818 = vrot.slane %v1749, 1
    %v1819 = vsel %vm253, %v1816, %v1818
    %v1820 = vrot.slane %v1750, 1
    %v1821 = vsel %vm253, %v1818, %v1820
    %v1822 = vrot.slane %v1751, 1
    %v1823 = vsel %vm253, %v1820, %v1822
    %v1824 = vrot.slane %v1752, 1
    %v1825 = vsel %vm253, %v1822, %v1824
    %v1826 = vrot.slane %v1753, 1
    %v1827 = vsel %vm253, %v1824, %v1826
    %v1853 = vadd.f32 %v1702, %v1781
    %v1854 = vadd.f32 %v1703, %v1783
    %v1855 = vadd.f32 %v1704, %v1785
    %v1856 = vadd.f32 %v1705, %v1787
    %v1857 = vadd.f32 %v1706, %v1789
    %v1858 = vadd.f32 %v1707, %v1791
    %v1859 = vadd.f32 %v1708, %v1793
    %v1860 = vadd.f32 %v1709, %v1795
    %v1861 = vadd.f32 %v1710, %v1797
    %v1862 = vadd.f32 %v1711, %v1799
    %v1863 = vadd.f32 %v1712, %v1801
    %v1864 = vadd.f32 %v1713, %v1803
    %v1865 = vadd.f32 %v1714, %v1805
    %v1866 = vadd.f32 %v1715, %v1807
    %v1867 = vadd.f32 %v1716, %v1809
    %v1868 = vadd.f32 %v1717, %v1811
    %v1869 = vadd.f32 %v1718, %v1813
    %v1870 = vadd.f32 %v1719, %v1815
    %v1871 = vadd.f32 %v1720, %v1817
    %v1872 = vadd.f32 %v1721, %v1819
    %v1873 = vadd.f32 %v1722, %v1821
    %v1874 = vadd.f32 %v1723, %v1823
    %v1875 = vadd.f32 %v1724, %v1825
    %v1876 = vadd.f32 %v1725, %v1827
    %v1877 = vadd.f32 %v1726, %v1826
    %s1878 = sld [smem:[#allocation7 + $0x2]]
    %v1879 = vstv %s1878
    %v1880 = vmul.f32 %v1879, %v532
    %v1881 = vmul.f32 %v1879, %v533
    %v1882 = vmul.f32 %v1879, %v534
    %v1883 = vmul.f32 %v1879, %v535
    %v1884 = vmul.f32 %v1879, %v536
    %v1885 = vmul.f32 %v1879, %v537
    %v1886 = vmul.f32 %v1879, %v538
    %v1887 = vmul.f32 %v1879, %v539
    %v1888 = vmul.f32 %v1879, %v540
    %v1889 = vmul.f32 %v1879, %v541
    %v1890 = vmul.f32 %v1879, %v542
    %v1891 = vmul.f32 %v1879, %v543
    %v1892 = vmul.f32 %v1879, %v544
    %v1893 = vmul.f32 %v1879, %v545
    %v1894 = vmul.f32 %v1879, %v546
    %v1895 = vmul.f32 %v1879, %v547
    %v1896 = vmul.f32 %v1879, %v548
    %v1897 = vmul.f32 %v1879, %v549
    %v1898 = vmul.f32 %v1879, %v550
    %v1899 = vmul.f32 %v1879, %v551
    %v1900 = vmul.f32 %v1879, %v552
    %v1901 = vmul.f32 %v1879, %v553
    %v1902 = vmul.f32 %v1879, %v554
    %v1903 = vmul.f32 %v1879, %v555
    %v1904 = vmul.f32 %v1879, %v556
    %v1930 = vrot.slane %v1880, 2
    %v1931 = vrot.slane %v1881, 2
    %v1932 = vsel %vm405, %v1930, %v1931
    %v1933 = vrot.slane %v1882, 2
    %v1934 = vsel %vm405, %v1931, %v1933
    %v1935 = vrot.slane %v1883, 2
    %v1936 = vsel %vm405, %v1933, %v1935
    %v1937 = vrot.slane %v1884, 2
    %v1938 = vsel %vm405, %v1935, %v1937
    %v1939 = vrot.slane %v1885, 2
    %v1940 = vsel %vm405, %v1937, %v1939
    %v1941 = vrot.slane %v1886, 2
    %v1942 = vsel %vm405, %v1939, %v1941
    %v1943 = vrot.slane %v1887, 2
    %v1944 = vsel %vm405, %v1941, %v1943
    %v1945 = vrot.slane %v1888, 2
    %v1946 = vsel %vm405, %v1943, %v1945
    %v1947 = vrot.slane %v1889, 2
    %v1948 = vsel %vm405, %v1945, %v1947
    %v1949 = vrot.slane %v1890, 2
    %v1950 = vsel %vm405, %v1947, %v1949
    %v1951 = vrot.slane %v1891, 2
    %v1952 = vsel %vm405, %v1949, %v1951
    %v1953 = vrot.slane %v1892, 2
    %v1954 = vsel %vm405, %v1951, %v1953
    %v1955 = vrot.slane %v1893, 2
    %v1956 = vsel %vm405, %v1953, %v1955
    %v1957 = vrot.slane %v1894, 2
    %v1958 = vsel %vm405, %v1955, %v1957
    %v1959 = vrot.slane %v1895, 2
    %v1960 = vsel %vm405, %v1957, %v1959
    %v1961 = vrot.slane %v1896, 2
    %v1962 = vsel %vm405, %v1959, %v1961
    %v1963 = vrot.slane %v1897, 2
    %v1964 = vsel %vm405, %v1961, %v1963
    %v1965 = vrot.slane %v1898, 2
    %v1966 = vsel %vm405, %v1963, %v1965
    %v1967 = vrot.slane %v1899, 2
    %v1968 = vsel %vm405, %v1965, %v1967
    %v1969 = vrot.slane %v1900, 2
    %v1970 = vsel %vm405, %v1967, %v1969
    %v1971 = vrot.slane %v1901, 2
    %v1972 = vsel %vm405, %v1969, %v1971
    %v1973 = vrot.slane %v1902, 2
    %v1974 = vsel %vm405, %v1971, %v1973
    %v1975 = vrot.slane %v1903, 2
    %v1976 = vsel %vm405, %v1973, %v1975
    %v1977 = vrot.slane %v1904, 2
    %v1978 = vsel %vm405, %v1975, %v1977
    %v2004 = vadd.f32 %v1853, %v1932
    %v2005 = vadd.f32 %v1854, %v1934
    %v2006 = vadd.f32 %v1855, %v1936
    %v2007 = vadd.f32 %v1856, %v1938
    %v2008 = vadd.f32 %v1857, %v1940
    %v2009 = vadd.f32 %v1858, %v1942
    %v2010 = vadd.f32 %v1859, %v1944
    %v2011 = vadd.f32 %v1860, %v1946
    %v2012 = vadd.f32 %v1861, %v1948
    %v2013 = vadd.f32 %v1862, %v1950
    %v2014 = vadd.f32 %v1863, %v1952
    %v2015 = vadd.f32 %v1864, %v1954
    %v2016 = vadd.f32 %v1865, %v1956
    %v2017 = vadd.f32 %v1866, %v1958
    %v2018 = vadd.f32 %v1867, %v1960
    %v2019 = vadd.f32 %v1868, %v1962
    %v2020 = vadd.f32 %v1869, %v1964
    %v2021 = vadd.f32 %v1870, %v1966
    %v2022 = vadd.f32 %v1871, %v1968
    %v2023 = vadd.f32 %v1872, %v1970
    %v2024 = vadd.f32 %v1873, %v1972
    %v2025 = vadd.f32 %v1874, %v1974
    %v2026 = vadd.f32 %v1875, %v1976
    %v2027 = vadd.f32 %v1876, %v1978
    %v2028 = vadd.f32 %v1877, %v1977
    %s2029 = sld [smem:[#allocation7 + $0x80]]
    %v2030 = vstv %s2029
    %v2031 = vmul.f32 %v2030, %v913
    %v2032 = vmul.f32 %v2030, %v914
    %v2033 = vmul.f32 %v2030, %v915
    %v2034 = vmul.f32 %v2030, %v916
    %v2035 = vmul.f32 %v2030, %v917
    %v2036 = vmul.f32 %v2030, %v918
    %v2037 = vmul.f32 %v2030, %v919
    %v2038 = vmul.f32 %v2030, %v920
    %v2039 = vmul.f32 %v2030, %v921
    %v2040 = vmul.f32 %v2030, %v922
    %v2041 = vmul.f32 %v2030, %v923
    %v2042 = vmul.f32 %v2030, %v924
    %v2043 = vmul.f32 %v2030, %v925
    %v2044 = vmul.f32 %v2030, %v926
    %v2045 = vmul.f32 %v2030, %v927
    %v2046 = vmul.f32 %v2030, %v928
    %v2047 = vmul.f32 %v2030, %v929
    %v2048 = vmul.f32 %v2030, %v930
    %v2049 = vmul.f32 %v2030, %v931
    %v2050 = vmul.f32 %v2030, %v932
    %v2051 = vmul.f32 %v2030, %v933
    %v2052 = vmul.f32 %v2030, %v934
    %v2053 = vmul.f32 %v2030, %v935
    %v2054 = vmul.f32 %v2030, %v936
    %v2055 = vmul.f32 %v2030, %v937
    %v2056 = vadd.f32 %v2004, %v2031
    %v2057 = vadd.f32 %v2005, %v2032
    %v2058 = vadd.f32 %v2006, %v2033
    %v2059 = vadd.f32 %v2007, %v2034
    %v2060 = vadd.f32 %v2008, %v2035
    %v2061 = vadd.f32 %v2009, %v2036
    %v2062 = vadd.f32 %v2010, %v2037
    %v2063 = vadd.f32 %v2011, %v2038
    %v2064 = vadd.f32 %v2012, %v2039
    %v2065 = vadd.f32 %v2013, %v2040
    %v2066 = vadd.f32 %v2014, %v2041
    %v2067 = vadd.f32 %v2015, %v2042
    %v2068 = vadd.f32 %v2016, %v2043
    %v2069 = vadd.f32 %v2017, %v2044
    %v2070 = vadd.f32 %v2018, %v2045
    %v2071 = vadd.f32 %v2019, %v2046
    %v2072 = vadd.f32 %v2020, %v2047
    %v2073 = vadd.f32 %v2021, %v2048
    %v2074 = vadd.f32 %v2022, %v2049
    %v2075 = vadd.f32 %v2023, %v2050
    %v2076 = vadd.f32 %v2024, %v2051
    %v2077 = vadd.f32 %v2025, %v2052
    %v2078 = vadd.f32 %v2026, %v2053
    %v2079 = vadd.f32 %v2027, %v2054
    %v2080 = vadd.f32 %v2028, %v2055
    %s2081 = sld [smem:[#allocation7 + $0x81]]
    %v2082 = vstv %s2081
    %v2083 = vmul.f32 %v2082, %v913
    %v2084 = vmul.f32 %v2082, %v914
    %v2085 = vmul.f32 %v2082, %v915
    %v2086 = vmul.f32 %v2082, %v916
    %v2087 = vmul.f32 %v2082, %v917
    %v2088 = vmul.f32 %v2082, %v918
    %v2089 = vmul.f32 %v2082, %v919
    %v2090 = vmul.f32 %v2082, %v920
    %v2091 = vmul.f32 %v2082, %v921
    %v2092 = vmul.f32 %v2082, %v922
    %v2093 = vmul.f32 %v2082, %v923
    %v2094 = vmul.f32 %v2082, %v924
    %v2095 = vmul.f32 %v2082, %v925
    %v2096 = vmul.f32 %v2082, %v926
    %v2097 = vmul.f32 %v2082, %v927
    %v2098 = vmul.f32 %v2082, %v928
    %v2099 = vmul.f32 %v2082, %v929
    %v2100 = vmul.f32 %v2082, %v930
    %v2101 = vmul.f32 %v2082, %v931
    %v2102 = vmul.f32 %v2082, %v932
    %v2103 = vmul.f32 %v2082, %v933
    %v2104 = vmul.f32 %v2082, %v934
    %v2105 = vmul.f32 %v2082, %v935
    %v2106 = vmul.f32 %v2082, %v936
    %v2107 = vmul.f32 %v2082, %v937
    %v2133 = vrot.slane %v2083, 1
    %v2134 = vrot.slane %v2084, 1
    %v2135 = vsel %vm253, %v2133, %v2134
    %v2136 = vrot.slane %v2085, 1
    %v2137 = vsel %vm253, %v2134, %v2136
    %v2138 = vrot.slane %v2086, 1
    %v2139 = vsel %vm253, %v2136, %v2138
    %v2140 = vrot.slane %v2087, 1
    %v2141 = vsel %vm253, %v2138, %v2140
    %v2142 = vrot.slane %v2088, 1
    %v2143 = vsel %vm253, %v2140, %v2142
    %v2144 = vrot.slane %v2089, 1
    %v2145 = vsel %vm253, %v2142, %v2144
    %v2146 = vrot.slane %v2090, 1
    %v2147 = vsel %vm253, %v2144, %v2146
    %v2148 = vrot.slane %v2091, 1
    %v2149 = vsel %vm253, %v2146, %v2148
    %v2150 = vrot.slane %v2092, 1
    %v2151 = vsel %vm253, %v2148, %v2150
    %v2152 = vrot.slane %v2093, 1
    %v2153 = vsel %vm253, %v2150, %v2152
    %v2154 = vrot.slane %v2094, 1
    %v2155 = vsel %vm253, %v2152, %v2154
    %v2156 = vrot.slane %v2095, 1
    %v2157 = vsel %vm253, %v2154, %v2156
    %v2158 = vrot.slane %v2096, 1
    %v2159 = vsel %vm253, %v2156, %v2158
    %v2160 = vrot.slane %v2097, 1
    %v2161 = vsel %vm253, %v2158, %v2160
    %v2162 = vrot.slane %v2098, 1
    %v2163 = vsel %vm253, %v2160, %v2162
    %v2164 = vrot.slane %v2099, 1
    %v2165 = vsel %vm253, %v2162, %v2164
    %v2166 = vrot.slane %v2100, 1
    %v2167 = vsel %vm253, %v2164, %v2166
    %v2168 = vrot.slane %v2101, 1
    %v2169 = vsel %vm253, %v2166, %v2168
    %v2170 = vrot.slane %v2102, 1
    %v2171 = vsel %vm253, %v2168, %v2170
    %v2172 = vrot.slane %v2103, 1
    %v2173 = vsel %vm253, %v2170, %v2172
    %v2174 = vrot.slane %v2104, 1
    %v2175 = vsel %vm253, %v2172, %v2174
    %v2176 = vrot.slane %v2105, 1
    %v2177 = vsel %vm253, %v2174, %v2176
    %v2178 = vrot.slane %v2106, 1
    %v2179 = vsel %vm253, %v2176, %v2178
    %v2180 = vrot.slane %v2107, 1
    %v2181 = vsel %vm253, %v2178, %v2180
    %v2207 = vadd.f32 %v2056, %v2135
    %v2208 = vadd.f32 %v2057, %v2137
    %v2209 = vadd.f32 %v2058, %v2139
    %v2210 = vadd.f32 %v2059, %v2141
    %v2211 = vadd.f32 %v2060, %v2143
    %v2212 = vadd.f32 %v2061, %v2145
    %v2213 = vadd.f32 %v2062, %v2147
    %v2214 = vadd.f32 %v2063, %v2149
    %v2215 = vadd.f32 %v2064, %v2151
    %v2216 = vadd.f32 %v2065, %v2153
    %v2217 = vadd.f32 %v2066, %v2155
    %v2218 = vadd.f32 %v2067, %v2157
    %v2219 = vadd.f32 %v2068, %v2159
    %v2220 = vadd.f32 %v2069, %v2161
    %v2221 = vadd.f32 %v2070, %v2163
    %v2222 = vadd.f32 %v2071, %v2165
    %v2223 = vadd.f32 %v2072, %v2167
    %v2224 = vadd.f32 %v2073, %v2169
    %v2225 = vadd.f32 %v2074, %v2171
    %v2226 = vadd.f32 %v2075, %v2173
    %v2227 = vadd.f32 %v2076, %v2175
    %v2228 = vadd.f32 %v2077, %v2177
    %v2229 = vadd.f32 %v2078, %v2179
    %v2230 = vadd.f32 %v2079, %v2181
    %v2231 = vadd.f32 %v2080, %v2180
    %s2232 = sld [smem:[#allocation7 + $0x82]]
    %v2233 = vstv %s2232
    %v2234 = vmul.f32 %v2233, %v913
    %v2235 = vmul.f32 %v2233, %v914
    %v2236 = vmul.f32 %v2233, %v915
    %v2237 = vmul.f32 %v2233, %v916
    %v2238 = vmul.f32 %v2233, %v917
    %v2239 = vmul.f32 %v2233, %v918
    %v2240 = vmul.f32 %v2233, %v919
    %v2241 = vmul.f32 %v2233, %v920
    %v2242 = vmul.f32 %v2233, %v921
    %v2243 = vmul.f32 %v2233, %v922
    %v2244 = vmul.f32 %v2233, %v923
    %v2245 = vmul.f32 %v2233, %v924
    %v2246 = vmul.f32 %v2233, %v925
    %v2247 = vmul.f32 %v2233, %v926
    %v2248 = vmul.f32 %v2233, %v927
    %v2249 = vmul.f32 %v2233, %v928
    %v2250 = vmul.f32 %v2233, %v929
    %v2251 = vmul.f32 %v2233, %v930
    %v2252 = vmul.f32 %v2233, %v931
    %v2253 = vmul.f32 %v2233, %v932
    %v2254 = vmul.f32 %v2233, %v933
    %v2255 = vmul.f32 %v2233, %v934
    %v2256 = vmul.f32 %v2233, %v935
    %v2257 = vmul.f32 %v2233, %v936
    %v2258 = vmul.f32 %v2233, %v937
    %v2284 = vrot.slane %v2234, 2
    %v2285 = vrot.slane %v2235, 2
    %v2286 = vsel %vm405, %v2284, %v2285
    %v2287 = vrot.slane %v2236, 2
    %v2288 = vsel %vm405, %v2285, %v2287
    %v2289 = vrot.slane %v2237, 2
    %v2290 = vsel %vm405, %v2287, %v2289
    %v2291 = vrot.slane %v2238, 2
    %v2292 = vsel %vm405, %v2289, %v2291
    %v2293 = vrot.slane %v2239, 2
    %v2294 = vsel %vm405, %v2291, %v2293
    %v2295 = vrot.slane %v2240, 2
    %v2296 = vsel %vm405, %v2293, %v2295
    %v2297 = vrot.slane %v2241, 2
    %v2298 = vsel %vm405, %v2295, %v2297
    %v2299 = vrot.slane %v2242, 2
    %v2300 = vsel %vm405, %v2297, %v2299
    %v2301 = vrot.slane %v2243, 2
    %v2302 = vsel %vm405, %v2299, %v2301
    %v2303 = vrot.slane %v2244, 2
    %v2304 = vsel %vm405, %v2301, %v2303
    %v2305 = vrot.slane %v2245, 2
    %v2306 = vsel %vm405, %v2303, %v2305
    %v2307 = vrot.slane %v2246, 2
    %v2308 = vsel %vm405, %v2305, %v2307
    %v2309 = vrot.slane %v2247, 2
    %v2310 = vsel %vm405, %v2307, %v2309
    %v2311 = vrot.slane %v2248, 2
    %v2312 = vsel %vm405, %v2309, %v2311
    %v2313 = vrot.slane %v2249, 2
    %v2314 = vsel %vm405, %v2311, %v2313
    %v2315 = vrot.slane %v2250, 2
    %v2316 = vsel %vm405, %v2313, %v2315
    %v2317 = vrot.slane %v2251, 2
    %v2318 = vsel %vm405, %v2315, %v2317
    %v2319 = vrot.slane %v2252, 2
    %v2320 = vsel %vm405, %v2317, %v2319
    %v2321 = vrot.slane %v2253, 2
    %v2322 = vsel %vm405, %v2319, %v2321
    %v2323 = vrot.slane %v2254, 2
    %v2324 = vsel %vm405, %v2321, %v2323
    %v2325 = vrot.slane %v2255, 2
    %v2326 = vsel %vm405, %v2323, %v2325
    %v2327 = vrot.slane %v2256, 2
    %v2328 = vsel %vm405, %v2325, %v2327
    %v2329 = vrot.slane %v2257, 2
    %v2330 = vsel %vm405, %v2327, %v2329
    %v2331 = vrot.slane %v2258, 2
    %v2332 = vsel %vm405, %v2329, %v2331
    %v2358 = vadd.f32 %v2207, %v2286
    %v2359 = vadd.f32 %v2208, %v2288
    %v2360 = vadd.f32 %v2209, %v2290
    %v2361 = vadd.f32 %v2210, %v2292
    %v2362 = vadd.f32 %v2211, %v2294
    %v2363 = vadd.f32 %v2212, %v2296
    %v2364 = vadd.f32 %v2213, %v2298
    %v2365 = vadd.f32 %v2214, %v2300
    %v2366 = vadd.f32 %v2215, %v2302
    %v2367 = vadd.f32 %v2216, %v2304
    %v2368 = vadd.f32 %v2217, %v2306
    %v2369 = vadd.f32 %v2218, %v2308
    %v2370 = vadd.f32 %v2219, %v2310
    %v2371 = vadd.f32 %v2220, %v2312
    %v2372 = vadd.f32 %v2221, %v2314
    %v2373 = vadd.f32 %v2222, %v2316
    %v2374 = vadd.f32 %v2223, %v2318
    %v2375 = vadd.f32 %v2224, %v2320
    %v2376 = vadd.f32 %v2225, %v2322
    %v2377 = vadd.f32 %v2226, %v2324
    %v2378 = vadd.f32 %v2227, %v2326
    %v2379 = vadd.f32 %v2228, %v2328
    %v2380 = vadd.f32 %v2229, %v2330
    %v2381 = vadd.f32 %v2230, %v2332
    %v2382 = vadd.f32 %v2231, %v2331
    %s2383 = sld [smem:[#allocation7 + $0x100]]
    %v2384 = vstv %s2383
    %v2385 = vmul.f32 %v2384, %v1294
    %v2386 = vmul.f32 %v2384, %v1295
    %v2387 = vmul.f32 %v2384, %v1296
    %v2388 = vmul.f32 %v2384, %v1297
    %v2389 = vmul.f32 %v2384, %v1298
    %v2390 = vmul.f32 %v2384, %v1299
    %v2391 = vmul.f32 %v2384, %v1300
    %v2392 = vmul.f32 %v2384, %v1301
    %v2393 = vmul.f32 %v2384, %v1302
    %v2394 = vmul.f32 %v2384, %v1303
    %v2395 = vmul.f32 %v2384, %v1304
    %v2396 = vmul.f32 %v2384, %v1305
    %v2397 = vmul.f32 %v2384, %v1306
    %v2398 = vmul.f32 %v2384, %v1307
    %v2399 = vmul.f32 %v2384, %v1308
    %v2400 = vmul.f32 %v2384, %v1309
    %v2401 = vmul.f32 %v2384, %v1310
    %v2402 = vmul.f32 %v2384, %v1311
    %v2403 = vmul.f32 %v2384, %v1312
    %v2404 = vmul.f32 %v2384, %v1313
    %v2405 = vmul.f32 %v2384, %v1314
    %v2406 = vmul.f32 %v2384, %v1315
    %v2407 = vmul.f32 %v2384, %v1316
    %v2408 = vmul.f32 %v2384, %v1317
    %v2409 = vmul.f32 %v2384, %v1318
    %v2410 = vadd.f32 %v2358, %v2385
    %v2411 = vadd.f32 %v2359, %v2386
    %v2412 = vadd.f32 %v2360, %v2387
    %v2413 = vadd.f32 %v2361, %v2388
    %v2414 = vadd.f32 %v2362, %v2389
    %v2415 = vadd.f32 %v2363, %v2390
    %v2416 = vadd.f32 %v2364, %v2391
    %v2417 = vadd.f32 %v2365, %v2392
    %v2418 = vadd.f32 %v2366, %v2393
    %v2419 = vadd.f32 %v2367, %v2394
    %v2420 = vadd.f32 %v2368, %v2395
    %v2421 = vadd.f32 %v2369, %v2396
    %v2422 = vadd.f32 %v2370, %v2397
    %v2423 = vadd.f32 %v2371, %v2398
    %v2424 = vadd.f32 %v2372, %v2399
    %v2425 = vadd.f32 %v2373, %v2400
    %v2426 = vadd.f32 %v2374, %v2401
    %v2427 = vadd.f32 %v2375, %v2402
    %v2428 = vadd.f32 %v2376, %v2403
    %v2429 = vadd.f32 %v2377, %v2404
    %v2430 = vadd.f32 %v2378, %v2405
    %v2431 = vadd.f32 %v2379, %v2406
    %v2432 = vadd.f32 %v2380, %v2407
    %v2433 = vadd.f32 %v2381, %v2408
    %v2434 = vadd.f32 %v2382, %v2409
    %s2435 = sld [smem:[#allocation7 + $0x101]]
    %v2436 = vstv %s2435
    %v2437 = vmul.f32 %v2436, %v1294
    %v2438 = vmul.f32 %v2436, %v1295
    %v2439 = vmul.f32 %v2436, %v1296
    %v2440 = vmul.f32 %v2436, %v1297
    %v2441 = vmul.f32 %v2436, %v1298
    %v2442 = vmul.f32 %v2436, %v1299
    %v2443 = vmul.f32 %v2436, %v1300
    %v2444 = vmul.f32 %v2436, %v1301
    %v2445 = vmul.f32 %v2436, %v1302
    %v2446 = vmul.f32 %v2436, %v1303
    %v2447 = vmul.f32 %v2436, %v1304
    %v2448 = vmul.f32 %v2436, %v1305
    %v2449 = vmul.f32 %v2436, %v1306
    %v2450 = vmul.f32 %v2436, %v1307
    %v2451 = vmul.f32 %v2436, %v1308
    %v2452 = vmul.f32 %v2436, %v1309
    %v2453 = vmul.f32 %v2436, %v1310
    %v2454 = vmul.f32 %v2436, %v1311
    %v2455 = vmul.f32 %v2436, %v1312
    %v2456 = vmul.f32 %v2436, %v1313
    %v2457 = vmul.f32 %v2436, %v1314
    %v2458 = vmul.f32 %v2436, %v1315
    %v2459 = vmul.f32 %v2436, %v1316
    %v2460 = vmul.f32 %v2436, %v1317
    %v2461 = vmul.f32 %v2436, %v1318
    %v2487 = vrot.slane %v2437, 1
    %v2488 = vrot.slane %v2438, 1
    %v2489 = vsel %vm253, %v2487, %v2488
    %v2490 = vrot.slane %v2439, 1
    %v2491 = vsel %vm253, %v2488, %v2490
    %v2492 = vrot.slane %v2440, 1
    %v2493 = vsel %vm253, %v2490, %v2492
    %v2494 = vrot.slane %v2441, 1
    %v2495 = vsel %vm253, %v2492, %v2494
    %v2496 = vrot.slane %v2442, 1
    %v2497 = vsel %vm253, %v2494, %v2496
    %v2498 = vrot.slane %v2443, 1
    %v2499 = vsel %vm253, %v2496, %v2498
    %v2500 = vrot.slane %v2444, 1
    %v2501 = vsel %vm253, %v2498, %v2500
    %v2502 = vrot.slane %v2445, 1
    %v2503 = vsel %vm253, %v2500, %v2502
    %v2504 = vrot.slane %v2446, 1
    %v2505 = vsel %vm253, %v2502, %v2504
    %v2506 = vrot.slane %v2447, 1
    %v2507 = vsel %vm253, %v2504, %v2506
    %v2508 = vrot.slane %v2448, 1
    %v2509 = vsel %vm253, %v2506, %v2508
    %v2510 = vrot.slane %v2449, 1
    %v2511 = vsel %vm253, %v2508, %v2510
    %v2512 = vrot.slane %v2450, 1
    %v2513 = vsel %vm253, %v2510, %v2512
    %v2514 = vrot.slane %v2451, 1
    %v2515 = vsel %vm253, %v2512, %v2514
    %v2516 = vrot.slane %v2452, 1
    %v2517 = vsel %vm253, %v2514, %v2516
    %v2518 = vrot.slane %v2453, 1
    %v2519 = vsel %vm253, %v2516, %v2518
    %v2520 = vrot.slane %v2454, 1
    %v2521 = vsel %vm253, %v2518, %v2520
    %v2522 = vrot.slane %v2455, 1
    %v2523 = vsel %vm253, %v2520, %v2522
    %v2524 = vrot.slane %v2456, 1
    %v2525 = vsel %vm253, %v2522, %v2524
    %v2526 = vrot.slane %v2457, 1
    %v2527 = vsel %vm253, %v2524, %v2526
    %v2528 = vrot.slane %v2458, 1
    %v2529 = vsel %vm253, %v2526, %v2528
    %v2530 = vrot.slane %v2459, 1
    %v2531 = vsel %vm253, %v2528, %v2530
    %v2532 = vrot.slane %v2460, 1
    %v2533 = vsel %vm253, %v2530, %v2532
    %v2534 = vrot.slane %v2461, 1
    %v2535 = vsel %vm253, %v2532, %v2534
    %v2561 = vadd.f32 %v2410, %v2489
    %v2562 = vadd.f32 %v2411, %v2491
    %v2563 = vadd.f32 %v2412, %v2493
    %v2564 = vadd.f32 %v2413, %v2495
    %v2565 = vadd.f32 %v2414, %v2497
    %v2566 = vadd.f32 %v2415, %v2499
    %v2567 = vadd.f32 %v2416, %v2501
    %v2568 = vadd.f32 %v2417, %v2503
    %v2569 = vadd.f32 %v2418, %v2505
    %v2570 = vadd.f32 %v2419, %v2507
    %v2571 = vadd.f32 %v2420, %v2509
    %v2572 = vadd.f32 %v2421, %v2511
    %v2573 = vadd.f32 %v2422, %v2513
    %v2574 = vadd.f32 %v2423, %v2515
    %v2575 = vadd.f32 %v2424, %v2517
    %v2576 = vadd.f32 %v2425, %v2519
    %v2577 = vadd.f32 %v2426, %v2521
    %v2578 = vadd.f32 %v2427, %v2523
    %v2579 = vadd.f32 %v2428, %v2525
    %v2580 = vadd.f32 %v2429, %v2527
    %v2581 = vadd.f32 %v2430, %v2529
    %v2582 = vadd.f32 %v2431, %v2531
    %v2583 = vadd.f32 %v2432, %v2533
    %v2584 = vadd.f32 %v2433, %v2535
    %v2585 = vadd.f32 %v2434, %v2534
    %s2586 = sld [smem:[#allocation7 + $0x102]]
    %v2587 = vstv %s2586
    %v2588 = vmul.f32 %v2587, %v1294
    %v2589 = vmul.f32 %v2587, %v1295
    %v2590 = vmul.f32 %v2587, %v1296
    %v2591 = vmul.f32 %v2587, %v1297
    %v2592 = vmul.f32 %v2587, %v1298
    %v2593 = vmul.f32 %v2587, %v1299
    %v2594 = vmul.f32 %v2587, %v1300
    %v2595 = vmul.f32 %v2587, %v1301
    %v2596 = vmul.f32 %v2587, %v1302
    %v2597 = vmul.f32 %v2587, %v1303
    %v2598 = vmul.f32 %v2587, %v1304
    %v2599 = vmul.f32 %v2587, %v1305
    %v2600 = vmul.f32 %v2587, %v1306
    %v2601 = vmul.f32 %v2587, %v1307
    %v2602 = vmul.f32 %v2587, %v1308
    %v2603 = vmul.f32 %v2587, %v1309
    %v2604 = vmul.f32 %v2587, %v1310
    %v2605 = vmul.f32 %v2587, %v1311
    %v2606 = vmul.f32 %v2587, %v1312
    %v2607 = vmul.f32 %v2587, %v1313
    %v2608 = vmul.f32 %v2587, %v1314
    %v2609 = vmul.f32 %v2587, %v1315
    %v2610 = vmul.f32 %v2587, %v1316
    %v2611 = vmul.f32 %v2587, %v1317
    %v2612 = vmul.f32 %v2587, %v1318
    %v2638 = vrot.slane %v2588, 2
    %v2639 = vrot.slane %v2589, 2
    %v2640 = vsel %vm405, %v2638, %v2639
    %v2641 = vrot.slane %v2590, 2
    %v2642 = vsel %vm405, %v2639, %v2641
    %v2643 = vrot.slane %v2591, 2
    %v2644 = vsel %vm405, %v2641, %v2643
    %v2645 = vrot.slane %v2592, 2
    %v2646 = vsel %vm405, %v2643, %v2645
    %v2647 = vrot.slane %v2593, 2
    %v2648 = vsel %vm405, %v2645, %v2647
    %v2649 = vrot.slane %v2594, 2
    %v2650 = vsel %vm405, %v2647, %v2649
    %v2651 = vrot.slane %v2595, 2
    %v2652 = vsel %vm405, %v2649, %v2651
    %v2653 = vrot.slane %v2596, 2
    %v2654 = vsel %vm405, %v2651, %v2653
    %v2655 = vrot.slane %v2597, 2
    %v2656 = vsel %vm405, %v2653, %v2655
    %v2657 = vrot.slane %v2598, 2
    %v2658 = vsel %vm405, %v2655, %v2657
    %v2659 = vrot.slane %v2599, 2
    %v2660 = vsel %vm405, %v2657, %v2659
    %v2661 = vrot.slane %v2600, 2
    %v2662 = vsel %vm405, %v2659, %v2661
    %v2663 = vrot.slane %v2601, 2
    %v2664 = vsel %vm405, %v2661, %v2663
    %v2665 = vrot.slane %v2602, 2
    %v2666 = vsel %vm405, %v2663, %v2665
    %v2667 = vrot.slane %v2603, 2
    %v2668 = vsel %vm405, %v2665, %v2667
    %v2669 = vrot.slane %v2604, 2
    %v2670 = vsel %vm405, %v2667, %v2669
    %v2671 = vrot.slane %v2605, 2
    %v2672 = vsel %vm405, %v2669, %v2671
    %v2673 = vrot.slane %v2606, 2
    %v2674 = vsel %vm405, %v2671, %v2673
    %v2675 = vrot.slane %v2607, 2
    %v2676 = vsel %vm405, %v2673, %v2675
    %v2677 = vrot.slane %v2608, 2
    %v2678 = vsel %vm405, %v2675, %v2677
    %v2679 = vrot.slane %v2609, 2
    %v2680 = vsel %vm405, %v2677, %v2679
    %v2681 = vrot.slane %v2610, 2
    %v2682 = vsel %vm405, %v2679, %v2681
    %v2683 = vrot.slane %v2611, 2
    %v2684 = vsel %vm405, %v2681, %v2683
    %v2685 = vrot.slane %v2612, 2
    %v2686 = vsel %vm405, %v2683, %v2685
    %v2712 = vadd.f32 %v2561, %v2640
    %v2713 = vadd.f32 %v2562, %v2642
    %v2714 = vadd.f32 %v2563, %v2644
    %v2715 = vadd.f32 %v2564, %v2646
    %v2716 = vadd.f32 %v2565, %v2648
    %v2717 = vadd.f32 %v2566, %v2650
    %v2718 = vadd.f32 %v2567, %v2652
    %v2719 = vadd.f32 %v2568, %v2654
    %v2720 = vadd.f32 %v2569, %v2656
    %v2721 = vadd.f32 %v2570, %v2658
    %v2722 = vadd.f32 %v2571, %v2660
    %v2723 = vadd.f32 %v2572, %v2662
    %v2724 = vadd.f32 %v2573, %v2664
    %v2725 = vadd.f32 %v2574, %v2666
    %v2726 = vadd.f32 %v2575, %v2668
    %v2727 = vadd.f32 %v2576, %v2670
    %v2728 = vadd.f32 %v2577, %v2672
    %v2729 = vadd.f32 %v2578, %v2674
    %v2730 = vadd.f32 %v2579, %v2676
    %v2731 = vadd.f32 %v2580, %v2678
    %v2732 = vadd.f32 %v2581, %v2680
    %v2733 = vadd.f32 %v2582, %v2682
    %v2734 = vadd.f32 %v2583, %v2684
    %v2735 = vadd.f32 %v2584, %v2686
    %v2736 = vadd.f32 %v2585, %v2685
    %s2737 = sld [smem:[#allocation7 + $0x180]]
    %v2738 = vstv %s2737
    %v2739 = vmul.f32 %v2738, %v1675
    %v2740 = vmul.f32 %v2738, %v1676
    %v2741 = vmul.f32 %v2738, %v1677
    %v2742 = vmul.f32 %v2738, %v1678
    %v2743 = vmul.f32 %v2738, %v1679
    %v2744 = vmul.f32 %v2738, %v1680
    %v2745 = vmul.f32 %v2738, %v1681
    %v2746 = vmul.f32 %v2738, %v1682
    %v2747 = vmul.f32 %v2738, %v1683
    %v2748 = vmul.f32 %v2738, %v1684
    %v2749 = vmul.f32 %v2738, %v1685
    %v2750 = vmul.f32 %v2738, %v1686
    %v2751 = vmul.f32 %v2738, %v1687
    %v2752 = vmul.f32 %v2738, %v1688
    %v2753 = vmul.f32 %v2738, %v1689
    %v2754 = vmul.f32 %v2738, %v1690
    %v2755 = vmul.f32 %v2738, %v1691
    %v2756 = vmul.f32 %v2738, %v1692
    %v2757 = vmul.f32 %v2738, %v1693
    %v2758 = vmul.f32 %v2738, %v1694
    %v2759 = vmul.f32 %v2738, %v1695
    %v2760 = vmul.f32 %v2738, %v1696
    %v2761 = vmul.f32 %v2738, %v1697
    %v2762 = vmul.f32 %v2738, %v1698
    %v2763 = vmul.f32 %v2738, %v1699
    %v2764 = vadd.f32 %v2712, %v2739
    %v2765 = vadd.f32 %v2713, %v2740
    %v2766 = vadd.f32 %v2714, %v2741
    %v2767 = vadd.f32 %v2715, %v2742
    %v2768 = vadd.f32 %v2716, %v2743
    %v2769 = vadd.f32 %v2717, %v2744
    %v2770 = vadd.f32 %v2718, %v2745
    %v2771 = vadd.f32 %v2719, %v2746
    %v2772 = vadd.f32 %v2720, %v2747
    %v2773 = vadd.f32 %v2721, %v2748
    %v2774 = vadd.f32 %v2722, %v2749
    %v2775 = vadd.f32 %v2723, %v2750
    %v2776 = vadd.f32 %v2724, %v2751
    %v2777 = vadd.f32 %v2725, %v2752
    %v2778 = vadd.f32 %v2726, %v2753
    %v2779 = vadd.f32 %v2727, %v2754
    %v2780 = vadd.f32 %v2728, %v2755
    %v2781 = vadd.f32 %v2729, %v2756
    %v2782 = vadd.f32 %v2730, %v2757
    %v2783 = vadd.f32 %v2731, %v2758
    %v2784 = vadd.f32 %v2732, %v2759
    %v2785 = vadd.f32 %v2733, %v2760
    %v2786 = vadd.f32 %v2734, %v2761
    %v2787 = vadd.f32 %v2735, %v2762
    %v2788 = vadd.f32 %v2736, %v2763
    %s2789 = sld [smem:[#allocation7 + $0x181]]
    %v2790 = vstv %s2789
    %v2791 = vmul.f32 %v2790, %v1675
    %v2792 = vmul.f32 %v2790, %v1676
    %v2793 = vmul.f32 %v2790, %v1677
    %v2794 = vmul.f32 %v2790, %v1678
    %v2795 = vmul.f32 %v2790, %v1679
    %v2796 = vmul.f32 %v2790, %v1680
    %v2797 = vmul.f32 %v2790, %v1681
    %v2798 = vmul.f32 %v2790, %v1682
    %v2799 = vmul.f32 %v2790, %v1683
    %v2800 = vmul.f32 %v2790, %v1684
    %v2801 = vmul.f32 %v2790, %v1685
    %v2802 = vmul.f32 %v2790, %v1686
    %v2803 = vmul.f32 %v2790, %v1687
    %v2804 = vmul.f32 %v2790, %v1688
    %v2805 = vmul.f32 %v2790, %v1689
    %v2806 = vmul.f32 %v2790, %v1690
    %v2807 = vmul.f32 %v2790, %v1691
    %v2808 = vmul.f32 %v2790, %v1692
    %v2809 = vmul.f32 %v2790, %v1693
    %v2810 = vmul.f32 %v2790, %v1694
    %v2811 = vmul.f32 %v2790, %v1695
    %v2812 = vmul.f32 %v2790, %v1696
    %v2813 = vmul.f32 %v2790, %v1697
    %v2814 = vmul.f32 %v2790, %v1698
    %v2815 = vmul.f32 %v2790, %v1699
    %v2841 = vrot.slane %v2791, 1
    %v2842 = vrot.slane %v2792, 1
    %v2843 = vsel %vm253, %v2841, %v2842
    %v2844 = vrot.slane %v2793, 1
    %v2845 = vsel %vm253, %v2842, %v2844
    %v2846 = vrot.slane %v2794, 1
    %v2847 = vsel %vm253, %v2844, %v2846
    %v2848 = vrot.slane %v2795, 1
    %v2849 = vsel %vm253, %v2846, %v2848
    %v2850 = vrot.slane %v2796, 1
    %v2851 = vsel %vm253, %v2848, %v2850
    %v2852 = vrot.slane %v2797, 1
    %v2853 = vsel %vm253, %v2850, %v2852
    %v2854 = vrot.slane %v2798, 1
    %v2855 = vsel %vm253, %v2852, %v2854
    %v2856 = vrot.slane %v2799, 1
    %v2857 = vsel %vm253, %v2854, %v2856
    %v2858 = vrot.slane %v2800, 1
    %v2859 = vsel %vm253, %v2856, %v2858
    %v2860 = vrot.slane %v2801, 1
    %v2861 = vsel %vm253, %v2858, %v2860
    %v2862 = vrot.slane %v2802, 1
    %v2863 = vsel %vm253, %v2860, %v2862
    %v2864 = vrot.slane %v2803, 1
    %v2865 = vsel %vm253, %v2862, %v2864
    %v2866 = vrot.slane %v2804, 1
    %v2867 = vsel %vm253, %v2864, %v2866
    %v2868 = vrot.slane %v2805, 1
    %v2869 = vsel %vm253, %v2866, %v2868
    %v2870 = vrot.slane %v2806, 1
    %v2871 = vsel %vm253, %v2868, %v2870
    %v2872 = vrot.slane %v2807, 1
    %v2873 = vsel %vm253, %v2870, %v2872
    %v2874 = vrot.slane %v2808, 1
    %v2875 = vsel %vm253, %v2872, %v2874
    %v2876 = vrot.slane %v2809, 1
    %v2877 = vsel %vm253, %v2874, %v2876
    %v2878 = vrot.slane %v2810, 1
    %v2879 = vsel %vm253, %v2876, %v2878
    %v2880 = vrot.slane %v2811, 1
    %v2881 = vsel %vm253, %v2878, %v2880
    %v2882 = vrot.slane %v2812, 1
    %v2883 = vsel %vm253, %v2880, %v2882
    %v2884 = vrot.slane %v2813, 1
    %v2885 = vsel %vm253, %v2882, %v2884
    %v2886 = vrot.slane %v2814, 1
    %v2887 = vsel %vm253, %v2884, %v2886
    %v2888 = vrot.slane %v2815, 1
    %v2889 = vsel %vm253, %v2886, %v2888
    %v2915 = vadd.f32 %v2764, %v2843
    %v2916 = vadd.f32 %v2765, %v2845
    %v2917 = vadd.f32 %v2766, %v2847
    %v2918 = vadd.f32 %v2767, %v2849
    %v2919 = vadd.f32 %v2768, %v2851
    %v2920 = vadd.f32 %v2769, %v2853
    %v2921 = vadd.f32 %v2770, %v2855
    %v2922 = vadd.f32 %v2771, %v2857
    %v2923 = vadd.f32 %v2772, %v2859
    %v2924 = vadd.f32 %v2773, %v2861
    %v2925 = vadd.f32 %v2774, %v2863
    %v2926 = vadd.f32 %v2775, %v2865
    %v2927 = vadd.f32 %v2776, %v2867
    %v2928 = vadd.f32 %v2777, %v2869
    %v2929 = vadd.f32 %v2778, %v2871
    %v2930 = vadd.f32 %v2779, %v2873
    %v2931 = vadd.f32 %v2780, %v2875
    %v2932 = vadd.f32 %v2781, %v2877
    %v2933 = vadd.f32 %v2782, %v2879
    %v2934 = vadd.f32 %v2783, %v2881
    %v2935 = vadd.f32 %v2784, %v2883
    %v2936 = vadd.f32 %v2785, %v2885
    %v2937 = vadd.f32 %v2786, %v2887
    %v2938 = vadd.f32 %v2787, %v2889
    %v2939 = vadd.f32 %v2788, %v2888
    %s2940 = sld [smem:[#allocation7 + $0x182]]
    %v2941 = vstv %s2940
    %v2942 = vmul.f32 %v2941, %v1675
    %v2943 = vmul.f32 %v2941, %v1676
    %v2944 = vmul.f32 %v2941, %v1677
    %v2945 = vmul.f32 %v2941, %v1678
    %v2946 = vmul.f32 %v2941, %v1679
    %v2947 = vmul.f32 %v2941, %v1680
    %v2948 = vmul.f32 %v2941, %v1681
    %v2949 = vmul.f32 %v2941, %v1682
    %v2950 = vmul.f32 %v2941, %v1683
    %v2951 = vmul.f32 %v2941, %v1684
    %v2952 = vmul.f32 %v2941, %v1685
    %v2953 = vmul.f32 %v2941, %v1686
    %v2954 = vmul.f32 %v2941, %v1687
    %v2955 = vmul.f32 %v2941, %v1688
    %v2956 = vmul.f32 %v2941, %v1689
    %v2957 = vmul.f32 %v2941, %v1690
    %v2958 = vmul.f32 %v2941, %v1691
    %v2959 = vmul.f32 %v2941, %v1692
    %v2960 = vmul.f32 %v2941, %v1693
    %v2961 = vmul.f32 %v2941, %v1694
    %v2962 = vmul.f32 %v2941, %v1695
    %v2963 = vmul.f32 %v2941, %v1696
    %v2964 = vmul.f32 %v2941, %v1697
    %v2965 = vmul.f32 %v2941, %v1698
    %v2966 = vmul.f32 %v2941, %v1699
    %v2992 = vrot.slane %v2942, 2
    %v2993 = vrot.slane %v2943, 2
    %v2994 = vsel %vm405, %v2992, %v2993
    %v2995 = vrot.slane %v2944, 2
    %v2996 = vsel %vm405, %v2993, %v2995
    %v2997 = vrot.slane %v2945, 2
    %v2998 = vsel %vm405, %v2995, %v2997
    %v2999 = vrot.slane %v2946, 2
    %v3000 = vsel %vm405, %v2997, %v2999
    %v3001 = vrot.slane %v2947, 2
    %v3002 = vsel %vm405, %v2999, %v3001
    %v3003 = vrot.slane %v2948, 2
    %v3004 = vsel %vm405, %v3001, %v3003
    %v3005 = vrot.slane %v2949, 2
    %v3006 = vsel %vm405, %v3003, %v3005
    %v3007 = vrot.slane %v2950, 2
    %v3008 = vsel %vm405, %v3005, %v3007
    %v3009 = vrot.slane %v2951, 2
    %v3010 = vsel %vm405, %v3007, %v3009
    %v3011 = vrot.slane %v2952, 2
    %v3012 = vsel %vm405, %v3009, %v3011
    %v3013 = vrot.slane %v2953, 2
    %v3014 = vsel %vm405, %v3011, %v3013
    %v3015 = vrot.slane %v2954, 2
    %v3016 = vsel %vm405, %v3013, %v3015
    %v3017 = vrot.slane %v2955, 2
    %v3018 = vsel %vm405, %v3015, %v3017
    %v3019 = vrot.slane %v2956, 2
    %v3020 = vsel %vm405, %v3017, %v3019
    %v3021 = vrot.slane %v2957, 2
    %v3022 = vsel %vm405, %v3019, %v3021
    %v3023 = vrot.slane %v2958, 2
    %v3024 = vsel %vm405, %v3021, %v3023
    %v3025 = vrot.slane %v2959, 2
    %v3026 = vsel %vm405, %v3023, %v3025
    %v3027 = vrot.slane %v2960, 2
    %v3028 = vsel %vm405, %v3025, %v3027
    %v3029 = vrot.slane %v2961, 2
    %v3030 = vsel %vm405, %v3027, %v3029
    %v3031 = vrot.slane %v2962, 2
    %v3032 = vsel %vm405, %v3029, %v3031
    %v3033 = vrot.slane %v2963, 2
    %v3034 = vsel %vm405, %v3031, %v3033
    %v3035 = vrot.slane %v2964, 2
    %v3036 = vsel %vm405, %v3033, %v3035
    %v3037 = vrot.slane %v2965, 2
    %v3038 = vsel %vm405, %v3035, %v3037
    %v3039 = vrot.slane %v2966, 2
    %v3040 = vsel %vm405, %v3037, %v3039
    %v3066 = vadd.f32 %v2915, %v2994
    %v3067 = vadd.f32 %v2916, %v2996
    %v3068 = vadd.f32 %v2917, %v2998
    %v3069 = vadd.f32 %v2918, %v3000
    %v3070 = vadd.f32 %v2919, %v3002
    %v3071 = vadd.f32 %v2920, %v3004
    %v3072 = vadd.f32 %v2921, %v3006
    %v3073 = vadd.f32 %v2922, %v3008
    %v3074 = vadd.f32 %v2923, %v3010
    %v3075 = vadd.f32 %v2924, %v3012
    %v3076 = vadd.f32 %v2925, %v3014
    %v3077 = vadd.f32 %v2926, %v3016
    %v3078 = vadd.f32 %v2927, %v3018
    %v3079 = vadd.f32 %v2928, %v3020
    %v3080 = vadd.f32 %v2929, %v3022
    %v3081 = vadd.f32 %v2930, %v3024
    %v3082 = vadd.f32 %v2931, %v3026
    %v3083 = vadd.f32 %v2932, %v3028
    %v3084 = vadd.f32 %v2933, %v3030
    %v3085 = vadd.f32 %v2934, %v3032
    %v3086 = vadd.f32 %v2935, %v3034
    %v3087 = vadd.f32 %v2936, %v3036
    %v3088 = vadd.f32 %v2937, %v3038
    %v3089 = vadd.f32 %v2938, %v3040
    %v3090 = vadd.f32 %v2939, %v3039
    %s3091 = sld [smem:[#allocation8]]
    %v3092 = vstv %s3091
    %v3093 = vadd.f32 %v3066, %v3092
    %v3094 = vadd.f32 %v3067, %v3092
    %v3095 = vadd.f32 %v3068, %v3092
    %v3096 = vadd.f32 %v3069, %v3092
    %v3097 = vadd.f32 %v3070, %v3092
    %v3098 = vadd.f32 %v3071, %v3092
    %v3099 = vadd.f32 %v3072, %v3092
    %v3100 = vadd.f32 %v3073, %v3092
    %v3101 = vadd.f32 %v3074, %v3092
    %v3102 = vadd.f32 %v3075, %v3092
    %v3103 = vadd.f32 %v3076, %v3092
    %v3104 = vadd.f32 %v3077, %v3092
    %v3105 = vadd.f32 %v3078, %v3092
    %v3106 = vadd.f32 %v3079, %v3092
    %v3107 = vadd.f32 %v3080, %v3092
    %v3108 = vadd.f32 %v3081, %v3092
    %v3109 = vadd.f32 %v3082, %v3092
    %v3110 = vadd.f32 %v3083, %v3092
    %v3111 = vadd.f32 %v3084, %v3092
    %v3112 = vadd.f32 %v3085, %v3092
    %v3113 = vadd.f32 %v3086, %v3092
    %v3114 = vadd.f32 %v3087, %v3092
    %v3115 = vadd.f32 %v3088, %v3092
    %v3116 = vadd.f32 %v3089, %v3092
    %v3117 = vadd.f32 %v3090, %v3092
    %v3118 = vmax.f32 %v3093, 0.0
    %v3119 = vmax.f32 %v3094, 0.0
    %v3120 = vmax.f32 %v3095, 0.0
    %v3121 = vmax.f32 %v3096, 0.0
    %v3122 = vmax.f32 %v3097, 0.0
    %v3123 = vmax.f32 %v3098, 0.0
    %v3124 = vmax.f32 %v3099, 0.0
    %v3125 = vmax.f32 %v3100, 0.0
    %v3126 = vmax.f32 %v3101, 0.0
    %v3127 = vmax.f32 %v3102, 0.0
    %v3128 = vmax.f32 %v3103, 0.0
    %v3129 = vmax.f32 %v3104, 0.0
    %v3130 = vmax.f32 %v3105, 0.0
    %v3131 = vmax.f32 %v3106, 0.0
    %v3132 = vmax.f32 %v3107, 0.0
    %v3133 = vmax.f32 %v3108, 0.0
    %v3134 = vmax.f32 %v3109, 0.0
    %v3135 = vmax.f32 %v3110, 0.0
    %v3136 = vmax.f32 %v3111, 0.0
    %v3137 = vmax.f32 %v3112, 0.0
    %v3138 = vmax.f32 %v3113, 0.0
    %v3139 = vmax.f32 %v3114, 0.0
    %v3140 = vmax.f32 %v3115, 0.0
    %v3141 = vmax.f32 %v3116, 0.0
    %v3142 = vmax.f32 %v3117, 0.0
    %s3143 = sld [smem:[#allocation7 + $0x200]]
    %v3144 = vstv %s3143
    %v3145 = vmul.f32 %v3144, %v532
    %v3146 = vmul.f32 %v3144, %v533
    %v3147 = vmul.f32 %v3144, %v534
    %v3148 = vmul.f32 %v3144, %v535
    %v3149 = vmul.f32 %v3144, %v536
    %v3150 = vmul.f32 %v3144, %v537
    %v3151 = vmul.f32 %v3144, %v538
    %v3152 = vmul.f32 %v3144, %v539
    %v3153 = vmul.f32 %v3144, %v540
    %v3154 = vmul.f32 %v3144, %v541
    %v3155 = vmul.f32 %v3144, %v542
    %v3156 = vmul.f32 %v3144, %v543
    %v3157 = vmul.f32 %v3144, %v544
    %v3158 = vmul.f32 %v3144, %v545
    %v3159 = vmul.f32 %v3144, %v546
    %v3160 = vmul.f32 %v3144, %v547
    %v3161 = vmul.f32 %v3144, %v548
    %v3162 = vmul.f32 %v3144, %v549
    %v3163 = vmul.f32 %v3144, %v550
    %v3164 = vmul.f32 %v3144, %v551
    %v3165 = vmul.f32 %v3144, %v552
    %v3166 = vmul.f32 %v3144, %v553
    %v3167 = vmul.f32 %v3144, %v554
    %v3168 = vmul.f32 %v3144, %v555
    %v3169 = vmul.f32 %v3144, %v556
    %s3170 = sld [smem:[#allocation7 + $0x201]]
    %v3171 = vstv %s3170
    %v3172 = vmul.f32 %v3171, %v532
    %v3173 = vmul.f32 %v3171, %v533
    %v3174 = vmul.f32 %v3171, %v534
    %v3175 = vmul.f32 %v3171, %v535
    %v3176 = vmul.f32 %v3171, %v536
    %v3177 = vmul.f32 %v3171, %v537
    %v3178 = vmul.f32 %v3171, %v538
    %v3179 = vmul.f32 %v3171, %v539
    %v3180 = vmul.f32 %v3171, %v540
    %v3181 = vmul.f32 %v3171, %v541
    %v3182 = vmul.f32 %v3171, %v542
    %v3183 = vmul.f32 %v3171, %v543
    %v3184 = vmul.f32 %v3171, %v544
    %v3185 = vmul.f32 %v3171, %v545
    %v3186 = vmul.f32 %v3171, %v546
    %v3187 = vmul.f32 %v3171, %v547
    %v3188 = vmul.f32 %v3171, %v548
    %v3189 = vmul.f32 %v3171, %v549
    %v3190 = vmul.f32 %v3171, %v550
    %v3191 = vmul.f32 %v3171, %v551
    %v3192 = vmul.f32 %v3171, %v552
    %v3193 = vmul.f32 %v3171, %v553
    %v3194 = vmul.f32 %v3171, %v554
    %v3195 = vmul.f32 %v3171, %v555
    %v3196 = vmul.f32 %v3171, %v556
    %v3222 = vrot.slane %v3172, 1
    %v3223 = vrot.slane %v3173, 1
    %v3224 = vsel %vm253, %v3222, %v3223
    %v3225 = vrot.slane %v3174, 1
    %v3226 = vsel %vm253, %v3223, %v3225
    %v3227 = vrot.slane %v3175, 1
    %v3228 = vsel %vm253, %v3225, %v3227
    %v3229 = vrot.slane %v3176, 1
    %v3230 = vsel %vm253, %v3227, %v3229
    %v3231 = vrot.slane %v3177, 1
    %v3232 = vsel %vm253, %v3229, %v3231
    %v3233 = vrot.slane %v3178, 1
    %v3234 = vsel %vm253, %v3231, %v3233
    %v3235 = vrot.slane %v3179, 1
    %v3236 = vsel %vm253, %v3233, %v3235
    %v3237 = vrot.slane %v3180, 1
    %v3238 = vsel %vm253, %v3235, %v3237
    %v3239 = vrot.slane %v3181, 1
    %v3240 = vsel %vm253, %v3237, %v3239
    %v3241 = vrot.slane %v3182, 1
    %v3242 = vsel %vm253, %v3239, %v3241
    %v3243 = vrot.slane %v3183, 1
    %v3244 = vsel %vm253, %v3241, %v3243
    %v3245 = vrot.slane %v3184, 1
    %v3246 = vsel %vm253, %v3243, %v3245
    %v3247 = vrot.slane %v3185, 1
    %v3248 = vsel %vm253, %v3245, %v3247
    %v3249 = vrot.slane %v3186, 1
    %v3250 = vsel %vm253, %v3247, %v3249
    %v3251 = vrot.slane %v3187, 1
    %v3252 = vsel %vm253, %v3249, %v3251
    %v3253 = vrot.slane %v3188, 1
    %v3254 = vsel %vm253, %v3251, %v3253
    %v3255 = vrot.slane %v3189, 1
    %v3256 = vsel %vm253, %v3253, %v3255
    %v3257 = vrot.slane %v3190, 1
    %v3258 = vsel %vm253, %v3255, %v3257
    %v3259 = vrot.slane %v3191, 1
    %v3260 = vsel %vm253, %v3257, %v3259
    %v3261 = vrot.slane %v3192, 1
    %v3262 = vsel %vm253, %v3259, %v3261
    %v3263 = vrot.slane %v3193, 1
    %v3264 = vsel %vm253, %v3261, %v3263
    %v3265 = vrot.slane %v3194, 1
    %v3266 = vsel %vm253, %v3263, %v3265
    %v3267 = vrot.slane %v3195, 1
    %v3268 = vsel %vm253, %v3265, %v3267
    %v3269 = vrot.slane %v3196, 1
    %v3270 = vsel %vm253, %v3267, %v3269
    %v3296 = vadd.f32 %v3145, %v3224
    %v3297 = vadd.f32 %v3146, %v3226
    %v3298 = vadd.f32 %v3147, %v3228
    %v3299 = vadd.f32 %v3148, %v3230
    %v3300 = vadd.f32 %v3149, %v3232
    %v3301 = vadd.f32 %v3150, %v3234
    %v3302 = vadd.f32 %v3151, %v3236
    %v3303 = vadd.f32 %v3152, %v3238
    %v3304 = vadd.f32 %v3153, %v3240
    %v3305 = vadd.f32 %v3154, %v3242
    %v3306 = vadd.f32 %v3155, %v3244
    %v3307 = vadd.f32 %v3156, %v3246
    %v3308 = vadd.f32 %v3157, %v3248
    %v3309 = vadd.f32 %v3158, %v3250
    %v3310 = vadd.f32 %v3159, %v3252
    %v3311 = vadd.f32 %v3160, %v3254
    %v3312 = vadd.f32 %v3161, %v3256
    %v3313 = vadd.f32 %v3162, %v3258
    %v3314 = vadd.f32 %v3163, %v3260
    %v3315 = vadd.f32 %v3164, %v3262
    %v3316 = vadd.f32 %v3165, %v3264
    %v3317 = vadd.f32 %v3166, %v3266
    %v3318 = vadd.f32 %v3167, %v3268
    %v3319 = vadd.f32 %v3168, %v3270
    %v3320 = vadd.f32 %v3169, %v3269
    %s3321 = sld [smem:[#allocation7 + $0x202]]
    %v3322 = vstv %s3321
    %v3323 = vmul.f32 %v3322, %v532
    %v3324 = vmul.f32 %v3322, %v533
    %v3325 = vmul.f32 %v3322, %v534
    %v3326 = vmul.f32 %v3322, %v535
    %v3327 = vmul.f32 %v3322, %v536
    %v3328 = vmul.f32 %v3322, %v537
    %v3329 = vmul.f32 %v3322, %v538
    %v3330 = vmul.f32 %v3322, %v539
    %v3331 = vmul.f32 %v3322, %v540
    %v3332 = vmul.f32 %v3322, %v541
    %v3333 = vmul.f32 %v3322, %v542
    %v3334 = vmul.f32 %v3322, %v543
    %v3335 = vmul.f32 %v3322, %v544
    %v3336 = vmul.f32 %v3322, %v545
    %v3337 = vmul.f32 %v3322, %v546
    %v3338 = vmul.f32 %v3322, %v547
    %v3339 = vmul.f32 %v3322, %v548
    %v3340 = vmul.f32 %v3322, %v549
    %v3341 = vmul.f32 %v3322, %v550
    %v3342 = vmul.f32 %v3322, %v551
    %v3343 = vmul.f32 %v3322, %v552
    %v3344 = vmul.f32 %v3322, %v553
    %v3345 = vmul.f32 %v3322, %v554
    %v3346 = vmul.f32 %v3322, %v555
    %v3347 = vmul.f32 %v3322, %v556
    %v3373 = vrot.slane %v3323, 2
    %v3374 = vrot.slane %v3324, 2
    %v3375 = vsel %vm405, %v3373, %v3374
    %v3376 = vrot.slane %v3325, 2
    %v3377 = vsel %vm405, %v3374, %v3376
    %v3378 = vrot.slane %v3326, 2
    %v3379 = vsel %vm405, %v3376, %v3378
    %v3380 = vrot.slane %v3327, 2
    %v3381 = vsel %vm405, %v3378, %v3380
    %v3382 = vrot.slane %v3328, 2
    %v3383 = vsel %vm405, %v3380, %v3382
    %v3384 = vrot.slane %v3329, 2
    %v3385 = vsel %vm405, %v3382, %v3384
    %v3386 = vrot.slane %v3330, 2
    %v3387 = vsel %vm405, %v3384, %v3386
    %v3388 = vrot.slane %v3331, 2
    %v3389 = vsel %vm405, %v3386, %v3388
    %v3390 = vrot.slane %v3332, 2
    %v3391 = vsel %vm405, %v3388, %v3390
    %v3392 = vrot.slane %v3333, 2
    %v3393 = vsel %vm405, %v3390, %v3392
    %v3394 = vrot.slane %v3334, 2
    %v3395 = vsel %vm405, %v3392, %v3394
    %v3396 = vrot.slane %v3335, 2
    %v3397 = vsel %vm405, %v3394, %v3396
    %v3398 = vrot.slane %v3336, 2
    %v3399 = vsel %vm405, %v3396, %v3398
    %v3400 = vrot.slane %v3337, 2
    %v3401 = vsel %vm405, %v3398, %v3400
    %v3402 = vrot.slane %v3338, 2
    %v3403 = vsel %vm405, %v3400, %v3402
    %v3404 = vrot.slane %v3339, 2
    %v3405 = vsel %vm405, %v3402, %v3404
    %v3406 = vrot.slane %v3340, 2
    %v3407 = vsel %vm405, %v3404, %v3406
    %v3408 = vrot.slane %v3341, 2
    %v3409 = vsel %vm405, %v3406, %v3408
    %v3410 = vrot.slane %v3342, 2
    %v3411 = vsel %vm405, %v3408, %v3410
    %v3412 = vrot.slane %v3343, 2
    %v3413 = vsel %vm405, %v3410, %v3412
    %v3414 = vrot.slane %v3344, 2
    %v3415 = vsel %vm405, %v3412, %v3414
    %v3416 = vrot.slane %v3345, 2
    %v3417 = vsel %vm405, %v3414, %v3416
    %v3418 = vrot.slane %v3346, 2
    %v3419 = vsel %vm405, %v3416, %v3418
    %v3420 = vrot.slane %v3347, 2
    %v3421 = vsel %vm405, %v3418, %v3420
    %v3447 = vadd.f32 %v3296, %v3375
    %v3448 = vadd.f32 %v3297, %v3377
    %v3449 = vadd.f32 %v3298, %v3379
    %v3450 = vadd.f32 %v3299, %v3381
    %v3451 = vadd.f32 %v3300, %v3383
    %v3452 = vadd.f32 %v3301, %v3385
    %v3453 = vadd.f32 %v3302, %v3387
    %v3454 = vadd.f32 %v3303, %v3389
    %v3455 = vadd.f32 %v3304, %v3391
    %v3456 = vadd.f32 %v3305, %v3393
    %v3457 = vadd.f32 %v3306, %v3395
    %v3458 = vadd.f32 %v3307, %v3397
    %v3459 = vadd.f32 %v3308, %v3399
    %v3460 = vadd.f32 %v3309, %v3401
    %v3461 = vadd.f32 %v3310, %v3403
    %v3462 = vadd.f32 %v3311, %v3405
    %v3463 = vadd.f32 %v3312, %v3407
    %v3464 = vadd.f32 %v3313, %v3409
    %v3465 = vadd.f32 %v3314, %v3411
    %v3466 = vadd.f32 %v3315, %v3413
    %v3467 = vadd.f32 %v3316, %v3415
    %v3468 = vadd.f32 %v3317, %v3417
    %v3469 = vadd.f32 %v3318, %v3419
    %v3470 = vadd.f32 %v3319, %v3421
    %v3471 = vadd.f32 %v3320, %v3420
    %s3472 = sld [smem:[#allocation7 + $0x280]]
    %v3473 = vstv %s3472
    %v3474 = vmul.f32 %v3473, %v913
    %v3475 = vmul.f32 %v3473, %v914
    %v3476 = vmul.f32 %v3473, %v915
    %v3477 = vmul.f32 %v3473, %v916
    %v3478 = vmul.f32 %v3473, %v917
    %v3479 = vmul.f32 %v3473, %v918
    %v3480 = vmul.f32 %v3473, %v919
    %v3481 = vmul.f32 %v3473, %v920
    %v3482 = vmul.f32 %v3473, %v921
    %v3483 = vmul.f32 %v3473, %v922
    %v3484 = vmul.f32 %v3473, %v923
    %v3485 = vmul.f32 %v3473, %v924
    %v3486 = vmul.f32 %v3473, %v925
    %v3487 = vmul.f32 %v3473, %v926
    %v3488 = vmul.f32 %v3473, %v927
    %v3489 = vmul.f32 %v3473, %v928
    %v3490 = vmul.f32 %v3473, %v929
    %v3491 = vmul.f32 %v3473, %v930
    %v3492 = vmul.f32 %v3473, %v931
    %v3493 = vmul.f32 %v3473, %v932
    %v3494 = vmul.f32 %v3473, %v933
    %v3495 = vmul.f32 %v3473, %v934
    %v3496 = vmul.f32 %v3473, %v935
    %v3497 = vmul.f32 %v3473, %v936
    %v3498 = vmul.f32 %v3473, %v937
    %v3499 = vadd.f32 %v3447, %v3474
    %v3500 = vadd.f32 %v3448, %v3475
    %v3501 = vadd.f32 %v3449, %v3476
    %v3502 = vadd.f32 %v3450, %v3477
    %v3503 = vadd.f32 %v3451, %v3478
    %v3504 = vadd.f32 %v3452, %v3479
    %v3505 = vadd.f32 %v3453, %v3480
    %v3506 = vadd.f32 %v3454, %v3481
    %v3507 = vadd.f32 %v3455, %v3482
    %v3508 = vadd.f32 %v3456, %v3483
    %v3509 = vadd.f32 %v3457, %v3484
    %v3510 = vadd.f32 %v3458, %v3485
    %v3511 = vadd.f32 %v3459, %v3486
    %v3512 = vadd.f32 %v3460, %v3487
    %v3513 = vadd.f32 %v3461, %v3488
    %v3514 = vadd.f32 %v3462, %v3489
    %v3515 = vadd.f32 %v3463, %v3490
    %v3516 = vadd.f32 %v3464, %v3491
    %v3517 = vadd.f32 %v3465, %v3492
    %v3518 = vadd.f32 %v3466, %v3493
    %v3519 = vadd.f32 %v3467, %v3494
    %v3520 = vadd.f32 %v3468, %v3495
    %v3521 = vadd.f32 %v3469, %v3496
    %v3522 = vadd.f32 %v3470, %v3497
    %v3523 = vadd.f32 %v3471, %v3498
    %s3524 = sld [smem:[#allocation7 + $0x281]]
    %v3525 = vstv %s3524
    %v3526 = vmul.f32 %v3525, %v913
    %v3527 = vmul.f32 %v3525, %v914
    %v3528 = vmul.f32 %v3525, %v915
    %v3529 = vmul.f32 %v3525, %v916
    %v3530 = vmul.f32 %v3525, %v917
    %v3531 = vmul.f32 %v3525, %v918
    %v3532 = vmul.f32 %v3525, %v919
    %v3533 = vmul.f32 %v3525, %v920
    %v3534 = vmul.f32 %v3525, %v921
    %v3535 = vmul.f32 %v3525, %v922
    %v3536 = vmul.f32 %v3525, %v923
    %v3537 = vmul.f32 %v3525, %v924
    %v3538 = vmul.f32 %v3525, %v925
    %v3539 = vmul.f32 %v3525, %v926
    %v3540 = vmul.f32 %v3525, %v927
    %v3541 = vmul.f32 %v3525, %v928
    %v3542 = vmul.f32 %v3525, %v929
    %v3543 = vmul.f32 %v3525, %v930
    %v3544 = vmul.f32 %v3525, %v931
    %v3545 = vmul.f32 %v3525, %v932
    %v3546 = vmul.f32 %v3525, %v933
    %v3547 = vmul.f32 %v3525, %v934
    %v3548 = vmul.f32 %v3525, %v935
    %v3549 = vmul.f32 %v3525, %v936
    %v3550 = vmul.f32 %v3525, %v937
    %v3576 = vrot.slane %v3526, 1
    %v3577 = vrot.slane %v3527, 1
    %v3578 = vsel %vm253, %v3576, %v3577
    %v3579 = vrot.slane %v3528, 1
    %v3580 = vsel %vm253, %v3577, %v3579
    %v3581 = vrot.slane %v3529, 1
    %v3582 = vsel %vm253, %v3579, %v3581
    %v3583 = vrot.slane %v3530, 1
    %v3584 = vsel %vm253, %v3581, %v3583
    %v3585 = vrot.slane %v3531, 1
    %v3586 = vsel %vm253, %v3583, %v3585
    %v3587 = vrot.slane %v3532, 1
    %v3588 = vsel %vm253, %v3585, %v3587
    %v3589 = vrot.slane %v3533, 1
    %v3590 = vsel %vm253, %v3587, %v3589
    %v3591 = vrot.slane %v3534, 1
    %v3592 = vsel %vm253, %v3589, %v3591
    %v3593 = vrot.slane %v3535, 1
    %v3594 = vsel %vm253, %v3591, %v3593
    %v3595 = vrot.slane %v3536, 1
    %v3596 = vsel %vm253, %v3593, %v3595
    %v3597 = vrot.slane %v3537, 1
    %v3598 = vsel %vm253, %v3595, %v3597
    %v3599 = vrot.slane %v3538, 1
    %v3600 = vsel %vm253, %v3597, %v3599
    %v3601 = vrot.slane %v3539, 1
    %v3602 = vsel %vm253, %v3599, %v3601
    %v3603 = vrot.slane %v3540, 1
    %v3604 = vsel %vm253, %v3601, %v3603
    %v3605 = vrot.slane %v3541, 1
    %v3606 = vsel %vm253, %v3603, %v3605
    %v3607 = vrot.slane %v3542, 1
    %v3608 = vsel %vm253, %v3605, %v3607
    %v3609 = vrot.slane %v3543, 1
    %v3610 = vsel %vm253, %v3607, %v3609
    %v3611 = vrot.slane %v3544, 1
    %v3612 = vsel %vm253, %v3609, %v3611
    %v3613 = vrot.slane %v3545, 1
    %v3614 = vsel %vm253, %v3611, %v3613
    %v3615 = vrot.slane %v3546, 1
    %v3616 = vsel %vm253, %v3613, %v3615
    %v3617 = vrot.slane %v3547, 1
    %v3618 = vsel %vm253, %v3615, %v3617
    %v3619 = vrot.slane %v3548, 1
    %v3620 = vsel %vm253, %v3617, %v3619
    %v3621 = vrot.slane %v3549, 1
    %v3622 = vsel %vm253, %v3619, %v3621
    %v3623 = vrot.slane %v3550, 1
    %v3624 = vsel %vm253, %v3621, %v3623
    %v3650 = vadd.f32 %v3499, %v3578
    %v3651 = vadd.f32 %v3500, %v3580
    %v3652 = vadd.f32 %v3501, %v3582
    %v3653 = vadd.f32 %v3502, %v3584
    %v3654 = vadd.f32 %v3503, %v3586
    %v3655 = vadd.f32 %v3504, %v3588
    %v3656 = vadd.f32 %v3505, %v3590
    %v3657 = vadd.f32 %v3506, %v3592
    %v3658 = vadd.f32 %v3507, %v3594
    %v3659 = vadd.f32 %v3508, %v3596
    %v3660 = vadd.f32 %v3509, %v3598
    %v3661 = vadd.f32 %v3510, %v3600
    %v3662 = vadd.f32 %v3511, %v3602
    %v3663 = vadd.f32 %v3512, %v3604
    %v3664 = vadd.f32 %v3513, %v3606
    %v3665 = vadd.f32 %v3514, %v3608
    %v3666 = vadd.f32 %v3515, %v3610
    %v3667 = vadd.f32 %v3516, %v3612
    %v3668 = vadd.f32 %v3517, %v3614
    %v3669 = vadd.f32 %v3518, %v3616
    %v3670 = vadd.f32 %v3519, %v3618
    %v3671 = vadd.f32 %v3520, %v3620
    %v3672 = vadd.f32 %v3521, %v3622
    %v3673 = vadd.f32 %v3522, %v3624
    %v3674 = vadd.f32 %v3523, %v3623
    %s3675 = sld [smem:[#allocation7 + $0x282]]
    %v3676 = vstv %s3675
    %v3677 = vmul.f32 %v3676, %v913
    %v3678 = vmul.f32 %v3676, %v914
    %v3679 = vmul.f32 %v3676, %v915
    %v3680 = vmul.f32 %v3676, %v916
    %v3681 = vmul.f32 %v3676, %v917
    %v3682 = vmul.f32 %v3676, %v918
    %v3683 = vmul.f32 %v3676, %v919
    %v3684 = vmul.f32 %v3676, %v920
    %v3685 = vmul.f32 %v3676, %v921
    %v3686 = vmul.f32 %v3676, %v922
    %v3687 = vmul.f32 %v3676, %v923
    %v3688 = vmul.f32 %v3676, %v924
    %v3689 = vmul.f32 %v3676, %v925
    %v3690 = vmul.f32 %v3676, %v926
    %v3691 = vmul.f32 %v3676, %v927
    %v3692 = vmul.f32 %v3676, %v928
    %v3693 = vmul.f32 %v3676, %v929
    %v3694 = vmul.f32 %v3676, %v930
    %v3695 = vmul.f32 %v3676, %v931
    %v3696 = vmul.f32 %v3676, %v932
    %v3697 = vmul.f32 %v3676, %v933
    %v3698 = vmul.f32 %v3676, %v934
    %v3699 = vmul.f32 %v3676, %v935
    %v3700 = vmul.f32 %v3676, %v936
    %v3701 = vmul.f32 %v3676, %v937
    %v3727 = vrot.slane %v3677, 2
    %v3728 = vrot.slane %v3678, 2
    %v3729 = vsel %vm405, %v3727, %v3728
    %v3730 = vrot.slane %v3679, 2
    %v3731 = vsel %vm405, %v3728, %v3730
    %v3732 = vrot.slane %v3680, 2
    %v3733 = vsel %vm405, %v3730, %v3732
    %v3734 = vrot.slane %v3681, 2
    %v3735 = vsel %vm405, %v3732, %v3734
    %v3736 = vrot.slane %v3682, 2
    %v3737 = vsel %vm405, %v3734, %v3736
    %v3738 = vrot.slane %v3683, 2
    %v3739 = vsel %vm405, %v3736, %v3738
    %v3740 = vrot.slane %v3684, 2
    %v3741 = vsel %vm405, %v3738, %v3740
    %v3742 = vrot.slane %v3685, 2
    %v3743 = vsel %vm405, %v3740, %v3742
    %v3744 = vrot.slane %v3686, 2
    %v3745 = vsel %vm405, %v3742, %v3744
    %v3746 = vrot.slane %v3687, 2
    %v3747 = vsel %vm405, %v3744, %v3746
    %v3748 = vrot.slane %v3688, 2
    %v3749 = vsel %vm405, %v3746, %v3748
    %v3750 = vrot.slane %v3689, 2
    %v3751 = vsel %vm405, %v3748, %v3750
    %v3752 = vrot.slane %v3690, 2
    %v3753 = vsel %vm405, %v3750, %v3752
    %v3754 = vrot.slane %v3691, 2
    %v3755 = vsel %vm405, %v3752, %v3754
    %v3756 = vrot.slane %v3692, 2
    %v3757 = vsel %vm405, %v3754, %v3756
    %v3758 = vrot.slane %v3693, 2
    %v3759 = vsel %vm405, %v3756, %v3758
    %v3760 = vrot.slane %v3694, 2
    %v3761 = vsel %vm405, %v3758, %v3760
    %v3762 = vrot.slane %v3695, 2
    %v3763 = vsel %vm405, %v3760, %v3762
    %v3764 = vrot.slane %v3696, 2
    %v3765 = vsel %vm405, %v3762, %v3764
    %v3766 = vrot.slane %v3697, 2
    %v3767 = vsel %vm405, %v3764, %v3766
    %v3768 = vrot.slane %v3698, 2
    %v3769 = vsel %vm405, %v3766, %v3768
    %v3770 = vrot.slane %v3699, 2
    %v3771 = vsel %vm405, %v3768, %v3770
    %v3772 = vrot.slane %v3700, 2
    %v3773 = vsel %vm405, %v3770, %v3772
    %v3774 = vrot.slane %v3701, 2
    %v3775 = vsel %vm405, %v3772, %v3774
    %v3801 = vadd.f32 %v3650, %v3729
    %v3802 = vadd.f32 %v3651, %v3731
    %v3803 = vadd.f32 %v3652, %v3733
    %v3804 = vadd.f32 %v3653, %v3735
    %v3805 = vadd.f32 %v3654, %v3737
    %v3806 = vadd.f32 %v3655, %v3739
    %v3807 = vadd.f32 %v3656, %v3741
    %v3808 = vadd.f32 %v3657, %v3743
    %v3809 = vadd.f32 %v3658, %v3745
    %v3810 = vadd.f32 %v3659, %v3747
    %v3811 = vadd.f32 %v3660, %v3749
    %v3812 = vadd.f32 %v3661, %v3751
    %v3813 = vadd.f32 %v3662, %v3753
    %v3814 = vadd.f32 %v3663, %v3755
    %v3815 = vadd.f32 %v3664, %v3757
    %v3816 = vadd.f32 %v3665, %v3759
    %v3817 = vadd.f32 %v3666, %v3761
    %v3818 = vadd.f32 %v3667, %v3763
    %v3819 = vadd.f32 %v3668, %v3765
    %v3820 = vadd.f32 %v3669, %v3767
    %v3821 = vadd.f32 %v3670, %v3769
    %v3822 = vadd.f32 %v3671, %v3771
    %v3823 = vadd.f32 %v3672, %v3773
    %v3824 = vadd.f32 %v3673, %v3775
    %v3825 = vadd.f32 %v3674, %v3774
    %s3826 = sld [smem:[#allocation7 + $0x300]]
    %v3827 = vstv %s3826
    %v3828 = vmul.f32 %v3827, %v1294
    %v3829 = vmul.f32 %v3827, %v1295
    %v3830 = vmul.f32 %v3827, %v1296
    %v3831 = vmul.f32 %v3827, %v1297
    %v3832 = vmul.f32 %v3827, %v1298
    %v3833 = vmul.f32 %v3827, %v1299
    %v3834 = vmul.f32 %v3827, %v1300
    %v3835 = vmul.f32 %v3827, %v1301
    %v3836 = vmul.f32 %v3827, %v1302
    %v3837 = vmul.f32 %v3827, %v1303
    %v3838 = vmul.f32 %v3827, %v1304
    %v3839 = vmul.f32 %v3827, %v1305
    %v3840 = vmul.f32 %v3827, %v1306
    %v3841 = vmul.f32 %v3827, %v1307
    %v3842 = vmul.f32 %v3827, %v1308
    %v3843 = vmul.f32 %v3827, %v1309
    %v3844 = vmul.f32 %v3827, %v1310
    %v3845 = vmul.f32 %v3827, %v1311
    %v3846 = vmul.f32 %v3827, %v1312
    %v3847 = vmul.f32 %v3827, %v1313
    %v3848 = vmul.f32 %v3827, %v1314
    %v3849 = vmul.f32 %v3827, %v1315
    %v3850 = vmul.f32 %v3827, %v1316
    %v3851 = vmul.f32 %v3827, %v1317
    %v3852 = vmul.f32 %v3827, %v1318
    %v3853 = vadd.f32 %v3801, %v3828
    %v3854 = vadd.f32 %v3802, %v3829
    %v3855 = vadd.f32 %v3803, %v3830
    %v3856 = vadd.f32 %v3804, %v3831
    %v3857 = vadd.f32 %v3805, %v3832
    %v3858 = vadd.f32 %v3806, %v3833
    %v3859 = vadd.f32 %v3807, %v3834
    %v3860 = vadd.f32 %v3808, %v3835
    %v3861 = vadd.f32 %v3809, %v3836
    %v3862 = vadd.f32 %v3810, %v3837
    %v3863 = vadd.f32 %v3811, %v3838
    %v3864 = vadd.f32 %v3812, %v3839
    %v3865 = vadd.f32 %v3813, %v3840
    %v3866 = vadd.f32 %v3814, %v3841
    %v3867 = vadd.f32 %v3815, %v3842
    %v3868 = vadd.f32 %v3816, %v3843
    %v3869 = vadd.f32 %v3817, %v3844
    %v3870 = vadd.f32 %v3818, %v3845
    %v3871 = vadd.f32 %v3819, %v3846
    %v3872 = vadd.f32 %v3820, %v3847
    %v3873 = vadd.f32 %v3821, %v3848
    %v3874 = vadd.f32 %v3822, %v3849
    %v3875 = vadd.f32 %v3823, %v3850
    %v3876 = vadd.f32 %v3824, %v3851
    %v3877 = vadd.f32 %v3825, %v3852
    %s3878 = sld [smem:[#allocation7 + $0x301]]
    %v3879 = vstv %s3878
    %v3880 = vmul.f32 %v3879, %v1294
    %v3881 = vmul.f32 %v3879, %v1295
    %v3882 = vmul.f32 %v3879, %v1296
    %v3883 = vmul.f32 %v3879, %v1297
    %v3884 = vmul.f32 %v3879, %v1298
    %v3885 = vmul.f32 %v3879, %v1299
    %v3886 = vmul.f32 %v3879, %v1300
    %v3887 = vmul.f32 %v3879, %v1301
    %v3888 = vmul.f32 %v3879, %v1302
    %v3889 = vmul.f32 %v3879, %v1303
    %v3890 = vmul.f32 %v3879, %v1304
    %v3891 = vmul.f32 %v3879, %v1305
    %v3892 = vmul.f32 %v3879, %v1306
    %v3893 = vmul.f32 %v3879, %v1307
    %v3894 = vmul.f32 %v3879, %v1308
    %v3895 = vmul.f32 %v3879, %v1309
    %v3896 = vmul.f32 %v3879, %v1310
    %v3897 = vmul.f32 %v3879, %v1311
    %v3898 = vmul.f32 %v3879, %v1312
    %v3899 = vmul.f32 %v3879, %v1313
    %v3900 = vmul.f32 %v3879, %v1314
    %v3901 = vmul.f32 %v3879, %v1315
    %v3902 = vmul.f32 %v3879, %v1316
    %v3903 = vmul.f32 %v3879, %v1317
    %v3904 = vmul.f32 %v3879, %v1318
    %v3930 = vrot.slane %v3880, 1
    %v3931 = vrot.slane %v3881, 1
    %v3932 = vsel %vm253, %v3930, %v3931
    %v3933 = vrot.slane %v3882, 1
    %v3934 = vsel %vm253, %v3931, %v3933
    %v3935 = vrot.slane %v3883, 1
    %v3936 = vsel %vm253, %v3933, %v3935
    %v3937 = vrot.slane %v3884, 1
    %v3938 = vsel %vm253, %v3935, %v3937
    %v3939 = vrot.slane %v3885, 1
    %v3940 = vsel %vm253, %v3937, %v3939
    %v3941 = vrot.slane %v3886, 1
    %v3942 = vsel %vm253, %v3939, %v3941
    %v3943 = vrot.slane %v3887, 1
    %v3944 = vsel %vm253, %v3941, %v3943
    %v3945 = vrot.slane %v3888, 1
    %v3946 = vsel %vm253, %v3943, %v3945
    %v3947 = vrot.slane %v3889, 1
    %v3948 = vsel %vm253, %v3945, %v3947
    %v3949 = vrot.slane %v3890, 1
    %v3950 = vsel %vm253, %v3947, %v3949
    %v3951 = vrot.slane %v3891, 1
    %v3952 = vsel %vm253, %v3949, %v3951
    %v3953 = vrot.slane %v3892, 1
    %v3954 = vsel %vm253, %v3951, %v3953
    %v3955 = vrot.slane %v3893, 1
    %v3956 = vsel %vm253, %v3953, %v3955
    %v3957 = vrot.slane %v3894, 1
    %v3958 = vsel %vm253, %v3955, %v3957
    %v3959 = vrot.slane %v3895, 1
    %v3960 = vsel %vm253, %v3957, %v3959
    %v3961 = vrot.slane %v3896, 1
    %v3962 = vsel %vm253, %v3959, %v3961
    %v3963 = vrot.slane %v3897, 1
    %v3964 = vsel %vm253, %v3961, %v3963
    %v3965 = vrot.slane %v3898, 1
    %v3966 = vsel %vm253, %v3963, %v3965
    %v3967 = vrot.slane %v3899, 1
    %v3968 = vsel %vm253, %v3965, %v3967
    %v3969 = vrot.slane %v3900, 1
    %v3970 = vsel %vm253, %v3967, %v3969
    %v3971 = vrot.slane %v3901, 1
    %v3972 = vsel %vm253, %v3969, %v3971
    %v3973 = vrot.slane %v3902, 1
    %v3974 = vsel %vm253, %v3971, %v3973
    %v3975 = vrot.slane %v3903, 1
    %v3976 = vsel %vm253, %v3973, %v3975
    %v3977 = vrot.slane %v3904, 1
    %v3978 = vsel %vm253, %v3975, %v3977
    %v4004 = vadd.f32 %v3853, %v3932
    %v4005 = vadd.f32 %v3854, %v3934
    %v4006 = vadd.f32 %v3855, %v3936
    %v4007 = vadd.f32 %v3856, %v3938
    %v4008 = vadd.f32 %v3857, %v3940
    %v4009 = vadd.f32 %v3858, %v3942
    %v4010 = vadd.f32 %v3859, %v3944
    %v4011 = vadd.f32 %v3860, %v3946
    %v4012 = vadd.f32 %v3861, %v3948
    %v4013 = vadd.f32 %v3862, %v3950
    %v4014 = vadd.f32 %v3863, %v3952
    %v4015 = vadd.f32 %v3864, %v3954
    %v4016 = vadd.f32 %v3865, %v3956
    %v4017 = vadd.f32 %v3866, %v3958
    %v4018 = vadd.f32 %v3867, %v3960
    %v4019 = vadd.f32 %v3868, %v3962
    %v4020 = vadd.f32 %v3869, %v3964
    %v4021 = vadd.f32 %v3870, %v3966
    %v4022 = vadd.f32 %v3871, %v3968
    %v4023 = vadd.f32 %v3872, %v3970
    %v4024 = vadd.f32 %v3873, %v3972
    %v4025 = vadd.f32 %v3874, %v3974
    %v4026 = vadd.f32 %v3875, %v3976
    %v4027 = vadd.f32 %v3876, %v3978
    %v4028 = vadd.f32 %v3877, %v3977
    %s4029 = sld [smem:[#allocation7 + $0x302]]
    %v4030 = vstv %s4029
    %v4031 = vmul.f32 %v4030, %v1294
    %v4032 = vmul.f32 %v4030, %v1295
    %v4033 = vmul.f32 %v4030, %v1296
    %v4034 = vmul.f32 %v4030, %v1297
    %v4035 = vmul.f32 %v4030, %v1298
    %v4036 = vmul.f32 %v4030, %v1299
    %v4037 = vmul.f32 %v4030, %v1300
    %v4038 = vmul.f32 %v4030, %v1301
    %v4039 = vmul.f32 %v4030, %v1302
    %v4040 = vmul.f32 %v4030, %v1303
    %v4041 = vmul.f32 %v4030, %v1304
    %v4042 = vmul.f32 %v4030, %v1305
    %v4043 = vmul.f32 %v4030, %v1306
    %v4044 = vmul.f32 %v4030, %v1307
    %v4045 = vmul.f32 %v4030, %v1308
    %v4046 = vmul.f32 %v4030, %v1309
    %v4047 = vmul.f32 %v4030, %v1310
    %v4048 = vmul.f32 %v4030, %v1311
    %v4049 = vmul.f32 %v4030, %v1312
    %v4050 = vmul.f32 %v4030, %v1313
    %v4051 = vmul.f32 %v4030, %v1314
    %v4052 = vmul.f32 %v4030, %v1315
    %v4053 = vmul.f32 %v4030, %v1316
    %v4054 = vmul.f32 %v4030, %v1317
    %v4055 = vmul.f32 %v4030, %v1318
    %v4081 = vrot.slane %v4031, 2
    %v4082 = vrot.slane %v4032, 2
    %v4083 = vsel %vm405, %v4081, %v4082
    %v4084 = vrot.slane %v4033, 2
    %v4085 = vsel %vm405, %v4082, %v4084
    %v4086 = vrot.slane %v4034, 2
    %v4087 = vsel %vm405, %v4084, %v4086
    %v4088 = vrot.slane %v4035, 2
    %v4089 = vsel %vm405, %v4086, %v4088
    %v4090 = vrot.slane %v4036, 2
    %v4091 = vsel %vm405, %v4088, %v4090
    %v4092 = vrot.slane %v4037, 2
    %v4093 = vsel %vm405, %v4090, %v4092
    %v4094 = vrot.slane %v4038, 2
    %v4095 = vsel %vm405, %v4092, %v4094
    %v4096 = vrot.slane %v4039, 2
    %v4097 = vsel %vm405, %v4094, %v4096
    %v4098 = vrot.slane %v4040, 2
    %v4099 = vsel %vm405, %v4096, %v4098
    %v4100 = vrot.slane %v4041, 2
    %v4101 = vsel %vm405, %v4098, %v4100
    %v4102 = vrot.slane %v4042, 2
    %v4103 = vsel %vm405, %v4100, %v4102
    %v4104 = vrot.slane %v4043, 2
    %v4105 = vsel %vm405, %v4102, %v4104
    %v4106 = vrot.slane %v4044, 2
    %v4107 = vsel %vm405, %v4104, %v4106
    %v4108 = vrot.slane %v4045, 2
    %v4109 = vsel %vm405, %v4106, %v4108
    %v4110 = vrot.slane %v4046, 2
    %v4111 = vsel %vm405, %v4108, %v4110
    %v4112 = vrot.slane %v4047, 2
    %v4113 = vsel %vm405, %v4110, %v4112
    %v4114 = vrot.slane %v4048, 2
    %v4115 = vsel %vm405, %v4112, %v4114
    %v4116 = vrot.slane %v4049, 2
    %v4117 = vsel %vm405, %v4114, %v4116
    %v4118 = vrot.slane %v4050, 2
    %v4119 = vsel %vm405, %v4116, %v4118
    %v4120 = vrot.slane %v4051, 2
    %v4121 = vsel %vm405, %v4118, %v4120
    %v4122 = vrot.slane %v4052, 2
    %v4123 = vsel %vm405, %v4120, %v4122
    %v4124 = vrot.slane %v4053, 2
    %v4125 = vsel %vm405, %v4122, %v4124
    %v4126 = vrot.slane %v4054, 2
    %v4127 = vsel %vm405, %v4124, %v4126
    %v4128 = vrot.slane %v4055, 2
    %v4129 = vsel %vm405, %v4126, %v4128
    %v4155 = vadd.f32 %v4004, %v4083
    %v4156 = vadd.f32 %v4005, %v4085
    %v4157 = vadd.f32 %v4006, %v4087
    %v4158 = vadd.f32 %v4007, %v4089
    %v4159 = vadd.f32 %v4008, %v4091
    %v4160 = vadd.f32 %v4009, %v4093
    %v4161 = vadd.f32 %v4010, %v4095
    %v4162 = vadd.f32 %v4011, %v4097
    %v4163 = vadd.f32 %v4012, %v4099
    %v4164 = vadd.f32 %v4013, %v4101
    %v4165 = vadd.f32 %v4014, %v4103
    %v4166 = vadd.f32 %v4015, %v4105
    %v4167 = vadd.f32 %v4016, %v4107
    %v4168 = vadd.f32 %v4017, %v4109
    %v4169 = vadd.f32 %v4018, %v4111
    %v4170 = vadd.f32 %v4019, %v4113
    %v4171 = vadd.f32 %v4020, %v4115
    %v4172 = vadd.f32 %v4021, %v4117
    %v4173 = vadd.f32 %v4022, %v4119
    %v4174 = vadd.f32 %v4023, %v4121
    %v4175 = vadd.f32 %v4024, %v4123
    %v4176 = vadd.f32 %v4025, %v4125
    %v4177 = vadd.f32 %v4026, %v4127
    %v4178 = vadd.f32 %v4027, %v4129
    %v4179 = vadd.f32 %v4028, %v4128
    %s4180 = sld [smem:[#allocation7 + $0x380]]
    %v4181 = vstv %s4180
    %v4182 = vmul.f32 %v4181, %v1675
    %v4183 = vmul.f32 %v4181, %v1676
    %v4184 = vmul.f32 %v4181, %v1677
    %v4185 = vmul.f32 %v4181, %v1678
    %v4186 = vmul.f32 %v4181, %v1679
    %v4187 = vmul.f32 %v4181, %v1680
    %v4188 = vmul.f32 %v4181, %v1681
    %v4189 = vmul.f32 %v4181, %v1682
    %v4190 = vmul.f32 %v4181, %v1683
    %v4191 = vmul.f32 %v4181, %v1684
    %v4192 = vmul.f32 %v4181, %v1685
    %v4193 = vmul.f32 %v4181, %v1686
    %v4194 = vmul.f32 %v4181, %v1687
    %v4195 = vmul.f32 %v4181, %v1688
    %v4196 = vmul.f32 %v4181, %v1689
    %v4197 = vmul.f32 %v4181, %v1690
    %v4198 = vmul.f32 %v4181, %v1691
    %v4199 = vmul.f32 %v4181, %v1692
    %v4200 = vmul.f32 %v4181, %v1693
    %v4201 = vmul.f32 %v4181, %v1694
    %v4202 = vmul.f32 %v4181, %v1695
    %v4203 = vmul.f32 %v4181, %v1696
    %v4204 = vmul.f32 %v4181, %v1697
    %v4205 = vmul.f32 %v4181, %v1698
    %v4206 = vmul.f32 %v4181, %v1699
    %v4207 = vadd.f32 %v4155, %v4182
    %v4208 = vadd.f32 %v4156, %v4183
    %v4209 = vadd.f32 %v4157, %v4184
    %v4210 = vadd.f32 %v4158, %v4185
    %v4211 = vadd.f32 %v4159, %v4186
    %v4212 = vadd.f32 %v4160, %v4187
    %v4213 = vadd.f32 %v4161, %v4188
    %v4214 = vadd.f32 %v4162, %v4189
    %v4215 = vadd.f32 %v4163, %v4190
    %v4216 = vadd.f32 %v4164, %v4191
    %v4217 = vadd.f32 %v4165, %v4192
    %v4218 = vadd.f32 %v4166, %v4193
    %v4219 = vadd.f32 %v4167, %v4194
    %v4220 = vadd.f32 %v4168, %v4195
    %v4221 = vadd.f32 %v4169, %v4196
    %v4222 = vadd.f32 %v4170, %v4197
    %v4223 = vadd.f32 %v4171, %v4198
    %v4224 = vadd.f32 %v4172, %v4199
    %v4225 = vadd.f32 %v4173, %v4200
    %v4226 = vadd.f32 %v4174, %v4201
    %v4227 = vadd.f32 %v4175, %v4202
    %v4228 = vadd.f32 %v4176, %v4203
    %v4229 = vadd.f32 %v4177, %v4204
    %v4230 = vadd.f32 %v4178, %v4205
    %v4231 = vadd.f32 %v4179, %v4206
    %s4232 = sld [smem:[#allocation7 + $0x381]]
    %v4233 = vstv %s4232
    %v4234 = vmul.f32 %v4233, %v1675
    %v4235 = vmul.f32 %v4233, %v1676
    %v4236 = vmul.f32 %v4233, %v1677
    %v4237 = vmul.f32 %v4233, %v1678
    %v4238 = vmul.f32 %v4233, %v1679
    %v4239 = vmul.f32 %v4233, %v1680
    %v4240 = vmul.f32 %v4233, %v1681
    %v4241 = vmul.f32 %v4233, %v1682
    %v4242 = vmul.f32 %v4233, %v1683
    %v4243 = vmul.f32 %v4233, %v1684
    %v4244 = vmul.f32 %v4233, %v1685
    %v4245 = vmul.f32 %v4233, %v1686
    %v4246 = vmul.f32 %v4233, %v1687
    %v4247 = vmul.f32 %v4233, %v1688
    %v4248 = vmul.f32 %v4233, %v1689
    %v4249 = vmul.f32 %v4233, %v1690
    %v4250 = vmul.f32 %v4233, %v1691
    %v4251 = vmul.f32 %v4233, %v1692
    %v4252 = vmul.f32 %v4233, %v1693
    %v4253 = vmul.f32 %v4233, %v1694
    %v4254 = vmul.f32 %v4233, %v1695
    %v4255 = vmul.f32 %v4233, %v1696
    %v4256 = vmul.f32 %v4233, %v1697
    %v4257 = vmul.f32 %v4233, %v1698
    %v4258 = vmul.f32 %v4233, %v1699
    %v4284 = vrot.slane %v4234, 1
    %v4285 = vrot.slane %v4235, 1
    %v4286 = vsel %vm253, %v4284, %v4285
    %v4287 = vrot.slane %v4236, 1
    %v4288 = vsel %vm253, %v4285, %v4287
    %v4289 = vrot.slane %v4237, 1
    %v4290 = vsel %vm253, %v4287, %v4289
    %v4291 = vrot.slane %v4238, 1
    %v4292 = vsel %vm253, %v4289, %v4291
    %v4293 = vrot.slane %v4239, 1
    %v4294 = vsel %vm253, %v4291, %v4293
    %v4295 = vrot.slane %v4240, 1
    %v4296 = vsel %vm253, %v4293, %v4295
    %v4297 = vrot.slane %v4241, 1
    %v4298 = vsel %vm253, %v4295, %v4297
    %v4299 = vrot.slane %v4242, 1
    %v4300 = vsel %vm253, %v4297, %v4299
    %v4301 = vrot.slane %v4243, 1
    %v4302 = vsel %vm253, %v4299, %v4301
    %v4303 = vrot.slane %v4244, 1
    %v4304 = vsel %vm253, %v4301, %v4303
    %v4305 = vrot.slane %v4245, 1
    %v4306 = vsel %vm253, %v4303, %v4305
    %v4307 = vrot.slane %v4246, 1
    %v4308 = vsel %vm253, %v4305, %v4307
    %v4309 = vrot.slane %v4247, 1
    %v4310 = vsel %vm253, %v4307, %v4309
    %v4311 = vrot.slane %v4248, 1
    %v4312 = vsel %vm253, %v4309, %v4311
    %v4313 = vrot.slane %v4249, 1
    %v4314 = vsel %vm253, %v4311, %v4313
    %v4315 = vrot.slane %v4250, 1
    %v4316 = vsel %vm253, %v4313, %v4315
    %v4317 = vrot.slane %v4251, 1
    %v4318 = vsel %vm253, %v4315, %v4317
    %v4319 = vrot.slane %v4252, 1
    %v4320 = vsel %vm253, %v4317, %v4319
    %v4321 = vrot.slane %v4253, 1
    %v4322 = vsel %vm253, %v4319, %v4321
    %v4323 = vrot.slane %v4254, 1
    %v4324 = vsel %vm253, %v4321, %v4323
    %v4325 = vrot.slane %v4255, 1
    %v4326 = vsel %vm253, %v4323, %v4325
    %v4327 = vrot.slane %v4256, 1
    %v4328 = vsel %vm253, %v4325, %v4327
    %v4329 = vrot.slane %v4257, 1
    %v4330 = vsel %vm253, %v4327, %v4329
    %v4331 = vrot.slane %v4258, 1
    %v4332 = vsel %vm253, %v4329, %v4331
    %v4358 = vadd.f32 %v4207, %v4286
    %v4359 = vadd.f32 %v4208, %v4288
    %v4360 = vadd.f32 %v4209, %v4290
    %v4361 = vadd.f32 %v4210, %v4292
    %v4362 = vadd.f32 %v4211, %v4294
    %v4363 = vadd.f32 %v4212, %v4296
    %v4364 = vadd.f32 %v4213, %v4298
    %v4365 = vadd.f32 %v4214, %v4300
    %v4366 = vadd.f32 %v4215, %v4302
    %v4367 = vadd.f32 %v4216, %v4304
    %v4368 = vadd.f32 %v4217, %v4306
    %v4369 = vadd.f32 %v4218, %v4308
    %v4370 = vadd.f32 %v4219, %v4310
    %v4371 = vadd.f32 %v4220, %v4312
    %v4372 = vadd.f32 %v4221, %v4314
    %v4373 = vadd.f32 %v4222, %v4316
    %v4374 = vadd.f32 %v4223, %v4318
    %v4375 = vadd.f32 %v4224, %v4320
    %v4376 = vadd.f32 %v4225, %v4322
    %v4377 = vadd.f32 %v4226, %v4324
    %v4378 = vadd.f32 %v4227, %v4326
    %v4379 = vadd.f32 %v4228, %v4328
    %v4380 = vadd.f32 %v4229, %v4330
    %v4381 = vadd.f32 %v4230, %v4332
    %v4382 = vadd.f32 %v4231, %v4331
    %s4383 = sld [smem:[#allocation7 + $0x382]]
    %v4384 = vstv %s4383
    %v4385 = vmul.f32 %v4384, %v1675
    %v4386 = vmul.f32 %v4384, %v1676
    %v4387 = vmul.f32 %v4384, %v1677
    %v4388 = vmul.f32 %v4384, %v1678
    %v4389 = vmul.f32 %v4384, %v1679
    %v4390 = vmul.f32 %v4384, %v1680
    %v4391 = vmul.f32 %v4384, %v1681
    %v4392 = vmul.f32 %v4384, %v1682
    %v4393 = vmul.f32 %v4384, %v1683
    %v4394 = vmul.f32 %v4384, %v1684
    %v4395 = vmul.f32 %v4384, %v1685
    %v4396 = vmul.f32 %v4384, %v1686
    %v4397 = vmul.f32 %v4384, %v1687
    %v4398 = vmul.f32 %v4384, %v1688
    %v4399 = vmul.f32 %v4384, %v1689
    %v4400 = vmul.f32 %v4384, %v1690
    %v4401 = vmul.f32 %v4384, %v1691
    %v4402 = vmul.f32 %v4384, %v1692
    %v4403 = vmul.f32 %v4384, %v1693
    %v4404 = vmul.f32 %v4384, %v1694
    %v4405 = vmul.f32 %v4384, %v1695
    %v4406 = vmul.f32 %v4384, %v1696
    %v4407 = vmul.f32 %v4384, %v1697
    %v4408 = vmul.f32 %v4384, %v1698
    %v4409 = vmul.f32 %v4384, %v1699
    %v4435 = vrot.slane %v4385, 2
    %v4436 = vrot.slane %v4386, 2
    %v4437 = vsel %vm405, %v4435, %v4436
    %v4438 = vrot.slane %v4387, 2
    %v4439 = vsel %vm405, %v4436, %v4438
    %v4440 = vrot.slane %v4388, 2
    %v4441 = vsel %vm405, %v4438, %v4440
    %v4442 = vrot.slane %v4389, 2
    %v4443 = vsel %vm405, %v4440, %v4442
    %v4444 = vrot.slane %v4390, 2
    %v4445 = vsel %vm405, %v4442, %v4444
    %v4446 = vrot.slane %v4391, 2
    %v4447 = vsel %vm405, %v4444, %v4446
    %v4448 = vrot.slane %v4392, 2
    %v4449 = vsel %vm405, %v4446, %v4448
    %v4450 = vrot.slane %v4393, 2
    %v4451 = vsel %vm405, %v4448, %v4450
    %v4452 = vrot.slane %v4394, 2
    %v4453 = vsel %vm405, %v4450, %v4452
    %v4454 = vrot.slane %v4395, 2
    %v4455 = vsel %vm405, %v4452, %v4454
    %v4456 = vrot.slane %v4396, 2
    %v4457 = vsel %vm405, %v4454, %v4456
    %v4458 = vrot.slane %v4397, 2
    %v4459 = vsel %vm405, %v4456, %v4458
    %v4460 = vrot.slane %v4398, 2
    %v4461 = vsel %vm405, %v4458, %v4460
    %v4462 = vrot.slane %v4399, 2
    %v4463 = vsel %vm405, %v4460, %v4462
    %v4464 = vrot.slane %v4400, 2
    %v4465 = vsel %vm405, %v4462, %v4464
    %v4466 = vrot.slane %v4401, 2
    %v4467 = vsel %vm405, %v4464, %v4466
    %v4468 = vrot.slane %v4402, 2
    %v4469 = vsel %vm405, %v4466, %v4468
    %v4470 = vrot.slane %v4403, 2
    %v4471 = vsel %vm405, %v4468, %v4470
    %v4472 = vrot.slane %v4404, 2
    %v4473 = vsel %vm405, %v4470, %v4472
    %v4474 = vrot.slane %v4405, 2
    %v4475 = vsel %vm405, %v4472, %v4474
    %v4476 = vrot.slane %v4406, 2
    %v4477 = vsel %vm405, %v4474, %v4476
    %v4478 = vrot.slane %v4407, 2
    %v4479 = vsel %vm405, %v4476, %v4478
    %v4480 = vrot.slane %v4408, 2
    %v4481 = vsel %vm405, %v4478, %v4480
    %v4482 = vrot.slane %v4409, 2
    %v4483 = vsel %vm405, %v4480, %v4482
    %v4509 = vadd.f32 %v4358, %v4437
    %v4510 = vadd.f32 %v4359, %v4439
    %v4511 = vadd.f32 %v4360, %v4441
    %v4512 = vadd.f32 %v4361, %v4443
    %v4513 = vadd.f32 %v4362, %v4445
    %v4514 = vadd.f32 %v4363, %v4447
    %v4515 = vadd.f32 %v4364, %v4449
    %v4516 = vadd.f32 %v4365, %v4451
    %v4517 = vadd.f32 %v4366, %v4453
    %v4518 = vadd.f32 %v4367, %v4455
    %v4519 = vadd.f32 %v4368, %v4457
    %v4520 = vadd.f32 %v4369, %v4459
    %v4521 = vadd.f32 %v4370, %v4461
    %v4522 = vadd.f32 %v4371, %v4463
    %v4523 = vadd.f32 %v4372, %v4465
    %v4524 = vadd.f32 %v4373, %v4467
    %v4525 = vadd.f32 %v4374, %v4469
    %v4526 = vadd.f32 %v4375, %v4471
    %v4527 = vadd.f32 %v4376, %v4473
    %v4528 = vadd.f32 %v4377, %v4475
    %v4529 = vadd.f32 %v4378, %v4477
    %v4530 = vadd.f32 %v4379, %v4479
    %v4531 = vadd.f32 %v4380, %v4481
    %v4532 = vadd.f32 %v4381, %v4483
    %v4533 = vadd.f32 %v4382, %v4482
    %s4534 = sld [smem:[#allocation8 + $0x1]]
    %v4535 = vstv %s4534
    %v4536 = vadd.f32 %v4509, %v4535
    %v4537 = vadd.f32 %v4510, %v4535
    %v4538 = vadd.f32 %v4511, %v4535
    %v4539 = vadd.f32 %v4512, %v4535
    %v4540 = vadd.f32 %v4513, %v4535
    %v4541 = vadd.f32 %v4514, %v4535
    %v4542 = vadd.f32 %v4515, %v4535
    %v4543 = vadd.f32 %v4516, %v4535
    %v4544 = vadd.f32 %v4517, %v4535
    %v4545 = vadd.f32 %v4518, %v4535
    %v4546 = vadd.f32 %v4519, %v4535
    %v4547 = vadd.f32 %v4520, %v4535
    %v4548 = vadd.f32 %v4521, %v4535
    %v4549 = vadd.f32 %v4522, %v4535
    %v4550 = vadd.f32 %v4523, %v4535
    %v4551 = vadd.f32 %v4524, %v4535
    %v4552 = vadd.f32 %v4525, %v4535
    %v4553 = vadd.f32 %v4526, %v4535
    %v4554 = vadd.f32 %v4527, %v4535
    %v4555 = vadd.f32 %v4528, %v4535
    %v4556 = vadd.f32 %v4529, %v4535
    %v4557 = vadd.f32 %v4530, %v4535
    %v4558 = vadd.f32 %v4531, %v4535
    %v4559 = vadd.f32 %v4532, %v4535
    %v4560 = vadd.f32 %v4533, %v4535
    %v4561 = vmax.f32 %v4536, 0.0
    %v4562 = vmax.f32 %v4537, 0.0
    %v4563 = vmax.f32 %v4538, 0.0
    %v4564 = vmax.f32 %v4539, 0.0
    %v4565 = vmax.f32 %v4540, 0.0
    %v4566 = vmax.f32 %v4541, 0.0
    %v4567 = vmax.f32 %v4542, 0.0
    %v4568 = vmax.f32 %v4543, 0.0
    %v4569 = vmax.f32 %v4544, 0.0
    %v4570 = vmax.f32 %v4545, 0.0
    %v4571 = vmax.f32 %v4546, 0.0
    %v4572 = vmax.f32 %v4547, 0.0
    %v4573 = vmax.f32 %v4548, 0.0
    %v4574 = vmax.f32 %v4549, 0.0
    %v4575 = vmax.f32 %v4550, 0.0
    %v4576 = vmax.f32 %v4551, 0.0
    %v4577 = vmax.f32 %v4552, 0.0
    %v4578 = vmax.f32 %v4553, 0.0
    %v4579 = vmax.f32 %v4554, 0.0
    %v4580 = vmax.f32 %v4555, 0.0
    %v4581 = vmax.f32 %v4556, 0.0
    %v4582 = vmax.f32 %v4557, 0.0
    %v4583 = vmax.f32 %v4558, 0.0
    %v4584 = vmax.f32 %v4559, 0.0
    %v4585 = vmax.f32 %v4560, 0.0
    %v4586 = vld [vmem:[%s5] sm:$0xf]
    %v4587 = vld [vmem:[%s6] sm:$0xf]
    %4589 = vst [vmem:[#allocation1] ss:$4 sm:$0xff] %v4587
    %v4590 = vld.sshfl [vmem:[#allocation1] sm:$0xff pattern:$0x73625140]
    %v4591 = vld.sshfl [vmem:[#allocation1 + $0x8] sm:$0xff pattern:$0x73625140]
    %vm4593 = vcmask 556032
    %v4594 = vsel %vm4593, %v4591, 0
    %vm4596 = vcmask 1043456
    %v4598 = vsel %vm4596, %v4585, 0
    %4600 = vmatpush.msra.mxu0 %v4576
    %4601 = vmatpush.msra.mxu0 %v4575
    %4602 = vmatpush.msra.mxu0 %v4574
    %4603 = vmatpush.msra.mxu0 %v4573
    %4604 = vmatpush.msra.mxu0 %v4572
    %4605 = vmatpush.msra.mxu0 %v4571
    %4606 = vmatpush.msra.mxu0 %v4570
    %4607 = vmatpush.msra.mxu0 %v4569
    %4608 = vmatpush.msra.mxu0 %v4568
    %4609 = vmatpush.msra.mxu0 %v4567
    %4610 = vmatpush.msra.mxu0 %v4566
    %4611 = vmatpush.msra.mxu0 %v4565
    %4612 = vmatpush.msra.mxu0 %v4564
    %4613 = vmatpush.msra.mxu0 %v4563
    %4614 = vmatpush.msra.mxu0 %v4562
    %4615 = vmatpush.msra.mxu0 %v4561
    %4616 = vmatmul.f32.gmra.mxu0 %v4590
    %v4617 = vpop.f32.mrf.mxu0
    %v4618 = vadd.f32 0.0, %v4617
    %4619 = vdwg.mxu0
    %4620 = vmatpush.msra.mxu0 0.0
    %4621 = vmatpush.msra.mxu0 0.0
    %4622 = vmatpush.msra.mxu0 0.0
    %4623 = vmatpush.msra.mxu0 0.0
    %4624 = vmatpush.msra.mxu0 0.0
    %4625 = vmatpush.msra.mxu0 0.0
    %4626 = vmatpush.msra.mxu0 0.0
    %4627 = vmatpush.msra.mxu0 %v4598
    %4628 = vmatpush.msra.mxu0 %v4584
    %4629 = vmatpush.msra.mxu0 %v4583
    %4630 = vmatpush.msra.mxu0 %v4582
    %4631 = vmatpush.msra.mxu0 %v4581
    %4632 = vmatpush.msra.mxu0 %v4580
    %4633 = vmatpush.msra.mxu0 %v4579
    %4634 = vmatpush.msra.mxu0 %v4578
    %4635 = vmatpush.msra.mxu0 %v4577
    %4636 = vmatmul.f32.gmra.mxu0 %v4594
    %v4637 = vpop.f32.mrf.mxu0
    %v4638 = vadd.f32 %v4618, %v4637
    %4639 = vdwg.mxu0
    %4641 = vst [vmem:[#allocation1] ss:$4 sm:$0xff] %v4586
    %v4642 = vld.sshfl [vmem:[#allocation1] sm:$0xff pattern:$0x73625140]
    %v4643 = vld.sshfl [vmem:[#allocation1 + $0x8] sm:$0xff pattern:$0x73625140]
    %v4645 = vsel %vm4593, %v4643, 0
    %v4648 = vsel %vm4596, %v3142, 0
    %4650 = vmatpush.msra.mxu0 %v3133
    %4651 = vmatpush.msra.mxu0 %v3132
    %4652 = vmatpush.msra.mxu0 %v3131
    %4653 = vmatpush.msra.mxu0 %v3130
    %4654 = vmatpush.msra.mxu0 %v3129
    %4655 = vmatpush.msra.mxu0 %v3128
    %4656 = vmatpush.msra.mxu0 %v3127
    %4657 = vmatpush.msra.mxu0 %v3126
    %4658 = vmatpush.msra.mxu0 %v3125
    %4659 = vmatpush.msra.mxu0 %v3124
    %4660 = vmatpush.msra.mxu0 %v3123
    %4661 = vmatpush.msra.mxu0 %v3122
    %4662 = vmatpush.msra.mxu0 %v3121
    %4663 = vmatpush.msra.mxu0 %v3120
    %4664 = vmatpush.msra.mxu0 %v3119
    %4665 = vmatpush.msra.mxu0 %v3118
    %4666 = vmatmul.f32.gmra.mxu0 %v4642
    %v4667 = vpop.f32.mrf.mxu0
    %v4668 = vadd.f32 %v4638, %v4667
    %4669 = vdwg.mxu0
    %4670 = vmatpush.msra.mxu0 0.0
    %4671 = vmatpush.msra.mxu0 0.0
    %4672 = vmatpush.msra.mxu0 0.0
    %4673 = vmatpush.msra.mxu0 0.0
    %4674 = vmatpush.msra.mxu0 0.0
    %4675 = vmatpush.msra.mxu0 0.0
    %4676 = vmatpush.msra.mxu0 0.0
    %4677 = vmatpush.msra.mxu0 %v4648
    %4678 = vmatpush.msra.mxu0 %v3141
    %4679 = vmatpush.msra.mxu0 %v3140
    %4680 = vmatpush.msra.mxu0 %v3139
    %4681 = vmatpush.msra.mxu0 %v3138
    %4682 = vmatpush.msra.mxu0 %v3137
    %4683 = vmatpush.msra.mxu0 %v3136
    %4684 = vmatpush.msra.mxu0 %v3135
    %4685 = vmatpush.msra.mxu0 %v3134
    %4686 = vmatmul.f32.gmra.mxu0 %v4645
    %v4687 = vpop.f32.mrf.mxu0
    %v4688 = vadd.f32 %v4668, %v4687
    %4689 = vdwg.mxu0
    %v4690 = vld [vmem:[%s7] sm:$0x3]
    %4692 = vset.pattern.permute.xlu0 0
    %4693 = vperm.xlu0 %4692, %v4690
    %v4694 = vpop.permute.xlu0 %4693
    %v4696 = vadd.f32 %v4688, %v4694
    %4697 = vst [vmem:[#allocation10] sm:$0x3] %v4696
    // Predicated region
    $region50: #{tpu_custom_call.1} parent=1 // pred_check
      _
    $region51: #{tpu_custom_call.1} parent=1 // pred_check_branch
      %4699 = sbr.rel (0) target = $region53
    $region52: #{tpu_custom_call.1} parent=1 // pred_region
      %4701 = vsyncadd [#allocation3], 0
      %s4703 = sshll.u32 [#allocation10], 4
      %s4704 = int_to_ptr.vmem [resolvable:$true] %s4703
      %s4705 = sshll.u32 %s8, 4
      %s4706 = int_to_ptr.hbm [resolvable:$true] %s4705
      %4708 = dma.vmem_to_hbm [thread:$0]  %s4704, 32, %s4706, [#allocation3]
    $region53: #{tpu_custom_call.1} parent=1 // pred_fallthru
      _
    // Predicated region
    $region54: #{tpu_custom_call.1} parent=1 // pred_check
      _
    $region55: #{tpu_custom_call.1} parent=1 // pred_check_branch
      %4710 = sbr.rel (0) target = $region57
    $region56: #{tpu_custom_call.1} parent=1 // pred_region
      %4712 = dma.done [#allocation3], 32
    $region57: #{tpu_custom_call.1} parent=1 // pred_fallthru
      _
    %4713 = vsyncpa [#allocation3], 1
    %4714 = vsyncpa [#allocation4], 1
    %4715 = vsyncpa [#allocation6], 1
    %4716 = vsyncpa [#allocation9], 1

</llo_original>
